<compile_context>
chip_gen: v5e
topology: v5e:2x2
jax: 0.10.0
libtpu: 0.0.40
codegen_flags: <defaults>
</compile_context>

<pallas_src>
import functools

import jax
import jax.numpy as jnp
from jax.experimental import pallas as pl
from jax.experimental.pallas import tpu as pltpu


def _round_up(x, m):
    return ((x + m - 1) // m) * m


# ---------------------------------------------------------------------------
# Fused conv1(+ReLU)+conv2(+ReLU) Pallas kernel
#
#   zq[i]   = xpad[4i : 4i+4] flattened (16 chans), xpad = x left-padded by 3.
#   hg[t']  = [ y1pad[m0+2t'], y1pad[m0+2t'+1] ]  (512 lanes), where
#             y1pad = conv1 output with conv2's 1-row zero padding, and
#             hg = relu(zq[a+t'] @ U0 + zq[a+t'+1] @ U1 + [b1,b1]) * mask.
#   y2[a+t] = relu( hg[t] @ Wa + hg[t+1] @ Wb + b2 )
# ---------------------------------------------------------------------------
def _conv12_kernel(l1_total, zq_ref, zh_ref, u0_ref, u1_ref, wa_ref, wb_ref,
                   b1_ref, b2_ref, o_ref):
    # zq_ref : (1, TL, 16)    grouped xpad rows for this output tile
    # zh_ref : (1, 16, 16)    halo: next 16 grouped rows of the same array
    # u0_ref : (16, 512)      conv1 grouped weights (tap group 0)
    # u1_ref : (16, 512)      conv1 grouped weights (tap group 1)
    # wa_ref : (512, 512)     conv2 taps 0,1 stacked along Cin
    # wb_ref : (512, 512)     conv2 taps 2,3 stacked along Cin
    # b1_ref : (1, 512)       [b1, b1]
    # b2_ref : (1, 512)
    # o_ref  : (1, TL, 512)
    tl = o_ref.shape[1]
    c1x2 = b1_ref.shape[1]          # 512
    half = c1x2 // 2                # 256
    rg = tl + 8                     # rows of the conv1 intermediate we build

    zext = jnp.concatenate([zq_ref[0], zh_ref[0]], axis=0)   # (tl+16, 16)
    a0 = zext[0:rg, :]
    a1 = zext[1:rg + 1, :]

    # conv1 (paired rows) + bias + ReLU
    pre = jnp.dot(a0, u0_ref[...], preferred_element_type=jnp.float32)
    pre = pre + jnp.dot(a1, u1_ref[...], preferred_element_type=jnp.float32)
    pre = pre + b1_ref[...]
    pre = jnp.maximum(pre, 0.0)

    # mask: y1pad row m is zero for m == 0 (conv2 left pad) or m > L1
    m0 = pl.program_id(1) * (2 * tl)
    row = jax.lax.broadcasted_iota(jnp.int32, (rg, c1x2), 0)
    lane = jax.lax.broadcasted_iota(jnp.int32, (rg, c1x2), 1)
    m = m0 + 2 * row + jnp.where(lane >= half, 1, 0)
    hg = jnp.where((m >= 1) & (m <= l1_total), pre, 0.0)

    # conv2 + bias + ReLU
    g0 = hg[0:tl, :]
    g1 = hg[1:tl + 1, :]
    acc = jnp.dot(g0, wa_ref[...], preferred_element_type=jnp.float32)
    acc = acc + jnp.dot(g1, wb_ref[...], preferred_element_type=jnp.float32)
    acc = acc + b2_ref[...]
    acc = jnp.maximum(acc, 0.0)
    o_ref[0] = acc.astype(o_ref.dtype)


def conv12_fused_pallas_nlc(x, w1, b1, w2, b2, *, tile_l=512):
    """x: (N, L, 4) channels-last -> relu(conv2(relu(conv1(x)))): (N, L2, 512)."""
    N, L, Cin = x.shape
    C1, cin_w1, K1 = w1.shape
    C2, cin_w2, K2 = w2.shape
    s1, p1, s2, p2 = 2, 1, 2, 1
    assert cin_w1 == Cin and cin_w2 == C1
    assert K1 == 2 * s1 and K2 == 2 * s2 and p1 == 1 and p2 == 1

    L1 = (L + 2 * p1 - K1) // s1 + 1
    L2 = (L1 + 2 * p2 - K2) // s2 + 1
    assert L1 >= 1 and L2 >= 1

    TL = _round_up(min(tile_l, _round_up(L2, 16)), 16)   # output rows per tile
    num_tiles = -(-L2 // TL)
    L2_pad = num_tiles * TL
    G = L2_pad + 16                       # grouped (4-row) xpad rows incl. halo
    rows = 4 * G
    right_pad = rows - 3 - L
    assert right_pad >= 1

    # Left pad 3 = conv1 padding (1) + one zero stride-group for conv2's pad row.
    xpad = jnp.pad(x, ((0, 0), (3, right_pad), (0, 0)))
    zq = xpad.reshape(N, G, 4 * Cin)                       # (N, G, 16)

    # conv1 weights -> grouped operands producing paired (even|odd) rows.
    sc = s1 * Cin                                          # 8
    wk = jnp.transpose(w1, (2, 1, 0)).reshape(K1 * Cin, C1)   # row = k*Cin + c
    u0 = jnp.zeros((K1 * Cin, 2 * C1), x.dtype)
    u0 = u0.at[:, :C1].set(wk)                 # even row: taps 0..3 from zq[a+t']
    u0 = u0.at[sc:2 * sc, C1:].set(wk[0:sc])   # odd row: taps 0,1 from zq[a+t']
    u1 = jnp.zeros((K1 * Cin, 2 * C1), x.dtype)
    u1 = u1.at[0:sc, C1:].set(wk[sc:2 * sc])   # odd row: taps 2,3 from zq[a+t'+1]
    b1g = jnp.concatenate([b1, b1]).reshape(1, 2 * C1)

    # conv2 weights: taps (0,1) and (2,3) stacked along Cin -> (512, 512) each.
    w2t = jnp.transpose(w2, (2, 1, 0))                     # (K2, C1, C2)
    wa = w2t[0:2].reshape(2 * C1, C2)
    wb = w2t[2:4].reshape(2 * C1, C2)
    b2r = b2.reshape(1, C2)

    halo_blk = TL // 16
    rg = TL + 8
    flops = N * num_tiles * (4 * rg * (K1 * Cin) * (2 * C1)
                             + 4 * TL * (2 * C1) * C2)
    bytes_accessed = 4 * (N * G * 4 * Cin
                          + 2 * K1 * Cin * 2 * C1 + 2 * 2 * C1 * C2
                          + 2 * C1 + C2
                          + N * L2_pad * C2)

    out = pl.pallas_call(
        functools.partial(_conv12_kernel, L1),
        out_shape=jax.ShapeDtypeStruct((N, L2_pad, C2), x.dtype),
        grid=(N, num_tiles),
        in_specs=[
            # main tile of grouped input rows
            pl.BlockSpec((1, TL, 4 * Cin), lambda n, j: (n, j, 0)),
            # 16-row halo = grouped rows just past this tile
            pl.BlockSpec((1, 16, 4 * Cin), lambda n, j: (n, (j + 1) * halo_blk, 0)),
            # weights / biases: constant index maps -> VMEM resident
            pl.BlockSpec((K1 * Cin, 2 * C1), lambda n, j: (0, 0)),
            pl.BlockSpec((K1 * Cin, 2 * C1), lambda n, j: (0, 0)),
            pl.BlockSpec((2 * C1, C2), lambda n, j: (0, 0)),
            pl.BlockSpec((2 * C1, C2), lambda n, j: (0, 0)),
            pl.BlockSpec((1, 2 * C1), lambda n, j: (0, 0)),
            pl.BlockSpec((1, C2), lambda n, j: (0, 0)),
        ],
        out_specs=pl.BlockSpec((1, TL, C2), lambda n, j: (n, j, 0)),
        compiler_params=pltpu.CompilerParams(
            dimension_semantics=("parallel", "parallel"),
            vmem_limit_bytes=48 * 1024 * 1024,
        ),
        cost_estimate=pl.CostEstimate(flops=flops, transcendentals=0,
                                      bytes_accessed=bytes_accessed),
    )(zq, zq, u0, u1, wa, wb, b1g, b2r)

    return out[:, :L2, :]


# ---------------------------------------------------------------------------
# Generic single Conv1d kernel (stride-grouped matmul, fused bias + opt. ReLU)
# Used for conv3.
# ---------------------------------------------------------------------------
def _conv1d_kernel(apply_relu, zm_ref, zh_ref, w0_ref, w1_ref, b_ref, o_ref):
    # zm_ref : (1, TL, s*Cin)        stride-grouped input rows for this L tile
    # zh_ref : (1, 8,  s*Cin)        first rows of the NEXT tile (halo)
    # w0_ref : (s*Cin, Cout_pad)     taps 0..s-1
    # w1_ref : ((K-s)*Cin, Cout_pad) taps s..K-1
    # b_ref  : (1, Cout_pad)
    # o_ref  : (1, TL, Cout_pad)
    tl = zm_ref.shape[1]
    kw1 = w1_ref.shape[0]

    a0 = zm_ref[0]                                      # (TL, s*Cin)
    ext = jnp.concatenate([a0, zh_ref[0]], axis=0)      # (TL+8, s*Cin)
    a1 = ext[1:tl + 1, :]                               # rows z[l+1]

    acc = jnp.dot(a0, w0_ref[...], preferred_element_type=jnp.float32)
    acc = acc + jnp.dot(a1[:, :kw1], w1_ref[...],
                        preferred_element_type=jnp.float32)
    acc = acc + b_ref[...]
    if apply_relu:
        acc = jnp.maximum(acc, 0.0)
    o_ref[0] = acc.astype(o_ref.dtype)


def conv1d_pallas_nlc(x, weight, bias, *, stride, padding, relu, tile_l=1024):
    """x: (N, L_in, Cin), weight: (Cout, Cin, K), bias: (Cout,) ->
    (N, L_out, Cout), channels-last."""
    N, L_in, Cin = x.shape
    Cout, Cin_w, K = weight.shape
    assert Cin_w == Cin
    assert stride <= K <= 2 * stride

    L_out = (L_in + 2 * padding - K) // stride + 1
    assert L_out >= 1

    TL = min(tile_l, _round_up(L_out, 8))
    num_tiles = -(-L_out // TL)
    L_out_pad = num_tiles * TL
    G_pad = L_out_pad + 8                       # +8 grouped rows for the halo
    rows = G_pad * stride
    right_pad = rows - padding - L_in
    assert right_pad >= 0

    # TODO(synk): the jnp.pad here materializes one extra HBM copy of conv2's
    # output; folding conv3's left pad into the fused conv12 output layout
    # would remove it (only worthwhile if this stage is memory-bound).
    xpad = jnp.pad(x, ((0, 0), (padding, right_pad), (0, 0)))
    s_cin = stride * Cin
    z = xpad.reshape(N, G_pad, s_cin)

    Cout_pad = _round_up(Cout, 128)             # lane-dense output (64 -> 128)
    kw1 = (K - stride) * Cin
    w0 = jnp.transpose(weight[:, :, :stride], (2, 1, 0)).reshape(s_cin, Cout)
    w1 = jnp.transpose(weight[:, :, stride:], (2, 1, 0)).reshape(kw1, Cout)
    if Cout_pad != Cout:
        w0 = jnp.pad(w0, ((0, 0), (0, Cout_pad - Cout)))
        w1 = jnp.pad(w1, ((0, 0), (0, Cout_pad - Cout)))
        b2 = jnp.pad(bias, (0, Cout_pad - Cout)).reshape(1, Cout_pad)
    else:
        b2 = bias.reshape(1, Cout_pad)

    halo_blk = TL // 8
    flops = 2 * N * L_out_pad * (s_cin + kw1) * Cout_pad
    bytes_accessed = 4 * (N * G_pad * s_cin + (s_cin + kw1) * Cout_pad
                          + Cout_pad + N * L_out_pad * Cout_pad)

    out = pl.pallas_call(
        functools.partial(_conv1d_kernel, relu),
        out_shape=jax.ShapeDtypeStruct((N, L_out_pad, Cout_pad), x.dtype),
        grid=(N, num_tiles),
        in_specs=[
            pl.BlockSpec((1, TL, s_cin), lambda n, j: (n, j, 0)),
            pl.BlockSpec((1, 8, s_cin), lambda n, j: (n, (j + 1) * halo_blk, 0)),
            pl.BlockSpec((s_cin, Cout_pad), lambda n, j: (0, 0)),
            pl.BlockSpec((kw1, Cout_pad), lambda n, j: (0, 0)),
            pl.BlockSpec((1, Cout_pad), lambda n, j: (0, 0)),
        ],
        out_specs=pl.BlockSpec((1, TL, Cout_pad), lambda n, j: (n, j, 0)),
        compiler_params=pltpu.CompilerParams(
            dimension_semantics=("parallel", "parallel"),
            vmem_limit_bytes=48 * 1024 * 1024,
        ),
        cost_estimate=pl.CostEstimate(flops=flops, transcendentals=0,
                                      bytes_accessed=bytes_accessed),
    )(z, z, w0, w1, b2)

    return out[:, :L_out, :Cout]


# ---------------------------------------------------------------------------
# Encoder: fused(conv1+relu+conv2+relu) -> conv3
# ---------------------------------------------------------------------------
def init_encoder_params(key):
    def conv_init(k, cout, cin, ksize):
        kw, kb = jax.random.split(k)
        fan_in = cin * ksize
        bound = 1.0 / (fan_in ** 0.5)
        w = jax.random.uniform(kw, (cout, cin, ksize), jnp.float32, -bound, bound)
        b = jax.random.uniform(kb, (cout,), jnp.float32, -bound, bound)
        return w, b

    k1, k2, k3 = jax.random.split(key, 3)
    return {
        "conv1": conv_init(k1, 512 // 2, 4, 4),       # stride 2, pad 1
        "conv2": conv_init(k2, 512, 512 // 2, 4),     # stride 2, pad 1
        "conv3": conv_init(k3, 64, 512, 4),           # stride 3, pad 2
    }


def encoder_forward(params, x):
    """x: (N, 4, L) NCL (PyTorch layout) -> (N, 64, L3) NCL."""
    w1, b1 = params["conv1"]
    w2, b2 = params["conv2"]
    w3, b3 = params["conv3"]
    y = jnp.transpose(x, (0, 2, 1))                       # channels-last
    y = conv12_fused_pallas_nlc(y, w1, b1, w2, b2)        # conv1+relu+conv2+relu
    y = conv1d_pallas_nlc(y, w3, b3, stride=3, padding=2, relu=False)
    return jnp.transpose(y, (0, 2, 1))


# ---------------------------------------------------------------------------
# Pure-JAX reference (for correctness verification)
# ---------------------------------------------------------------------------
def _conv1d_ref(x, w, b, stride, padding):
    y = jax.lax.conv_general_dilated(
        x, w, window_strides=(stride,), padding=[(padding, padding)],
        dimension_numbers=("NCH", "OIH", "NCH"),
        precision=jax.lax.Precision.HIGHEST)
    return y + b[None, :, None]


def encoder_reference(params, x):
    w1, b1 = params["conv1"]
    w2, b2 = params["conv2"]
    w3, b3 = params["conv3"]
    x = jax.nn.relu(_conv1d_ref(x, w1, b1, 2, 1))
    x = jax.nn.relu(_conv1d_ref(x, w2, b2, 2, 1))
    return _conv1d_ref(x, w3, b3, 3, 2)


if __name__ == "__main__":
    key = jax.random.PRNGKey(0)
    kp, kx1, kx2, kx3 = jax.random.split(key, 4)
    params = init_encoder_params(kp)

    fwd = jax.jit(encoder_forward)

    # 1) Small deterministic input: batch=2, in_channels=4 (fixed), length=32.
    x = jax.random.normal(kx1, (2, 4, 32), dtype=jnp.float32)
    out = jax.block_until_ready(fwd(params, x))
    # L=32 -> conv1:16 -> conv2:8 -> conv3: floor((8+4-4)/3)+1 = 3
    assert out.shape == (2, 64, 3), out.shape
    assert out.dtype == jnp.float32
    ref = encoder_reference(params, x)
    assert jnp.allclose(out, ref, rtol=1e-2, atol=1e-2), float(
        jnp.max(jnp.abs(out - ref)))

    # 2) Odd length (exercises boundary / masking logic).
    x2 = jax.random.normal(kx2, (2, 4, 50), dtype=jnp.float32)
    out2 = jax.block_until_ready(fwd(params, x2))
    ref2 = encoder_reference(params, x2)
    assert out2.shape == ref2.shape == (2, 64, 5), out2.shape
    assert jnp.allclose(out2, ref2, rtol=1e-2, atol=1e-2), float(
        jnp.max(jnp.abs(out2 - ref2)))

    # 3) Multi-tile path of both kernels (force small tiles).
    w1, b1 = params["conv1"]
    w2, b2 = params["conv2"]
    w3, b3 = params["conv3"]
    x3 = jax.random.normal(kx3, (1, 160, 4), dtype=jnp.float32)  # channels-last
    fused_small = jax.jit(functools.partial(conv12_fused_pallas_nlc, tile_l=16))
    conv3_small = jax.jit(functools.partial(
        conv1d_pallas_nlc, stride=3, padding=2, relu=False, tile_l=8))
    y12 = fused_small(x3, w1, b1, w2, b2)
    y3 = jax.block_until_ready(conv3_small(y12, w3, b3))
    ref3 = jnp.transpose(
        encoder_reference(params, jnp.transpose(x3, (0, 2, 1))), (0, 2, 1))
    assert y3.shape == ref3.shape == (1, 14, 64), y3.shape
    assert jnp.allclose(y3, ref3, rtol=1e-2, atol=1e-2), float(
        jnp.max(jnp.abs(y3 - ref3)))

    print("KERNEL_OK")
</pallas_src>

<mosaic_0001>
module attributes {stable_mosaic.version = 11 : i64} {
  func.func @_conv12_kernel(%arg0: i32, %arg1: i32, %arg2: memref<1x16x16xf32, #tpu.memory_space<vmem>>, %arg3: memref<1x16x16xf32, #tpu.memory_space<vmem>>, %arg4: memref<16x512xf32, #tpu.memory_space<vmem>>, %arg5: memref<16x512xf32, #tpu.memory_space<vmem>>, %arg6: memref<512x512xf32, #tpu.memory_space<vmem>>, %arg7: memref<512x512xf32, #tpu.memory_space<vmem>>, %arg8: memref<1x512xf32, #tpu.memory_space<vmem>>, %arg9: memref<1x512xf32, #tpu.memory_space<vmem>>, %arg10: memref<1x16x512xf32, #tpu.memory_space<vmem>>) attributes {dimension_semantics = [#tpu.dimension_semantics<parallel>, #tpu.dimension_semantics<parallel>], iteration_bounds = array<i64: 2, 1>, scalar_prefetch = 0 : i64, scratch_operands = 0 : i64, tpu.core_type = #tpu.core_type<tc>, window_params = [{transform_indices = @transform_0, window_bounds = array<i64: 1, 16, 16>}, {transform_indices = @transform_1, window_bounds = array<i64: 1, 16, 16>}, {pipeline_mode = #tpu.pipeline_mode<synchronous>, transform_indices = @transform_2, window_bounds = array<i64: 16, 512>}, {pipeline_mode = #tpu.pipeline_mode<synchronous>, transform_indices = @transform_3, window_bounds = array<i64: 16, 512>}, {pipeline_mode = #tpu.pipeline_mode<synchronous>, transform_indices = @transform_4, window_bounds = array<i64: 512, 512>}, {pipeline_mode = #tpu.pipeline_mode<synchronous>, transform_indices = @transform_5, window_bounds = array<i64: 512, 512>}, {pipeline_mode = #tpu.pipeline_mode<synchronous>, transform_indices = @transform_6, window_bounds = array<i64: 1, 512>}, {pipeline_mode = #tpu.pipeline_mode<synchronous>, transform_indices = @transform_7, window_bounds = array<i64: 1, 512>}, {transform_indices = @transform_8, window_bounds = array<i64: 1, 16, 512>}]} {
    %c0 = arith.constant 0 : index
    %c0_0 = arith.constant 0 : index
    %c0_1 = arith.constant 0 : index
    %0 = vector.load %arg2[%c0, %c0_0, %c0_1] : memref<1x16x16xf32, #tpu.memory_space<vmem>>, vector<1x16x16xf32>
    %1 = vector.shape_cast %0 : vector<1x16x16xf32> to vector<16x16xf32>
    %c0_2 = arith.constant 0 : index
    %c0_3 = arith.constant 0 : index
    %c0_4 = arith.constant 0 : index
    %2 = vector.load %arg3[%c0_2, %c0_3, %c0_4] : memref<1x16x16xf32, #tpu.memory_space<vmem>>, vector<1x16x16xf32>
    %3 = vector.shape_cast %2 : vector<1x16x16xf32> to vector<16x16xf32>
    %4 = tpu.concatenate %1, %3 in 0 : vector<16x16xf32>, vector<16x16xf32> -> vector<32x16xf32>
    %5 = vector.extract_strided_slice %4 {offsets = [0, 0], sizes = [24, 16], strides = [1, 1]} : vector<32x16xf32> to vector<24x16xf32>
    %6 = vector.extract_strided_slice %4 {offsets = [1, 0], sizes = [24, 16], strides = [1, 1]} : vector<32x16xf32> to vector<24x16xf32>
    %c0_5 = arith.constant 0 : index
    %c0_6 = arith.constant 0 : index
    %7 = vector.load %arg4[%c0_5, %c0_6] : memref<16x512xf32, #tpu.memory_space<vmem>>, vector<16x512xf32>
    %cst = arith.constant dense<0.000000e+00> : vector<24x512xf32>
    %8 = tpu.matmul %5, %7, %cst {dimension_numbers = #tpu.dot_dimension_numbers<[1], [0], [0], [1], [0, 0, 1, 1], [], []>} : vector<24x16xf32>, vector<16x512xf32>, vector<24x512xf32> -> vector<24x512xf32>
    %c0_7 = arith.constant 0 : index
    %c0_8 = arith.constant 0 : index
    %9 = vector.load %arg5[%c0_7, %c0_8] : memref<16x512xf32, #tpu.memory_space<vmem>>, vector<16x512xf32>
    %cst_9 = arith.constant dense<0.000000e+00> : vector<24x512xf32>
    %10 = tpu.matmul %6, %9, %cst_9 {dimension_numbers = #tpu.dot_dimension_numbers<[1], [0], [0], [1], [0, 0, 1, 1], [], []>} : vector<24x16xf32>, vector<16x512xf32>, vector<24x512xf32> -> vector<24x512xf32>
    %11 = arith.addf %8, %10 : vector<24x512xf32>
    %c0_10 = arith.constant 0 : index
    %c0_11 = arith.constant 0 : index
    %12 = vector.load %arg8[%c0_10, %c0_11] : memref<1x512xf32, #tpu.memory_space<vmem>>, vector<1x512xf32>
    %13 = vector.broadcast %12 : vector<1x512xf32> to vector<24x512xf32>
    %14 = arith.addf %11, %13 : vector<24x512xf32>
    %cst_12 = arith.constant 0.000000e+00 : f32
    %15 = vector.broadcast %cst_12 : f32 to vector<24x512xf32>
    %16 = arith.maximumf %14, %15 : vector<24x512xf32>
    %c32_i32 = arith.constant 32 : i32
    %17 = arith.muli %arg1, %c32_i32 : i32
    %18 = tpu.iota {dimensions = array<i32: 0>} : vector<24x512xi32>
    %19 = tpu.iota {dimensions = array<i32: 1>} : vector<24x512xi32>
    %c2_i32 = arith.constant 2 : i32
    %20 = vector.broadcast %c2_i32 : i32 to vector<24x512xi32>
    %21 = arith.muli %20, %18 : vector<24x512xi32>
    %22 = vector.broadcast %17 : i32 to vector<24x512xi32>
    %23 = arith.addi %22, %21 : vector<24x512xi32>
    %c256_i32 = arith.constant 256 : i32
    %24 = vector.broadcast %c256_i32 : i32 to vector<24x512xi32>
    %25 = arith.cmpi sge, %19, %24 : vector<24x512xi32>
    %c1_i32 = arith.constant 1 : i32
    %c0_i32 = arith.constant 0 : i32
    %26 = vector.broadcast %c1_i32 : i32 to vector<24x512xi32>
    %27 = vector.broadcast %c0_i32 : i32 to vector<24x512xi32>
    %28 = arith.select %25, %26, %27 : vector<24x512xi1>, vector<24x512xi32>
    %29 = arith.addi %23, %28 : vector<24x512xi32>
    %c1_i32_13 = arith.constant 1 : i32
    %30 = vector.broadcast %c1_i32_13 : i32 to vector<24x512xi32>
    %31 = arith.cmpi sge, %29, %30 : vector<24x512xi32>
    %c16_i32 = arith.constant 16 : i32
    %32 = vector.broadcast %c16_i32 : i32 to vector<24x512xi32>
    %33 = arith.cmpi sle, %29, %32 : vector<24x512xi32>
    %34 = arith.andi %31, %33 : vector<24x512xi1>
    %cst_14 = arith.constant 0.000000e+00 : f32
    %35 = vector.broadcast %cst_14 : f32 to vector<24x512xf32>
    %36 = arith.select %34, %16, %35 : vector<24x512xi1>, vector<24x512xf32>
    %37 = vector.extract_strided_slice %36 {offsets = [0, 0], sizes = [16, 512], strides = [1, 1]} : vector<24x512xf32> to vector<16x512xf32>
    %38 = vector.extract_strided_slice %36 {offsets = [1, 0], sizes = [16, 512], strides = [1, 1]} : vector<24x512xf32> to vector<16x512xf32>
    %c0_15 = arith.constant 0 : index
    %c0_16 = arith.constant 0 : index
    %39 = vector.load %arg6[%c0_15, %c0_16] : memref<512x512xf32, #tpu.memory_space<vmem>>, vector<512x512xf32>
    %cst_17 = arith.constant dense<0.000000e+00> : vector<16x512xf32>
    %40 = tpu.matmul %37, %39, %cst_17 {dimension_numbers = #tpu.dot_dimension_numbers<[1], [0], [0], [1], [0, 0, 1, 1], [], []>} : vector<16x512xf32>, vector<512x512xf32>, vector<16x512xf32> -> vector<16x512xf32>
    %c0_18 = arith.constant 0 : index
    %c0_19 = arith.constant 0 : index
    %41 = vector.load %arg7[%c0_18, %c0_19] : memref<512x512xf32, #tpu.memory_space<vmem>>, vector<512x512xf32>
    %cst_20 = arith.constant dense<0.000000e+00> : vector<16x512xf32>
    %42 = tpu.matmul %38, %41, %cst_20 {dimension_numbers = #tpu.dot_dimension_numbers<[1], [0], [0], [1], [0, 0, 1, 1], [], []>} : vector<16x512xf32>, vector<512x512xf32>, vector<16x512xf32> -> vector<16x512xf32>
    %43 = arith.addf %40, %42 : vector<16x512xf32>
    %c0_21 = arith.constant 0 : index
    %c0_22 = arith.constant 0 : index
    %44 = vector.load %arg9[%c0_21, %c0_22] : memref<1x512xf32, #tpu.memory_space<vmem>>, vector<1x512xf32>
    %45 = vector.broadcast %44 : vector<1x512xf32> to vector<16x512xf32>
    %46 = arith.addf %43, %45 : vector<16x512xf32>
    %cst_23 = arith.constant 0.000000e+00 : f32
    %47 = vector.broadcast %cst_23 : f32 to vector<16x512xf32>
    %48 = arith.maximumf %46, %47 : vector<16x512xf32>
    %c0_24 = arith.constant 0 : index
    %c0_25 = arith.constant 0 : index
    %c0_26 = arith.constant 0 : index
    %49 = vector.load %arg10[%c0_24, %c0_25, %c0_26] : memref<1x16x512xf32, #tpu.memory_space<vmem>>, vector<1x16x512xf32>
    %50 = vector.shape_cast %49 : vector<1x16x512xf32> to vector<16x512xf32>
    %51 = vector.shape_cast %48 : vector<16x512xf32> to vector<1x16x512xf32>
    tpu.vector_store %arg10[%c0_24, %c0_25, %c0_26], %51 {strides = array<i32>} : memref<1x16x512xf32, #tpu.memory_space<vmem>>, vector<1x16x512xf32>,
    return
  }
  func.func @transform_0(%arg0: i32, %arg1: i32) -> (i32, i32, i32) {
    %c0_i32 = arith.constant 0 : i32
    %c0_i32_0 = arith.constant 0 : i32
    return %arg0, %arg1, %c0_i32 : i32, i32, i32
  }
  func.func @transform_1(%arg0: i32, %arg1: i32) -> (i32, i32, i32) {
    %c1_i32 = arith.constant 1 : i32
    %0 = arith.addi %arg1, %c1_i32 : i32
    %c1_i32_0 = arith.constant 1 : i32
    %1 = arith.muli %0, %c1_i32_0 : i32
    %c0_i32 = arith.constant 0 : i32
    %c0_i32_1 = arith.constant 0 : i32
    return %arg0, %1, %c0_i32 : i32, i32, i32
  }
  func.func @transform_2(%arg0: i32, %arg1: i32) -> (i32, i32) {
    %c0_i32 = arith.constant 0 : i32
    %c0_i32_0 = arith.constant 0 : i32
    %c0_i32_1 = arith.constant 0 : i32
    return %c0_i32, %c0_i32_0 : i32, i32
  }
  func.func @transform_3(%arg0: i32, %arg1: i32) -> (i32, i32) {
    %c0_i32 = arith.constant 0 : i32
    %c0_i32_0 = arith.constant 0 : i32
    %c0_i32_1 = arith.constant 0 : i32
    return %c0_i32, %c0_i32_0 : i32, i32
  }
  func.func @transform_4(%arg0: i32, %arg1: i32) -> (i32, i32) {
    %c0_i32 = arith.constant 0 : i32
    %c0_i32_0 = arith.constant 0 : i32
    %c0_i32_1 = arith.constant 0 : i32
    return %c0_i32, %c0_i32_0 : i32, i32
  }
  func.func @transform_5(%arg0: i32, %arg1: i32) -> (i32, i32) {
    %c0_i32 = arith.constant 0 : i32
    %c0_i32_0 = arith.constant 0 : i32
    %c0_i32_1 = arith.constant 0 : i32
    return %c0_i32, %c0_i32_0 : i32, i32
  }
  func.func @transform_6(%arg0: i32, %arg1: i32) -> (i32, i32) {
    %c0_i32 = arith.constant 0 : i32
    %c0_i32_0 = arith.constant 0 : i32
    %c0_i32_1 = arith.constant 0 : i32
    return %c0_i32, %c0_i32_0 : i32, i32
  }
  func.func @transform_7(%arg0: i32, %arg1: i32) -> (i32, i32) {
    %c0_i32 = arith.constant 0 : i32
    %c0_i32_0 = arith.constant 0 : i32
    %c0_i32_1 = arith.constant 0 : i32
    return %c0_i32, %c0_i32_0 : i32, i32
  }
  func.func @transform_8(%arg0: i32, %arg1: i32) -> (i32, i32, i32) {
    %c0_i32 = arith.constant 0 : i32
    %c0_i32_0 = arith.constant 0 : i32
    return %arg0, %arg1, %c0_i32 : i32, i32, i32
  }
}

module attributes {stable_mosaic.version = 11 : i64} {
  func.func @_conv1d_kernel(%arg0: i32, %arg1: i32, %arg2: memref<1x8x1536xf32, #tpu.memory_space<vmem>>, %arg3: memref<1x8x1536xf32, #tpu.memory_space<vmem>>, %arg4: memref<1536x128xf32, #tpu.memory_space<vmem>>, %arg5: memref<512x128xf32, #tpu.memory_space<vmem>>, %arg6: memref<1x128xf32, #tpu.memory_space<vmem>>, %arg7: memref<1x8x128xf32, #tpu.memory_space<vmem>>) attributes {dimension_semantics = [#tpu.dimension_semantics<parallel>, #tpu.dimension_semantics<parallel>], iteration_bounds = array<i64: 2, 1>, scalar_prefetch = 0 : i64, scratch_operands = 0 : i64, tpu.core_type = #tpu.core_type<tc>, window_params = [{transform_indices = @transform_0, window_bounds = array<i64: 1, 8, 1536>}, {transform_indices = @transform_1, window_bounds = array<i64: 1, 8, 1536>}, {pipeline_mode = #tpu.pipeline_mode<synchronous>, transform_indices = @transform_2, window_bounds = array<i64: 1536, 128>}, {pipeline_mode = #tpu.pipeline_mode<synchronous>, transform_indices = @transform_3, window_bounds = array<i64: 512, 128>}, {pipeline_mode = #tpu.pipeline_mode<synchronous>, transform_indices = @transform_4, window_bounds = array<i64: 1, 128>}, {transform_indices = @transform_5, window_bounds = array<i64: 1, 8, 128>}]} {
    %c0 = arith.constant 0 : index
    %c0_0 = arith.constant 0 : index
    %c0_1 = arith.constant 0 : index
    %0 = vector.load %arg2[%c0, %c0_0, %c0_1] : memref<1x8x1536xf32, #tpu.memory_space<vmem>>, vector<1x8x1536xf32>
    %1 = vector.shape_cast %0 : vector<1x8x1536xf32> to vector<8x1536xf32>
    %c0_2 = arith.constant 0 : index
    %c0_3 = arith.constant 0 : index
    %c0_4 = arith.constant 0 : index
    %2 = vector.load %arg3[%c0_2, %c0_3, %c0_4] : memref<1x8x1536xf32, #tpu.memory_space<vmem>>, vector<1x8x1536xf32>
    %3 = vector.shape_cast %2 : vector<1x8x1536xf32> to vector<8x1536xf32>
    %4 = tpu.concatenate %1, %3 in 0 : vector<8x1536xf32>, vector<8x1536xf32> -> vector<16x1536xf32>
    %5 = vector.extract_strided_slice %4 {offsets = [1, 0], sizes = [8, 1536], strides = [1, 1]} : vector<16x1536xf32> to vector<8x1536xf32>
    %c0_5 = arith.constant 0 : index
    %c0_6 = arith.constant 0 : index
    %6 = vector.load %arg4[%c0_5, %c0_6] : memref<1536x128xf32, #tpu.memory_space<vmem>>, vector<1536x128xf32>
    %cst = arith.constant dense<0.000000e+00> : vector<8x128xf32>
    %7 = tpu.matmul %1, %6, %cst {dimension_numbers = #tpu.dot_dimension_numbers<[1], [0], [0], [1], [0, 0, 1, 1], [], []>} : vector<8x1536xf32>, vector<1536x128xf32>, vector<8x128xf32> -> vector<8x128xf32>
    %8 = vector.extract_strided_slice %5 {offsets = [0, 0], sizes = [8, 512], strides = [1, 1]} : vector<8x1536xf32> to vector<8x512xf32>
    %c0_7 = arith.constant 0 : index
    %c0_8 = arith.constant 0 : index
    %9 = vector.load %arg5[%c0_7, %c0_8] : memref<512x128xf32, #tpu.memory_space<vmem>>, vector<512x128xf32>
    %cst_9 = arith.constant dense<0.000000e+00> : vector<8x128xf32>
    %10 = tpu.matmul %8, %9, %cst_9 {dimension_numbers = #tpu.dot_dimension_numbers<[1], [0], [0], [1], [0, 0, 1, 1], [], []>} : vector<8x512xf32>, vector<512x128xf32>, vector<8x128xf32> -> vector<8x128xf32>
    %11 = arith.addf %7, %10 : vector<8x128xf32>
    %c0_10 = arith.constant 0 : index
    %c0_11 = arith.constant 0 : index
    %12 = vector.load %arg6[%c0_10, %c0_11] : memref<1x128xf32, #tpu.memory_space<vmem>>, vector<1x128xf32>
    %13 = vector.broadcast %12 : vector<1x128xf32> to vector<8x128xf32>
    %14 = arith.addf %11, %13 : vector<8x128xf32>
    %c0_12 = arith.constant 0 : index
    %c0_13 = arith.constant 0 : index
    %c0_14 = arith.constant 0 : index
    %15 = vector.load %arg7[%c0_12, %c0_13, %c0_14] : memref<1x8x128xf32, #tpu.memory_space<vmem>>, vector<1x8x128xf32>
    %16 = vector.shape_cast %15 : vector<1x8x128xf32> to vector<8x128xf32>
    %17 = vector.shape_cast %14 : vector<8x128xf32> to vector<1x8x128xf32>
    tpu.vector_store %arg7[%c0_12, %c0_13, %c0_14], %17 {strides = array<i32>} : memref<1x8x128xf32, #tpu.memory_space<vmem>>, vector<1x8x128xf32>,
    return
  }
  func.func @transform_0(%arg0: i32, %arg1: i32) -> (i32, i32, i32) {
    %c0_i32 = arith.constant 0 : i32
    %c0_i32_0 = arith.constant 0 : i32
    return %arg0, %arg1, %c0_i32 : i32, i32, i32
  }
  func.func @transform_1(%arg0: i32, %arg1: i32) -> (i32, i32, i32) {
    %c1_i32 = arith.constant 1 : i32
    %0 = arith.addi %arg1, %c1_i32 : i32
    %c1_i32_0 = arith.constant 1 : i32
    %1 = arith.muli %0, %c1_i32_0 : i32
    %c0_i32 = arith.constant 0 : i32
    %c0_i32_1 = arith.constant 0 : i32
    return %arg0, %1, %c0_i32 : i32, i32, i32
  }
  func.func @transform_2(%arg0: i32, %arg1: i32) -> (i32, i32) {
    %c0_i32 = arith.constant 0 : i32
    %c0_i32_0 = arith.constant 0 : i32
    %c0_i32_1 = arith.constant 0 : i32
    return %c0_i32, %c0_i32_0 : i32, i32
  }
  func.func @transform_3(%arg0: i32, %arg1: i32) -> (i32, i32) {
    %c0_i32 = arith.constant 0 : i32
    %c0_i32_0 = arith.constant 0 : i32
    %c0_i32_1 = arith.constant 0 : i32
    return %c0_i32, %c0_i32_0 : i32, i32
  }
  func.func @transform_4(%arg0: i32, %arg1: i32) -> (i32, i32) {
    %c0_i32 = arith.constant 0 : i32
    %c0_i32_0 = arith.constant 0 : i32
    %c0_i32_1 = arith.constant 0 : i32
    return %c0_i32, %c0_i32_0 : i32, i32
  }
  func.func @transform_5(%arg0: i32, %arg1: i32) -> (i32, i32, i32) {
    %c0_i32 = arith.constant 0 : i32
    %c0_i32_0 = arith.constant 0 : i32
    return %arg0, %arg1, %c0_i32 : i32, i32, i32
  }
}

</mosaic_0001>

<llo_original>
// kernel: encoder_forward.2
$region0: #{encoder_forward.2}
  #allocation0 [shape = 'u32[]', space=smem, size = 0x4, offset = 0x4, fixed_abs, tag = 'smem constant byte address 0x4 - core index']
  #allocation1 [shape = 'u32[72,128]{1,0:T(1,128)}', space=vmem, size = 0x9000, scoped, tag = 'internal scratch']
  %s0 = inlined_call_operand.vmem [shape: f32[2,32,16], index: 0, kind: input, shape index: {}, may-alias: {0,1}]
  %s1 = inlined_call_operand.vmem [shape: f32[2,32,16], index: 1, kind: input, shape index: {}, may-alias: {0,1}]
  %s2 = inlined_call_operand.vmem [shape: f32[16,512], index: 2, kind: input, shape index: {}]
  %s3 = inlined_call_operand.vmem [shape: f32[16,512], index: 3, kind: input, shape index: {}]
  %s4 = inlined_call_operand.vmem [shape: f32[512,512], index: 4, kind: input, shape index: {}]
  %s5 = inlined_call_operand.vmem [shape: f32[512,512], index: 5, kind: input, shape index: {}]
  %s6 = inlined_call_operand.vmem [shape: f32[1,512], index: 6, kind: input, shape index: {}]
  %s7 = inlined_call_operand.vmem [shape: f32[1,512], index: 7, kind: input, shape index: {}]
  %s8 = inlined_call_operand.vmem [shape: f32[2,16,512], index: 8, kind: output, shape index: {}]
  %s9 = sld [smem:[#allocation0]]
  $region65: #{encoder_forward.2} parent=0
    _
  %s11 = ssub.s32 1, %s9
  %s12 = scalar_select 0, %s11, %s9
  loop: start=0, step=1, limit=4
  $region2: #{encoder_forward.2} parent=0 // loop_pre_header
    _
  $region3: #{encoder_forward.2} parent=0 // loop_header
    %s14 = sphi 0, %s18
    %p15 = scmp.ge.s32.totalorder %s14, 4
    %s21 = sphi 0, %s33
    %s22 = sphi 0, %s29
    %s23 = sphi 0, %s21
    %s24 = sphi 0, %s22
    %s25 = sphi 0, %s23
    %s26 = sphi 0, %s24
    %s38 = sphi 0, %s40
    %s41 = sphi 0, %s38
    %s42 = sphi 0, %s41
    %s58 = sphi 0, %s42
    %s68 = sphi 0, %s70
    %s71 = sphi 0, %s68
    %s72 = sphi 0, %s71
    %s88 = sphi 0, %s72
    %s92 = sphi 0, %s92
    %s94 = sphi 0, %s92
    %s95 = sphi 0, %s94
    %s109 = sphi 0, %s95
    %s113 = sphi 0, %s113
    %s115 = sphi 0, %s113
    %s116 = sphi 0, %s115
    %s130 = sphi 0, %s116
    %s134 = sphi 0, %s134
    %s136 = sphi 0, %s134
    %s137 = sphi 0, %s136
    %s151 = sphi 0, %s137
    %s155 = sphi 0, %s155
    %s157 = sphi 0, %s155
    %s158 = sphi 0, %s157
    %s172 = sphi 0, %s158
    %s176 = sphi 0, %s176
    %s178 = sphi 0, %s176
    %s179 = sphi 0, %s178
    %s193 = sphi 0, %s179
    %s197 = sphi 0, %s197
    %s199 = sphi 0, %s197
    %s200 = sphi 0, %s199
    %s214 = sphi 0, %s200
    %s222 = sphi 0, %s224
    %s225 = sphi 0, %s222
    %s226 = sphi 0, %s225
    %s242 = sphi 0, %s226
  $region4: #{encoder_forward.2} parent=0 // loop_header_branch
    %17 = sbr.rel (%p15) target = $region8
  $region5: #{encoder_forward.2} parent=0 // loop_body
    %s19 = ssub.s32 %s14, 1
    %s20 = ssub.s32 %s14, 2
    %s27 = sadd.s32 1, %s22
    %p28 = scmp.ge.s32.totalorder %s27, 1
    %s29 = scalar_select %p28, 0, %s27
    %s30 = sadd.s32 1, %s21
    %s31 = scalar_select %p28, %s30, %s21
    %p32 = scmp.ge.s32.totalorder %s31, 2
    %s33 = scalar_select %p32, 0, %s31
    %s34 = ssub.s32 %s21, %s33
    %s35 = ssub.s32 %s22, %s29
    %s36 = sor.u32 %s34, %s35
    %p37 = scmp.eq.s32.totalorder %s36, 0
    %s39 = sadd.s32 %s38, 1
    %s40 = scalar_select %p37, %s38, %s39
    %p43 = pneg %p37
    %p44 = scmp.eq.s32.totalorder %s14, 1
    %p45 = por %p43, %p44
    %p46 = scmp.ne.s32.totalorder %s38, %s41
    %p47 = scmp.eq.s32.totalorder %s14, 0
    %p48 = por %p46, %p47
    %p49 = scmp.ne.s32.totalorder %s38, %s41
    %p50 = scmp.eq.s32.totalorder %s19, 1
    %p51 = por %p49, %p50
    %p52 = scmp.ne.s32.totalorder %s41, %s42
    %p53 = scmp.eq.s32.totalorder %s19, 0
    %p54 = por %p52, %p53
    %p55 = scmp.ne.s32.totalorder %s41, %s42
    %p56 = scmp.eq.s32.totalorder %s20, 1
    %p57 = por %p55, %p56
    %p59 = scmp.ne.s32.totalorder %s42, %s58
    %p60 = scmp.eq.s32.totalorder %s20, 0
    %p61 = por %p59, %p60
    %s62 = sadd.s32 %s22, 1
    %s63 = sadd.s32 %s29, 1
    %s64 = ssub.s32 %s21, %s33
    %s65 = ssub.s32 %s62, %s63
    %s66 = sor.u32 %s64, %s65
    %p67 = scmp.eq.s32.totalorder %s66, 0
    %s69 = sadd.s32 %s68, 1
    %s70 = scalar_select %p67, %s68, %s69
    %p73 = pneg %p67
    %p74 = scmp.eq.s32.totalorder %s14, 1
    %p75 = por %p73, %p74
    %p76 = scmp.ne.s32.totalorder %s68, %s71
    %p77 = scmp.eq.s32.totalorder %s14, 0
    %p78 = por %p76, %p77
    %p79 = scmp.ne.s32.totalorder %s68, %s71
    %p80 = scmp.eq.s32.totalorder %s19, 1
    %p81 = por %p79, %p80
    %p82 = scmp.ne.s32.totalorder %s71, %s72
    %p83 = scmp.eq.s32.totalorder %s19, 0
    %p84 = por %p82, %p83
    %p85 = scmp.ne.s32.totalorder %s71, %s72
    %p86 = scmp.eq.s32.totalorder %s20, 1
    %p87 = por %p85, %p86
    %p89 = scmp.ne.s32.totalorder %s72, %s88
    %p90 = scmp.eq.s32.totalorder %s20, 0
    %p91 = por %p89, %p90
    %s93 = sadd.s32 %s92, 1
    %p96 = scmp.eq.s32.totalorder %s14, 1
    %p97 = scmp.ne.s32.totalorder %s92, %s94
    %p98 = scmp.eq.s32.totalorder %s14, 0
    %p99 = por %p97, %p98
    %p100 = scmp.ne.s32.totalorder %s92, %s94
    %p101 = scmp.eq.s32.totalorder %s19, 1
    %p102 = por %p100, %p101
    %p103 = scmp.ne.s32.totalorder %s94, %s95
    %p104 = scmp.eq.s32.totalorder %s19, 0
    %p105 = por %p103, %p104
    %p106 = scmp.ne.s32.totalorder %s94, %s95
    %p107 = scmp.eq.s32.totalorder %s20, 1
    %p108 = por %p106, %p107
    %p110 = scmp.ne.s32.totalorder %s95, %s109
    %p111 = scmp.eq.s32.totalorder %s20, 0
    %p112 = por %p110, %p111
    %s114 = sadd.s32 %s113, 1
    %p117 = scmp.eq.s32.totalorder %s14, 1
    %p118 = scmp.ne.s32.totalorder %s113, %s115
    %p119 = scmp.eq.s32.totalorder %s14, 0
    %p120 = por %p118, %p119
    %p121 = scmp.ne.s32.totalorder %s113, %s115
    %p122 = scmp.eq.s32.totalorder %s19, 1
    %p123 = por %p121, %p122
    %p124 = scmp.ne.s32.totalorder %s115, %s116
    %p125 = scmp.eq.s32.totalorder %s19, 0
    %p126 = por %p124, %p125
    %p127 = scmp.ne.s32.totalorder %s115, %s116
    %p128 = scmp.eq.s32.totalorder %s20, 1
    %p129 = por %p127, %p128
    %p131 = scmp.ne.s32.totalorder %s116, %s130
    %p132 = scmp.eq.s32.totalorder %s20, 0
    %p133 = por %p131, %p132
    %s135 = sadd.s32 %s134, 1
    %p138 = scmp.eq.s32.totalorder %s14, 1
    %p139 = scmp.ne.s32.totalorder %s134, %s136
    %p140 = scmp.eq.s32.totalorder %s14, 0
    %p141 = por %p139, %p140
    %p142 = scmp.ne.s32.totalorder %s134, %s136
    %p143 = scmp.eq.s32.totalorder %s19, 1
    %p144 = por %p142, %p143
    %p145 = scmp.ne.s32.totalorder %s136, %s137
    %p146 = scmp.eq.s32.totalorder %s19, 0
    %p147 = por %p145, %p146
    %p148 = scmp.ne.s32.totalorder %s136, %s137
    %p149 = scmp.eq.s32.totalorder %s20, 1
    %p150 = por %p148, %p149
    %p152 = scmp.ne.s32.totalorder %s137, %s151
    %p153 = scmp.eq.s32.totalorder %s20, 0
    %p154 = por %p152, %p153
    %s156 = sadd.s32 %s155, 1
    %p159 = scmp.eq.s32.totalorder %s14, 1
    %p160 = scmp.ne.s32.totalorder %s155, %s157
    %p161 = scmp.eq.s32.totalorder %s14, 0
    %p162 = por %p160, %p161
    %p163 = scmp.ne.s32.totalorder %s155, %s157
    %p164 = scmp.eq.s32.totalorder %s19, 1
    %p165 = por %p163, %p164
    %p166 = scmp.ne.s32.totalorder %s157, %s158
    %p167 = scmp.eq.s32.totalorder %s19, 0
    %p168 = por %p166, %p167
    %p169 = scmp.ne.s32.totalorder %s157, %s158
    %p170 = scmp.eq.s32.totalorder %s20, 1
    %p171 = por %p169, %p170
    %p173 = scmp.ne.s32.totalorder %s158, %s172
    %p174 = scmp.eq.s32.totalorder %s20, 0
    %p175 = por %p173, %p174
    %s177 = sadd.s32 %s176, 1
    %p180 = scmp.eq.s32.totalorder %s14, 1
    %p181 = scmp.ne.s32.totalorder %s176, %s178
    %p182 = scmp.eq.s32.totalorder %s14, 0
    %p183 = por %p181, %p182
    %p184 = scmp.ne.s32.totalorder %s176, %s178
    %p185 = scmp.eq.s32.totalorder %s19, 1
    %p186 = por %p184, %p185
    %p187 = scmp.ne.s32.totalorder %s178, %s179
    %p188 = scmp.eq.s32.totalorder %s19, 0
    %p189 = por %p187, %p188
    %p190 = scmp.ne.s32.totalorder %s178, %s179
    %p191 = scmp.eq.s32.totalorder %s20, 1
    %p192 = por %p190, %p191
    %p194 = scmp.ne.s32.totalorder %s179, %s193
    %p195 = scmp.eq.s32.totalorder %s20, 0
    %p196 = por %p194, %p195
    %s198 = sadd.s32 %s197, 1
    %p201 = scmp.eq.s32.totalorder %s14, 1
    %p202 = scmp.ne.s32.totalorder %s197, %s199
    %p203 = scmp.eq.s32.totalorder %s14, 0
    %p204 = por %p202, %p203
    %p205 = scmp.ne.s32.totalorder %s197, %s199
    %p206 = scmp.eq.s32.totalorder %s19, 1
    %p207 = por %p205, %p206
    %p208 = scmp.ne.s32.totalorder %s199, %s200
    %p209 = scmp.eq.s32.totalorder %s19, 0
    %p210 = por %p208, %p209
    %p211 = scmp.ne.s32.totalorder %s199, %s200
    %p212 = scmp.eq.s32.totalorder %s20, 1
    %p213 = por %p211, %p212
    %p215 = scmp.ne.s32.totalorder %s200, %s214
    %p216 = scmp.eq.s32.totalorder %s20, 0
    %p217 = por %p215, %p216
    %s218 = ssub.s32 %s21, %s33
    %s219 = ssub.s32 %s22, %s29
    %s220 = sor.u32 %s218, %s219
    %p221 = scmp.eq.s32.totalorder %s220, 0
    %s223 = sadd.s32 %s222, 1
    %s224 = scalar_select %p221, %s222, %s223
    %p227 = pneg %p221
    %p228 = scmp.eq.s32.totalorder %s14, 1
    %p229 = por %p227, %p228
    %p230 = scmp.ne.s32.totalorder %s222, %s225
    %p231 = scmp.eq.s32.totalorder %s14, 0
    %p232 = por %p230, %p231
    %p233 = scmp.ne.s32.totalorder %s222, %s225
    %p234 = scmp.eq.s32.totalorder %s19, 1
    %p235 = por %p233, %p234
    %p236 = scmp.ne.s32.totalorder %s225, %s226
    %p237 = scmp.eq.s32.totalorder %s19, 0
    %p238 = por %p236, %p237
    %p239 = scmp.ne.s32.totalorder %s225, %s226
    %p240 = scmp.eq.s32.totalorder %s20, 1
    %p241 = por %p239, %p240
    %p243 = scmp.ne.s32.totalorder %s226, %s242
    %p244 = scmp.eq.s32.totalorder %s20, 0
    %p245 = por %p243, %p244
    %p246 = scmp.le.s32.totalorder 1, %s14
    %p247 = scmp.lt.s32.totalorder %s14, 3
    %p248 = pnand %p246, %p247
    %p249 = pneg %p248
    // Predicated region
    $region9: #{encoder_forward.2} parent=5 // pred_check
      _
    $region10: #{encoder_forward.2} parent=5 // pred_check_branch
      %251 = sbr.rel (%p248) target = $region12
    $region11: #{encoder_forward.2} parent=5 // pred_region
      %s252 = ssub.s32 %s14, 1
      // Predicated region
      $region13: #{encoder_forward.2} parent=11 // pred_check
        %p253 = pneg %p105
      $region14: #{encoder_forward.2} parent=11 // pred_check_branch
        %255 = sbr.rel (%p253) target = $region16
      $region15: #{encoder_forward.2} parent=11 // pred_region
        _
      $region16: #{encoder_forward.2} parent=11 // pred_fallthru
        _
      // Predicated region
      $region17: #{encoder_forward.2} parent=11 // pred_check
        %p256 = pneg %p126
      $region18: #{encoder_forward.2} parent=11 // pred_check_branch
        %258 = sbr.rel (%p256) target = $region20
      $region19: #{encoder_forward.2} parent=11 // pred_region
        _
      $region20: #{encoder_forward.2} parent=11 // pred_fallthru
        _
      // Predicated region
      $region21: #{encoder_forward.2} parent=11 // pred_check
        %p259 = pneg %p147
      $region22: #{encoder_forward.2} parent=11 // pred_check_branch
        %261 = sbr.rel (%p259) target = $region24
      $region23: #{encoder_forward.2} parent=11 // pred_region
        _
      $region24: #{encoder_forward.2} parent=11 // pred_fallthru
        _
      // Predicated region
      $region25: #{encoder_forward.2} parent=11 // pred_check
        %p262 = pneg %p168
      $region26: #{encoder_forward.2} parent=11 // pred_check_branch
        %264 = sbr.rel (%p262) target = $region28
      $region27: #{encoder_forward.2} parent=11 // pred_region
        _
      $region28: #{encoder_forward.2} parent=11 // pred_fallthru
        _
      // Predicated region
      $region29: #{encoder_forward.2} parent=11 // pred_check
        %p265 = pneg %p189
      $region30: #{encoder_forward.2} parent=11 // pred_check_branch
        %267 = sbr.rel (%p265) target = $region32
      $region31: #{encoder_forward.2} parent=11 // pred_region
        _
      $region32: #{encoder_forward.2} parent=11 // pred_fallthru
        _
      // Predicated region
      $region33: #{encoder_forward.2} parent=11 // pred_check
        %p268 = pneg %p210
      $region34: #{encoder_forward.2} parent=11 // pred_check_branch
        %270 = sbr.rel (%p268) target = $region36
      $region35: #{encoder_forward.2} parent=11 // pred_region
        _
      $region36: #{encoder_forward.2} parent=11 // pred_fallthru
        _
    $region12: #{encoder_forward.2} parent=5 // pred_fallthru
      _
    %p271 = scmp.lt.s32.totalorder %s14, 2
    // Predicated region
    $region37: #{encoder_forward.2} parent=5 // pred_check
      %p272 = pneg %p271
    $region38: #{encoder_forward.2} parent=5 // pred_check_branch
      %274 = sbr.rel (%p272) target = $region40
    $region39: #{encoder_forward.2} parent=5 // pred_region
      // Predicated region
      $region41: #{encoder_forward.2} parent=39 // pred_check
        %p275 = pneg %p48
      $region42: #{encoder_forward.2} parent=39 // pred_check_branch
        %277 = sbr.rel (%p275) target = $region44
      $region43: #{encoder_forward.2} parent=39 // pred_region
        %s278 = smul.u32 2, %s22
        %p279 = scmp.lt.s32.totalorder %s21, 1
        %s280 = scalar_select %p279, %s21, 1
        %p281 = scmp.lt.s32.totalorder %s278, 3
        %s282 = scalar_select %p281, %s278, 3
        %s283 = smul.addr %s280, 4
        %s284 = sadd.s32 %s282, %s283
        %s285 = smul.addr %s284, 8
        %s286 = scalar_lea.vmem %s0, %s285
        %s287 = smul.u32 2, %s22
      $region44: #{encoder_forward.2} parent=39 // pred_fallthru
        _
      // Predicated region
      $region45: #{encoder_forward.2} parent=39 // pred_check
        %p288 = pneg %p78
      $region46: #{encoder_forward.2} parent=39 // pred_check_branch
        %290 = sbr.rel (%p288) target = $region48
      $region47: #{encoder_forward.2} parent=39 // pred_region
        %s291 = sadd.s32 %s22, 1
        %s292 = smul.u32 2, %s291
        %p293 = scmp.lt.s32.totalorder %s21, 1
        %s294 = scalar_select %p293, %s21, 1
        %p295 = scmp.lt.s32.totalorder %s292, 3
        %s296 = scalar_select %p295, %s292, 3
        %s297 = smul.addr %s294, 4
        %s298 = sadd.s32 %s296, %s297
        %s299 = smul.addr %s298, 8
        %s300 = scalar_lea.vmem %s1, %s299
        %s301 = sadd.s32 %s22, 1
        %s302 = smul.u32 2, %s301
      $region48: #{encoder_forward.2} parent=39 // pred_fallthru
        _
    $region40: #{encoder_forward.2} parent=5 // pred_fallthru
      _
    %p303 = scmp.le.s32.totalorder 1, %s14
    %p304 = scmp.lt.s32.totalorder %s14, 3
    %p305 = pnand %p303, %p304
    %p306 = pneg %p305
    // Predicated region
    $region49: #{encoder_forward.2} parent=5 // pred_check
      _
    $region50: #{encoder_forward.2} parent=5 // pred_check_branch
      %308 = sbr.rel (%p305) target = $region52
    $region51: #{encoder_forward.2} parent=5 // pred_region
      %s309 = ssub.s32 %s14, 1
      %s310 = smul.u32 2, %s24
      %p311 = scmp.lt.s32.totalorder %s23, 1
      %s312 = scalar_select %p311, %s23, 1
      %p313 = scmp.lt.s32.totalorder %s310, 3
      %s314 = scalar_select %p313, %s310, 3
      %s315 = smul.addr %s312, 4
      %s316 = sadd.s32 %s314, %s315
      %s317 = smul.addr %s316, 8
      %s318 = scalar_lea.vmem %s0, %s317
      %p319 = pneg %p54
      %p320 = pneg %p51
      %s321 = sadd.s32 %s24, 1
      %s322 = smul.u32 2, %s321
      %p323 = scmp.lt.s32.totalorder %s23, 1
      %s324 = scalar_select %p323, %s23, 1
      %p325 = scmp.lt.s32.totalorder %s322, 3
      %s326 = scalar_select %p325, %s322, 3
      %s327 = smul.addr %s324, 4
      %s328 = sadd.s32 %s326, %s327
      %s329 = smul.addr %s328, 8
      %s330 = scalar_lea.vmem %s1, %s329
      %p331 = pneg %p84
      %p332 = pneg %p81
      %p333 = pneg %p105
      %p334 = pneg %p102
      %p335 = pneg %p126
      %p336 = pneg %p123
      %p337 = pneg %p147
      %p338 = pneg %p144
      %p339 = pneg %p168
      %p340 = pneg %p165
      %p341 = pneg %p189
      %p342 = pneg %p186
      %p343 = pneg %p210
      %p344 = pneg %p207
      %p345 = pneg %p238
      %p346 = pneg %p235
      %s347 = smul.u32 2, %s24
      %p348 = scmp.lt.s32.totalorder %s23, 1
      %s349 = scalar_select %p348, %s23, 1
      %p350 = scmp.lt.s32.totalorder %s347, 1
      %s351 = scalar_select %p350, %s347, 1
      %s352 = smul.addr %s351, 4
      %s353 = smul.addr %s349, 8
      %s354 = sadd.s32 %s352, %s353
      %s355 = smul.addr %s354, 8
      %s356 = scalar_lea.vmem %s8, %s355
      %s357 = smul.u32 2, %s24
      %p358 = scmp.lt.s32.totalorder %s23, 1
      %s359 = scalar_select %p358, %s23, 1
      %p360 = scmp.lt.s32.totalorder %s357, 3
      %s361 = scalar_select %p360, %s357, 3
      %s362 = smul.addr %s359, 4
      %s363 = sadd.s32 %s361, %s362
      %s364 = smul.addr %s363, 8
      %s365 = scalar_lea.vmem %s0, %s364
      %s366 = smul.u32 2, %s24
      %s367 = sadd.s32 %s24, 1
      %s368 = smul.u32 2, %s367
      %p369 = scmp.lt.s32.totalorder %s23, 1
      %s370 = scalar_select %p369, %s23, 1
      %p371 = scmp.lt.s32.totalorder %s368, 3
      %s372 = scalar_select %p371, %s368, 3
      %s373 = smul.addr %s370, 4
      %s374 = sadd.s32 %s372, %s373
      %s375 = smul.addr %s374, 8
      %s376 = scalar_lea.vmem %s1, %s375
      %s377 = sadd.s32 %s24, 1
      %s378 = smul.u32 2, %s377
      %s379 = smul.u32 2, %s24
      %p380 = scmp.lt.s32.totalorder %s23, 1
      %s381 = scalar_select %p380, %s23, 1
      %p382 = scmp.lt.s32.totalorder %s379, 1
      %s383 = scalar_select %p382, %s379, 1
      %s384 = smul.addr %s383, 4
      %s385 = smul.addr %s381, 8
      %s386 = sadd.s32 %s384, %s385
      %s387 = smul.addr %s386, 8
      %s388 = scalar_lea.vmem %s8, %s387
      %s389 = smul.u32 2, %s24
      %v390 = vld [vmem:[%s365] sm:$0xff]
      %v391 = vld [vmem:[%s365 + $0x8] sm:$0xff]
      %v392 = vld [vmem:[%s376] sm:$0xff]
      %v393 = vld [vmem:[%s376 + $0x8] sm:$0xff]
      %v394 = vld [vmem:[%s2] sm:$0xff]
      %v395 = vld [vmem:[%s2 + $0x8] sm:$0xff]
      %v396 = vld [vmem:[%s2 + $0x10] sm:$0xff]
      %v397 = vld [vmem:[%s2 + $0x18] sm:$0xff]
      %v398 = vld [vmem:[%s2 + $0x20] sm:$0xff]
      %v399 = vld [vmem:[%s2 + $0x28] sm:$0xff]
      %v400 = vld [vmem:[%s2 + $0x30] sm:$0xff]
      %v401 = vld [vmem:[%s2 + $0x38] sm:$0xff]
      %v402 = vld [vmem:[%s3] sm:$0xff]
      %v403 = vld [vmem:[%s3 + $0x8] sm:$0xff]
      %v404 = vld [vmem:[%s3 + $0x10] sm:$0xff]
      %v405 = vld [vmem:[%s3 + $0x18] sm:$0xff]
      %v406 = vld [vmem:[%s3 + $0x20] sm:$0xff]
      %v407 = vld [vmem:[%s3 + $0x28] sm:$0xff]
      %v408 = vld [vmem:[%s3 + $0x30] sm:$0xff]
      %v409 = vld [vmem:[%s3 + $0x38] sm:$0xff]
      %vm414 = vcmask 1046528
      %v415 = vrot.slane %v390, 1
      %v416 = vrot.slane %v391, 1
      %v417 = vsel %vm414, %v415, %v416
      %v418 = vrot.slane %v392, 1
      %v419 = vsel %vm414, %v416, %v418
      %v420 = vrot.slane %v393, 1
      %v421 = vsel %vm414, %v418, %v420
      %vm422 = vcmask 130048
      %v423 = vsel %vm422, %v417, 0
      %v425 = vsel %vm422, %v419, 0
      %v427 = vsel %vm422, %v421, 0
      %429 = vmatpush.msra.mxu0 0.0
      %430 = vmatpush.msra.mxu0 0.0
      %431 = vmatpush.msra.mxu0 0.0
      %432 = vmatpush.msra.mxu0 0.0
      %433 = vmatpush.msra.mxu0 0.0
      %434 = vmatpush.msra.mxu0 0.0
      %435 = vmatpush.msra.mxu0 0.0
      %436 = vmatpush.msra.mxu0 0.0
      %437 = vmatpush.msra.mxu0 0.0
      %438 = vmatpush.msra.mxu0 0.0
      %439 = vmatpush.msra.mxu0 0.0
      %440 = vmatpush.msra.mxu0 0.0
      %441 = vmatpush.msra.mxu0 0.0
      %442 = vmatpush.msra.mxu0 0.0
      %443 = vmatpush.msra.mxu0 %v406
      %444 = vmatpush.msra.mxu0 %v402
      %445 = vmatmul.f32.gmra.mxu0 %v423
      %v446 = vpop.f32.mrf.mxu0
      %v447 = vadd.f32 0.0, %v446
      %448 = vmatmul.f32.gmra.mxu0 %v425
      %v449 = vpop.f32.mrf.mxu0
      %v450 = vadd.f32 0.0, %v449
      %451 = vmatmul.f32.gmra.mxu0 %v427
      %v452 = vpop.f32.mrf.mxu0
      %v453 = vadd.f32 0.0, %v452
      %454 = vdwg.mxu0
      %455 = vmatpush.msra.mxu0 0.0
      %456 = vmatpush.msra.mxu0 0.0
      %457 = vmatpush.msra.mxu0 0.0
      %458 = vmatpush.msra.mxu0 0.0
      %459 = vmatpush.msra.mxu0 0.0
      %460 = vmatpush.msra.mxu0 0.0
      %461 = vmatpush.msra.mxu0 0.0
      %462 = vmatpush.msra.mxu0 0.0
      %463 = vmatpush.msra.mxu0 0.0
      %464 = vmatpush.msra.mxu0 0.0
      %465 = vmatpush.msra.mxu0 0.0
      %466 = vmatpush.msra.mxu0 0.0
      %467 = vmatpush.msra.mxu0 0.0
      %468 = vmatpush.msra.mxu0 0.0
      %469 = vmatpush.msra.mxu0 %v407
      %470 = vmatpush.msra.mxu0 %v403
      %471 = vmatmul.f32.gmra.mxu0 %v423
      %v472 = vpop.f32.mrf.mxu0
      %v473 = vadd.f32 0.0, %v472
      %474 = vmatmul.f32.gmra.mxu0 %v425
      %v475 = vpop.f32.mrf.mxu0
      %v476 = vadd.f32 0.0, %v475
      %477 = vmatmul.f32.gmra.mxu0 %v427
      %v478 = vpop.f32.mrf.mxu0
      %v479 = vadd.f32 0.0, %v478
      %480 = vdwg.mxu0
      %481 = vmatpush.msra.mxu0 0.0
      %482 = vmatpush.msra.mxu0 0.0
      %483 = vmatpush.msra.mxu0 0.0
      %484 = vmatpush.msra.mxu0 0.0
      %485 = vmatpush.msra.mxu0 0.0
      %486 = vmatpush.msra.mxu0 0.0
      %487 = vmatpush.msra.mxu0 0.0
      %488 = vmatpush.msra.mxu0 0.0
      %489 = vmatpush.msra.mxu0 0.0
      %490 = vmatpush.msra.mxu0 0.0
      %491 = vmatpush.msra.mxu0 0.0
      %492 = vmatpush.msra.mxu0 0.0
      %493 = vmatpush.msra.mxu0 0.0
      %494 = vmatpush.msra.mxu0 0.0
      %495 = vmatpush.msra.mxu0 %v408
      %496 = vmatpush.msra.mxu0 %v404
      %497 = vmatmul.f32.gmra.mxu0 %v423
      %v498 = vpop.f32.mrf.mxu0
      %v499 = vadd.f32 0.0, %v498
      %500 = vmatmul.f32.gmra.mxu0 %v425
      %v501 = vpop.f32.mrf.mxu0
      %v502 = vadd.f32 0.0, %v501
      %503 = vmatmul.f32.gmra.mxu0 %v427
      %v504 = vpop.f32.mrf.mxu0
      %v505 = vadd.f32 0.0, %v504
      %506 = vdwg.mxu0
      %507 = vmatpush.msra.mxu0 0.0
      %508 = vmatpush.msra.mxu0 0.0
      %509 = vmatpush.msra.mxu0 0.0
      %510 = vmatpush.msra.mxu0 0.0
      %511 = vmatpush.msra.mxu0 0.0
      %512 = vmatpush.msra.mxu0 0.0
      %513 = vmatpush.msra.mxu0 0.0
      %514 = vmatpush.msra.mxu0 0.0
      %515 = vmatpush.msra.mxu0 0.0
      %516 = vmatpush.msra.mxu0 0.0
      %517 = vmatpush.msra.mxu0 0.0
      %518 = vmatpush.msra.mxu0 0.0
      %519 = vmatpush.msra.mxu0 0.0
      %520 = vmatpush.msra.mxu0 0.0
      %521 = vmatpush.msra.mxu0 %v409
      %522 = vmatpush.msra.mxu0 %v405
      %523 = vmatmul.f32.gmra.mxu0 %v423
      %v524 = vpop.f32.mrf.mxu0
      %v525 = vadd.f32 0.0, %v524
      %526 = vmatmul.f32.gmra.mxu0 %v425
      %v527 = vpop.f32.mrf.mxu0
      %v528 = vadd.f32 0.0, %v527
      %529 = vmatmul.f32.gmra.mxu0 %v427
      %v530 = vpop.f32.mrf.mxu0
      %v531 = vadd.f32 0.0, %v530
      %532 = vdwg.mxu0
      %v533 = vsel %vm422, %v390, 0
      %v535 = vsel %vm422, %v391, 0
      %v537 = vsel %vm422, %v392, 0
      %539 = vmatpush.msra.mxu0 0.0
      %540 = vmatpush.msra.mxu0 0.0
      %541 = vmatpush.msra.mxu0 0.0
      %542 = vmatpush.msra.mxu0 0.0
      %543 = vmatpush.msra.mxu0 0.0
      %544 = vmatpush.msra.mxu0 0.0
      %545 = vmatpush.msra.mxu0 0.0
      %546 = vmatpush.msra.mxu0 0.0
      %547 = vmatpush.msra.mxu0 0.0
      %548 = vmatpush.msra.mxu0 0.0
      %549 = vmatpush.msra.mxu0 0.0
      %550 = vmatpush.msra.mxu0 0.0
      %551 = vmatpush.msra.mxu0 0.0
      %552 = vmatpush.msra.mxu0 0.0
      %553 = vmatpush.msra.mxu0 %v398
      %554 = vmatpush.msra.mxu0 %v394
      %555 = vmatmul.f32.gmra.mxu0 %v533
      %v556 = vpop.f32.mrf.mxu0
      %v557 = vadd.f32 %v447, %v556
      %558 = vmatmul.f32.gmra.mxu0 %v535
      %v559 = vpop.f32.mrf.mxu0
      %v560 = vadd.f32 %v450, %v559
      %561 = vmatmul.f32.gmra.mxu0 %v537
      %v562 = vpop.f32.mrf.mxu0
      %v563 = vadd.f32 %v453, %v562
      %564 = vdwg.mxu0
      %565 = vmatpush.msra.mxu0 0.0
      %566 = vmatpush.msra.mxu0 0.0
      %567 = vmatpush.msra.mxu0 0.0
      %568 = vmatpush.msra.mxu0 0.0
      %569 = vmatpush.msra.mxu0 0.0
      %570 = vmatpush.msra.mxu0 0.0
      %571 = vmatpush.msra.mxu0 0.0
      %572 = vmatpush.msra.mxu0 0.0
      %573 = vmatpush.msra.mxu0 0.0
      %574 = vmatpush.msra.mxu0 0.0
      %575 = vmatpush.msra.mxu0 0.0
      %576 = vmatpush.msra.mxu0 0.0
      %577 = vmatpush.msra.mxu0 0.0
      %578 = vmatpush.msra.mxu0 0.0
      %579 = vmatpush.msra.mxu0 %v399
      %580 = vmatpush.msra.mxu0 %v395
      %581 = vmatmul.f32.gmra.mxu0 %v533
      %v582 = vpop.f32.mrf.mxu0
      %v583 = vadd.f32 %v473, %v582
      %584 = vmatmul.f32.gmra.mxu0 %v535
      %v585 = vpop.f32.mrf.mxu0
      %v586 = vadd.f32 %v476, %v585
      %587 = vmatmul.f32.gmra.mxu0 %v537
      %v588 = vpop.f32.mrf.mxu0
      %v589 = vadd.f32 %v479, %v588
      %590 = vdwg.mxu0
      %591 = vmatpush.msra.mxu0 0.0
      %592 = vmatpush.msra.mxu0 0.0
      %593 = vmatpush.msra.mxu0 0.0
      %594 = vmatpush.msra.mxu0 0.0
      %595 = vmatpush.msra.mxu0 0.0
      %596 = vmatpush.msra.mxu0 0.0
      %597 = vmatpush.msra.mxu0 0.0
      %598 = vmatpush.msra.mxu0 0.0
      %599 = vmatpush.msra.mxu0 0.0
      %600 = vmatpush.msra.mxu0 0.0
      %601 = vmatpush.msra.mxu0 0.0
      %602 = vmatpush.msra.mxu0 0.0
      %603 = vmatpush.msra.mxu0 0.0
      %604 = vmatpush.msra.mxu0 0.0
      %605 = vmatpush.msra.mxu0 %v400
      %606 = vmatpush.msra.mxu0 %v396
      %607 = vmatmul.f32.gmra.mxu0 %v533
      %v608 = vpop.f32.mrf.mxu0
      %v609 = vadd.f32 %v499, %v608
      %610 = vmatmul.f32.gmra.mxu0 %v535
      %v611 = vpop.f32.mrf.mxu0
      %v612 = vadd.f32 %v502, %v611
      %613 = vmatmul.f32.gmra.mxu0 %v537
      %v614 = vpop.f32.mrf.mxu0
      %v615 = vadd.f32 %v505, %v614
      %616 = vdwg.mxu0
      %617 = vmatpush.msra.mxu0 0.0
      %618 = vmatpush.msra.mxu0 0.0
      %619 = vmatpush.msra.mxu0 0.0
      %620 = vmatpush.msra.mxu0 0.0
      %621 = vmatpush.msra.mxu0 0.0
      %622 = vmatpush.msra.mxu0 0.0
      %623 = vmatpush.msra.mxu0 0.0
      %624 = vmatpush.msra.mxu0 0.0
      %625 = vmatpush.msra.mxu0 0.0
      %626 = vmatpush.msra.mxu0 0.0
      %627 = vmatpush.msra.mxu0 0.0
      %628 = vmatpush.msra.mxu0 0.0
      %629 = vmatpush.msra.mxu0 0.0
      %630 = vmatpush.msra.mxu0 0.0
      %631 = vmatpush.msra.mxu0 %v401
      %632 = vmatpush.msra.mxu0 %v397
      %633 = vmatmul.f32.gmra.mxu0 %v533
      %v634 = vpop.f32.mrf.mxu0
      %v635 = vadd.f32 %v525, %v634
      %636 = vmatmul.f32.gmra.mxu0 %v535
      %v637 = vpop.f32.mrf.mxu0
      %v638 = vadd.f32 %v528, %v637
      %639 = vmatmul.f32.gmra.mxu0 %v537
      %v640 = vpop.f32.mrf.mxu0
      %v641 = vadd.f32 %v531, %v640
      %642 = vdwg.mxu0
      %v643 = vld [vmem:[%s6] sm:$0xf]
      %v645 = vperm.slane %v643, 0
      %v646 = vperm.slane %v643, 1
      %v647 = vperm.slane %v643, 2
      %v648 = vperm.slane %v643, 3
      %v653 = vadd.f32 %v557, %v645
      %v654 = vadd.f32 %v583, %v646
      %v655 = vadd.f32 %v609, %v647
      %v656 = vadd.f32 %v635, %v648
      %v657 = vadd.f32 %v560, %v645
      %v658 = vadd.f32 %v586, %v646
      %v659 = vadd.f32 %v612, %v647
      %v660 = vadd.f32 %v638, %v648
      %v661 = vadd.f32 %v563, %v645
      %v662 = vadd.f32 %v589, %v646
      %v663 = vadd.f32 %v615, %v647
      %v664 = vadd.f32 %v641, %v648
      %v665 = vmax.f32 %v653, 0.0
      %v666 = vmax.f32 %v654, 0.0
      %v667 = vmax.f32 %v655, 0.0
      %v668 = vmax.f32 %v656, 0.0
      %v669 = vmax.f32 %v657, 0.0
      %v670 = vmax.f32 %v658, 0.0
      %v671 = vmax.f32 %v659, 0.0
      %v672 = vmax.f32 %v660, 0.0
      %v673 = vmax.f32 %v661, 0.0
      %v674 = vmax.f32 %v662, 0.0
      %v675 = vmax.f32 %v663, 0.0
      %v676 = vmax.f32 %v664, 0.0
      %s677 = smul.u32 %s24, 32
      %v678 = vlaneseq
      %v679 = vshrl.u32 %v678, 7
      %v680 = vadd.s32 %v679, 8
      %v681 = vadd.s32 %v679, 16
      %v682 = vlaneseq
      %v683 = vand.u32 %v682, 127
      %v684 = vadd.s32 %v683, 128
      %v685 = vadd.s32 %v683, 256
      %v686 = vadd.s32 %v683, 384
      %v687 = vmul.u32 %v679, 2
      %v688 = vmul.u32 %v680, 2
      %v689 = vmul.u32 %v681, 2
      %v690 = vstv %s677
      %v691 = vadd.s32 %v690, %v687
      %v692 = vadd.s32 %v690, %v688
      %v693 = vadd.s32 %v690, %v689
      %vm694 = vcmp.ge.s32.totalorder %v683, 256
      %vm695 = vcmp.ge.s32.totalorder %v684, 256
      %vm696 = vcmp.ge.s32.totalorder %v685, 256
      %vm697 = vcmp.ge.s32.totalorder %v686, 256
      %v698 = vsel %vm694, 1, 0
      %v699 = vsel %vm695, 1, 0
      %v700 = vsel %vm696, 1, 0
      %v701 = vsel %vm697, 1, 0
      %v702 = vadd.s32 %v691, %v698
      %v703 = vadd.s32 %v691, %v699
      %v704 = vadd.s32 %v691, %v700
      %v705 = vadd.s32 %v691, %v701
      %v706 = vadd.s32 %v692, %v698
      %v707 = vadd.s32 %v692, %v699
      %v708 = vadd.s32 %v692, %v700
      %v709 = vadd.s32 %v692, %v701
      %v710 = vadd.s32 %v693, %v698
      %v711 = vadd.s32 %v693, %v699
      %v712 = vadd.s32 %v693, %v700
      %v713 = vadd.s32 %v693, %v701
      %vm714 = vcmp.ge.s32.totalorder %v702, 1
      %vm715 = vcmp.ge.s32.totalorder %v703, 1
      %vm716 = vcmp.ge.s32.totalorder %v704, 1
      %vm717 = vcmp.ge.s32.totalorder %v705, 1
      %vm718 = vcmp.ge.s32.totalorder %v706, 1
      %vm719 = vcmp.ge.s32.totalorder %v707, 1
      %vm720 = vcmp.ge.s32.totalorder %v708, 1
      %vm721 = vcmp.ge.s32.totalorder %v709, 1
      %vm722 = vcmp.ge.s32.totalorder %v710, 1
      %vm723 = vcmp.ge.s32.totalorder %v711, 1
      %vm724 = vcmp.ge.s32.totalorder %v712, 1
      %vm725 = vcmp.ge.s32.totalorder %v713, 1
      %vm726 = vcmp.le.s32.totalorder %v702, 16
      %vm727 = vcmp.le.s32.totalorder %v703, 16
      %vm728 = vcmp.le.s32.totalorder %v704, 16
      %vm729 = vcmp.le.s32.totalorder %v705, 16
      %vm730 = vcmp.le.s32.totalorder %v706, 16
      %vm731 = vcmp.le.s32.totalorder %v707, 16
      %vm732 = vcmp.le.s32.totalorder %v708, 16
      %vm733 = vcmp.le.s32.totalorder %v709, 16
      %vm734 = vcmp.le.s32.totalorder %v710, 16
      %vm735 = vcmp.le.s32.totalorder %v711, 16
      %vm736 = vcmp.le.s32.totalorder %v712, 16
      %vm737 = vcmp.le.s32.totalorder %v713, 16
      %vm738 = vmand %vm714, %vm726
      %vm739 = vmand %vm715, %vm727
      %vm740 = vmand %vm716, %vm728
      %vm741 = vmand %vm717, %vm729
      %vm742 = vmand %vm718, %vm730
      %vm743 = vmand %vm719, %vm731
      %vm744 = vmand %vm720, %vm732
      %vm745 = vmand %vm721, %vm733
      %vm746 = vmand %vm722, %vm734
      %vm747 = vmand %vm723, %vm735
      %vm748 = vmand %vm724, %vm736
      %vm749 = vmand %vm725, %vm737
      %v750 = vsel %vm738, %v665, 0.0
      %v751 = vsel %vm739, %v666, 0.0
      %v752 = vsel %vm740, %v667, 0.0
      %v753 = vsel %vm741, %v668, 0.0
      %v754 = vsel %vm742, %v669, 0.0
      %v755 = vsel %vm743, %v670, 0.0
      %v756 = vsel %vm744, %v671, 0.0
      %v757 = vsel %vm745, %v672, 0.0
      %v758 = vsel %vm746, %v673, 0.0
      %v759 = vsel %vm747, %v674, 0.0
      %v760 = vsel %vm748, %v675, 0.0
      %v761 = vsel %vm749, %v676, 0.0
      %v762 = vld [vmem:[%s4] sm:$0xff]
      %v763 = vld [vmem:[%s4 + $0x8] sm:$0xff]
      %v764 = vld [vmem:[%s4 + $0x10] sm:$0xff]
      %v765 = vld [vmem:[%s4 + $0x18] sm:$0xff]
      %v766 = vld [vmem:[%s4 + $0x20] sm:$0xff]
      %v767 = vld [vmem:[%s4 + $0x28] sm:$0xff]
      %v768 = vld [vmem:[%s4 + $0x30] sm:$0xff]
      %v769 = vld [vmem:[%s4 + $0x38] sm:$0xff]
      %v770 = vld [vmem:[%s4 + $0x40] sm:$0xff]
      %v771 = vld [vmem:[%s4 + $0x48] sm:$0xff]
      %v772 = vld [vmem:[%s4 + $0x50] sm:$0xff]
      %v773 = vld [vmem:[%s4 + $0x58] sm:$0xff]
      %v774 = vld [vmem:[%s4 + $0x60] sm:$0xff]
      %v775 = vld [vmem:[%s4 + $0x68] sm:$0xff]
      %v776 = vld [vmem:[%s4 + $0x70] sm:$0xff]
      %v777 = vld [vmem:[%s4 + $0x78] sm:$0xff]
      %v778 = vld [vmem:[%s4 + $0x80] sm:$0xff]
      %v779 = vld [vmem:[%s4 + $0x88] sm:$0xff]
      %v780 = vld [vmem:[%s4 + $0x90] sm:$0xff]
      %v781 = vld [vmem:[%s4 + $0x98] sm:$0xff]
      %v782 = vld [vmem:[%s4 + $0xa0] sm:$0xff]
      %v783 = vld [vmem:[%s4 + $0xa8] sm:$0xff]
      %v784 = vld [vmem:[%s4 + $0xb0] sm:$0xff]
      %v785 = vld [vmem:[%s4 + $0xb8] sm:$0xff]
      %v786 = vld [vmem:[%s4 + $0xc0] sm:$0xff]
      %v787 = vld [vmem:[%s4 + $0xc8] sm:$0xff]
      %v788 = vld [vmem:[%s4 + $0xd0] sm:$0xff]
      %v789 = vld [vmem:[%s4 + $0xd8] sm:$0xff]
      %v790 = vld [vmem:[%s4 + $0xe0] sm:$0xff]
      %v791 = vld [vmem:[%s4 + $0xe8] sm:$0xff]
      %v792 = vld [vmem:[%s4 + $0xf0] sm:$0xff]
      %v793 = vld [vmem:[%s4 + $0xf8] sm:$0xff]
      %v794 = vld [vmem:[%s4 + $0x100] sm:$0xff]
      %v795 = vld [vmem:[%s4 + $0x108] sm:$0xff]
      %v796 = vld [vmem:[%s4 + $0x110] sm:$0xff]
      %v797 = vld [vmem:[%s4 + $0x118] sm:$0xff]
      %v798 = vld [vmem:[%s4 + $0x120] sm:$0xff]
      %v799 = vld [vmem:[%s4 + $0x128] sm:$0xff]
      %v800 = vld [vmem:[%s4 + $0x130] sm:$0xff]
      %v801 = vld [vmem:[%s4 + $0x138] sm:$0xff]
      %v802 = vld [vmem:[%s4 + $0x140] sm:$0xff]
      %v803 = vld [vmem:[%s4 + $0x148] sm:$0xff]
      %v804 = vld [vmem:[%s4 + $0x150] sm:$0xff]
      %v805 = vld [vmem:[%s4 + $0x158] sm:$0xff]
      %v806 = vld [vmem:[%s4 + $0x160] sm:$0xff]
      %v807 = vld [vmem:[%s4 + $0x168] sm:$0xff]
      %v808 = vld [vmem:[%s4 + $0x170] sm:$0xff]
      %v809 = vld [vmem:[%s4 + $0x178] sm:$0xff]
      %v810 = vld [vmem:[%s4 + $0x180] sm:$0xff]
      %v811 = vld [vmem:[%s4 + $0x188] sm:$0xff]
      %v812 = vld [vmem:[%s4 + $0x190] sm:$0xff]
      %v813 = vld [vmem:[%s4 + $0x198] sm:$0xff]
      %v814 = vld [vmem:[%s4 + $0x1a0] sm:$0xff]
      %v815 = vld [vmem:[%s4 + $0x1a8] sm:$0xff]
      %v816 = vld [vmem:[%s4 + $0x1b0] sm:$0xff]
      %v817 = vld [vmem:[%s4 + $0x1b8] sm:$0xff]
      %v818 = vld [vmem:[%s4 + $0x1c0] sm:$0xff]
      %v819 = vld [vmem:[%s4 + $0x1c8] sm:$0xff]
      %v820 = vld [vmem:[%s4 + $0x1d0] sm:$0xff]
      %v821 = vld [vmem:[%s4 + $0x1d8] sm:$0xff]
      %v822 = vld [vmem:[%s4 + $0x1e0] sm:$0xff]
      %v823 = vld [vmem:[%s4 + $0x1e8] sm:$0xff]
      %v824 = vld [vmem:[%s4 + $0x1f0] sm:$0xff]
      %v825 = vld [vmem:[%s4 + $0x1f8] sm:$0xff]
      %v826 = vld [vmem:[%s4 + $0x200] sm:$0xff]
      %v827 = vld [vmem:[%s4 + $0x208] sm:$0xff]
      %v828 = vld [vmem:[%s4 + $0x210] sm:$0xff]
      %v829 = vld [vmem:[%s4 + $0x218] sm:$0xff]
      %v830 = vld [vmem:[%s4 + $0x220] sm:$0xff]
      %v831 = vld [vmem:[%s4 + $0x228] sm:$0xff]
      %v832 = vld [vmem:[%s4 + $0x230] sm:$0xff]
      %v833 = vld [vmem:[%s4 + $0x238] sm:$0xff]
      %v834 = vld [vmem:[%s4 + $0x240] sm:$0xff]
      %v835 = vld [vmem:[%s4 + $0x248] sm:$0xff]
      %v836 = vld [vmem:[%s4 + $0x250] sm:$0xff]
      %v837 = vld [vmem:[%s4 + $0x258] sm:$0xff]
      %v838 = vld [vmem:[%s4 + $0x260] sm:$0xff]
      %v839 = vld [vmem:[%s4 + $0x268] sm:$0xff]
      %v840 = vld [vmem:[%s4 + $0x270] sm:$0xff]
      %v841 = vld [vmem:[%s4 + $0x278] sm:$0xff]
      %v842 = vld [vmem:[%s4 + $0x280] sm:$0xff]
      %v843 = vld [vmem:[%s4 + $0x288] sm:$0xff]
      %v844 = vld [vmem:[%s4 + $0x290] sm:$0xff]
      %v845 = vld [vmem:[%s4 + $0x298] sm:$0xff]
      %v846 = vld [vmem:[%s4 + $0x2a0] sm:$0xff]
      %v847 = vld [vmem:[%s4 + $0x2a8] sm:$0xff]
      %v848 = vld [vmem:[%s4 + $0x2b0] sm:$0xff]
      %v849 = vld [vmem:[%s4 + $0x2b8] sm:$0xff]
      %v850 = vld [vmem:[%s4 + $0x2c0] sm:$0xff]
      %v851 = vld [vmem:[%s4 + $0x2c8] sm:$0xff]
      %v852 = vld [vmem:[%s4 + $0x2d0] sm:$0xff]
      %v853 = vld [vmem:[%s4 + $0x2d8] sm:$0xff]
      %v854 = vld [vmem:[%s4 + $0x2e0] sm:$0xff]
      %v855 = vld [vmem:[%s4 + $0x2e8] sm:$0xff]
      %v856 = vld [vmem:[%s4 + $0x2f0] sm:$0xff]
      %v857 = vld [vmem:[%s4 + $0x2f8] sm:$0xff]
      %v858 = vld [vmem:[%s4 + $0x300] sm:$0xff]
      %v859 = vld [vmem:[%s4 + $0x308] sm:$0xff]
      %v860 = vld [vmem:[%s4 + $0x310] sm:$0xff]
      %v861 = vld [vmem:[%s4 + $0x318] sm:$0xff]
      %v862 = vld [vmem:[%s4 + $0x320] sm:$0xff]
      %v863 = vld [vmem:[%s4 + $0x328] sm:$0xff]
      %v864 = vld [vmem:[%s4 + $0x330] sm:$0xff]
      %v865 = vld [vmem:[%s4 + $0x338] sm:$0xff]
      %v866 = vld [vmem:[%s4 + $0x340] sm:$0xff]
      %v867 = vld [vmem:[%s4 + $0x348] sm:$0xff]
      %v868 = vld [vmem:[%s4 + $0x350] sm:$0xff]
      %v869 = vld [vmem:[%s4 + $0x358] sm:$0xff]
      %v870 = vld [vmem:[%s4 + $0x360] sm:$0xff]
      %v871 = vld [vmem:[%s4 + $0x368] sm:$0xff]
      %v872 = vld [vmem:[%s4 + $0x370] sm:$0xff]
      %v873 = vld [vmem:[%s4 + $0x378] sm:$0xff]
      %v874 = vld [vmem:[%s4 + $0x380] sm:$0xff]
      %v875 = vld [vmem:[%s4 + $0x388] sm:$0xff]
      %v876 = vld [vmem:[%s4 + $0x390] sm:$0xff]
      %v877 = vld [vmem:[%s4 + $0x398] sm:$0xff]
      %v878 = vld [vmem:[%s4 + $0x3a0] sm:$0xff]
      %v879 = vld [vmem:[%s4 + $0x3a8] sm:$0xff]
      %v880 = vld [vmem:[%s4 + $0x3b0] sm:$0xff]
      %v881 = vld [vmem:[%s4 + $0x3b8] sm:$0xff]
      %v882 = vld [vmem:[%s4 + $0x3c0] sm:$0xff]
      %v883 = vld [vmem:[%s4 + $0x3c8] sm:$0xff]
      %v884 = vld [vmem:[%s4 + $0x3d0] sm:$0xff]
      %v885 = vld [vmem:[%s4 + $0x3d8] sm:$0xff]
      %v886 = vld [vmem:[%s4 + $0x3e0] sm:$0xff]
      %v887 = vld [vmem:[%s4 + $0x3e8] sm:$0xff]
      %v888 = vld [vmem:[%s4 + $0x3f0] sm:$0xff]
      %v889 = vld [vmem:[%s4 + $0x3f8] sm:$0xff]
      %v890 = vld [vmem:[%s4 + $0x400] sm:$0xff]
      %v891 = vld [vmem:[%s4 + $0x408] sm:$0xff]
      %v892 = vld [vmem:[%s4 + $0x410] sm:$0xff]
      %v893 = vld [vmem:[%s4 + $0x418] sm:$0xff]
      %v894 = vld [vmem:[%s4 + $0x420] sm:$0xff]
      %v895 = vld [vmem:[%s4 + $0x428] sm:$0xff]
      %v896 = vld [vmem:[%s4 + $0x430] sm:$0xff]
      %v897 = vld [vmem:[%s4 + $0x438] sm:$0xff]
      %v898 = vld [vmem:[%s4 + $0x440] sm:$0xff]
      %v899 = vld [vmem:[%s4 + $0x448] sm:$0xff]
      %v900 = vld [vmem:[%s4 + $0x450] sm:$0xff]
      %v901 = vld [vmem:[%s4 + $0x458] sm:$0xff]
      %v902 = vld [vmem:[%s4 + $0x460] sm:$0xff]
      %v903 = vld [vmem:[%s4 + $0x468] sm:$0xff]
      %v904 = vld [vmem:[%s4 + $0x470] sm:$0xff]
      %v905 = vld [vmem:[%s4 + $0x478] sm:$0xff]
      %v906 = vld [vmem:[%s4 + $0x480] sm:$0xff]
      %v907 = vld [vmem:[%s4 + $0x488] sm:$0xff]
      %v908 = vld [vmem:[%s4 + $0x490] sm:$0xff]
      %v909 = vld [vmem:[%s4 + $0x498] sm:$0xff]
      %v910 = vld [vmem:[%s4 + $0x4a0] sm:$0xff]
      %v911 = vld [vmem:[%s4 + $0x4a8] sm:$0xff]
      %v912 = vld [vmem:[%s4 + $0x4b0] sm:$0xff]
      %v913 = vld [vmem:[%s4 + $0x4b8] sm:$0xff]
      %v914 = vld [vmem:[%s4 + $0x4c0] sm:$0xff]
      %v915 = vld [vmem:[%s4 + $0x4c8] sm:$0xff]
      %v916 = vld [vmem:[%s4 + $0x4d0] sm:$0xff]
      %v917 = vld [vmem:[%s4 + $0x4d8] sm:$0xff]
      %v918 = vld [vmem:[%s4 + $0x4e0] sm:$0xff]
      %v919 = vld [vmem:[%s4 + $0x4e8] sm:$0xff]
      %v920 = vld [vmem:[%s4 + $0x4f0] sm:$0xff]
      %v921 = vld [vmem:[%s4 + $0x4f8] sm:$0xff]
      %v922 = vld [vmem:[%s4 + $0x500] sm:$0xff]
      %v923 = vld [vmem:[%s4 + $0x508] sm:$0xff]
      %v924 = vld [vmem:[%s4 + $0x510] sm:$0xff]
      %v925 = vld [vmem:[%s4 + $0x518] sm:$0xff]
      %v926 = vld [vmem:[%s4 + $0x520] sm:$0xff]
      %v927 = vld [vmem:[%s4 + $0x528] sm:$0xff]
      %v928 = vld [vmem:[%s4 + $0x530] sm:$0xff]
      %v929 = vld [vmem:[%s4 + $0x538] sm:$0xff]
      %v930 = vld [vmem:[%s4 + $0x540] sm:$0xff]
      %v931 = vld [vmem:[%s4 + $0x548] sm:$0xff]
      %v932 = vld [vmem:[%s4 + $0x550] sm:$0xff]
      %v933 = vld [vmem:[%s4 + $0x558] sm:$0xff]
      %v934 = vld [vmem:[%s4 + $0x560] sm:$0xff]
      %v935 = vld [vmem:[%s4 + $0x568] sm:$0xff]
      %v936 = vld [vmem:[%s4 + $0x570] sm:$0xff]
      %v937 = vld [vmem:[%s4 + $0x578] sm:$0xff]
      %v938 = vld [vmem:[%s4 + $0x580] sm:$0xff]
      %v939 = vld [vmem:[%s4 + $0x588] sm:$0xff]
      %v940 = vld [vmem:[%s4 + $0x590] sm:$0xff]
      %v941 = vld [vmem:[%s4 + $0x598] sm:$0xff]
      %v942 = vld [vmem:[%s4 + $0x5a0] sm:$0xff]
      %v943 = vld [vmem:[%s4 + $0x5a8] sm:$0xff]
      %v944 = vld [vmem:[%s4 + $0x5b0] sm:$0xff]
      %v945 = vld [vmem:[%s4 + $0x5b8] sm:$0xff]
      %v946 = vld [vmem:[%s4 + $0x5c0] sm:$0xff]
      %v947 = vld [vmem:[%s4 + $0x5c8] sm:$0xff]
      %v948 = vld [vmem:[%s4 + $0x5d0] sm:$0xff]
      %v949 = vld [vmem:[%s4 + $0x5d8] sm:$0xff]
      %v950 = vld [vmem:[%s4 + $0x5e0] sm:$0xff]
      %v951 = vld [vmem:[%s4 + $0x5e8] sm:$0xff]
      %v952 = vld [vmem:[%s4 + $0x5f0] sm:$0xff]
      %v953 = vld [vmem:[%s4 + $0x5f8] sm:$0xff]
      %v954 = vld [vmem:[%s4 + $0x600] sm:$0xff]
      %v955 = vld [vmem:[%s4 + $0x608] sm:$0xff]
      %v956 = vld [vmem:[%s4 + $0x610] sm:$0xff]
      %v957 = vld [vmem:[%s4 + $0x618] sm:$0xff]
      %v958 = vld [vmem:[%s4 + $0x620] sm:$0xff]
      %v959 = vld [vmem:[%s4 + $0x628] sm:$0xff]
      %v960 = vld [vmem:[%s4 + $0x630] sm:$0xff]
      %v961 = vld [vmem:[%s4 + $0x638] sm:$0xff]
      %v962 = vld [vmem:[%s4 + $0x640] sm:$0xff]
      %v963 = vld [vmem:[%s4 + $0x648] sm:$0xff]
      %v964 = vld [vmem:[%s4 + $0x650] sm:$0xff]
      %v965 = vld [vmem:[%s4 + $0x658] sm:$0xff]
      %v966 = vld [vmem:[%s4 + $0x660] sm:$0xff]
      %v967 = vld [vmem:[%s4 + $0x668] sm:$0xff]
      %v968 = vld [vmem:[%s4 + $0x670] sm:$0xff]
      %v969 = vld [vmem:[%s4 + $0x678] sm:$0xff]
      %v970 = vld [vmem:[%s4 + $0x680] sm:$0xff]
      %v971 = vld [vmem:[%s4 + $0x688] sm:$0xff]
      %v972 = vld [vmem:[%s4 + $0x690] sm:$0xff]
      %v973 = vld [vmem:[%s4 + $0x698] sm:$0xff]
      %v974 = vld [vmem:[%s4 + $0x6a0] sm:$0xff]
      %v975 = vld [vmem:[%s4 + $0x6a8] sm:$0xff]
      %v976 = vld [vmem:[%s4 + $0x6b0] sm:$0xff]
      %v977 = vld [vmem:[%s4 + $0x6b8] sm:$0xff]
      %v978 = vld [vmem:[%s4 + $0x6c0] sm:$0xff]
      %v979 = vld [vmem:[%s4 + $0x6c8] sm:$0xff]
      %v980 = vld [vmem:[%s4 + $0x6d0] sm:$0xff]
      %v981 = vld [vmem:[%s4 + $0x6d8] sm:$0xff]
      %v982 = vld [vmem:[%s4 + $0x6e0] sm:$0xff]
      %v983 = vld [vmem:[%s4 + $0x6e8] sm:$0xff]
      %v984 = vld [vmem:[%s4 + $0x6f0] sm:$0xff]
      %v985 = vld [vmem:[%s4 + $0x6f8] sm:$0xff]
      %v986 = vld [vmem:[%s4 + $0x700] sm:$0xff]
      %v987 = vld [vmem:[%s4 + $0x708] sm:$0xff]
      %v988 = vld [vmem:[%s4 + $0x710] sm:$0xff]
      %v989 = vld [vmem:[%s4 + $0x718] sm:$0xff]
      %v990 = vld [vmem:[%s4 + $0x720] sm:$0xff]
      %v991 = vld [vmem:[%s4 + $0x728] sm:$0xff]
      %v992 = vld [vmem:[%s4 + $0x730] sm:$0xff]
      %v993 = vld [vmem:[%s4 + $0x738] sm:$0xff]
      %v994 = vld [vmem:[%s4 + $0x740] sm:$0xff]
      %v995 = vld [vmem:[%s4 + $0x748] sm:$0xff]
      %v996 = vld [vmem:[%s4 + $0x750] sm:$0xff]
      %v997 = vld [vmem:[%s4 + $0x758] sm:$0xff]
      %v998 = vld [vmem:[%s4 + $0x760] sm:$0xff]
      %v999 = vld [vmem:[%s4 + $0x768] sm:$0xff]
      %v1000 = vld [vmem:[%s4 + $0x770] sm:$0xff]
      %v1001 = vld [vmem:[%s4 + $0x778] sm:$0xff]
      %v1002 = vld [vmem:[%s4 + $0x780] sm:$0xff]
      %v1003 = vld [vmem:[%s4 + $0x788] sm:$0xff]
      %v1004 = vld [vmem:[%s4 + $0x790] sm:$0xff]
      %v1005 = vld [vmem:[%s4 + $0x798] sm:$0xff]
      %v1006 = vld [vmem:[%s4 + $0x7a0] sm:$0xff]
      %v1007 = vld [vmem:[%s4 + $0x7a8] sm:$0xff]
      %v1008 = vld [vmem:[%s4 + $0x7b0] sm:$0xff]
      %v1009 = vld [vmem:[%s4 + $0x7b8] sm:$0xff]
      %v1010 = vld [vmem:[%s4 + $0x7c0] sm:$0xff]
      %v1011 = vld [vmem:[%s4 + $0x7c8] sm:$0xff]
      %v1012 = vld [vmem:[%s4 + $0x7d0] sm:$0xff]
      %v1013 = vld [vmem:[%s4 + $0x7d8] sm:$0xff]
      %v1014 = vld [vmem:[%s4 + $0x7e0] sm:$0xff]
      %v1015 = vld [vmem:[%s4 + $0x7e8] sm:$0xff]
      %v1016 = vld [vmem:[%s4 + $0x7f0] sm:$0xff]
      %v1017 = vld [vmem:[%s4 + $0x7f8] sm:$0xff]
      %v1018 = vld [vmem:[%s5] sm:$0xff]
      %v1019 = vld [vmem:[%s5 + $0x8] sm:$0xff]
      %v1020 = vld [vmem:[%s5 + $0x10] sm:$0xff]
      %v1021 = vld [vmem:[%s5 + $0x18] sm:$0xff]
      %v1022 = vld [vmem:[%s5 + $0x20] sm:$0xff]
      %v1023 = vld [vmem:[%s5 + $0x28] sm:$0xff]
      %v1024 = vld [vmem:[%s5 + $0x30] sm:$0xff]
      %v1025 = vld [vmem:[%s5 + $0x38] sm:$0xff]
      %v1026 = vld [vmem:[%s5 + $0x40] sm:$0xff]
      %v1027 = vld [vmem:[%s5 + $0x48] sm:$0xff]
      %v1028 = vld [vmem:[%s5 + $0x50] sm:$0xff]
      %v1029 = vld [vmem:[%s5 + $0x58] sm:$0xff]
      %v1030 = vld [vmem:[%s5 + $0x60] sm:$0xff]
      %v1031 = vld [vmem:[%s5 + $0x68] sm:$0xff]
      %v1032 = vld [vmem:[%s5 + $0x70] sm:$0xff]
      %v1033 = vld [vmem:[%s5 + $0x78] sm:$0xff]
      %v1034 = vld [vmem:[%s5 + $0x80] sm:$0xff]
      %v1035 = vld [vmem:[%s5 + $0x88] sm:$0xff]
      %v1036 = vld [vmem:[%s5 + $0x90] sm:$0xff]
      %v1037 = vld [vmem:[%s5 + $0x98] sm:$0xff]
      %v1038 = vld [vmem:[%s5 + $0xa0] sm:$0xff]
      %v1039 = vld [vmem:[%s5 + $0xa8] sm:$0xff]
      %v1040 = vld [vmem:[%s5 + $0xb0] sm:$0xff]
      %v1041 = vld [vmem:[%s5 + $0xb8] sm:$0xff]
      %v1042 = vld [vmem:[%s5 + $0xc0] sm:$0xff]
      %v1043 = vld [vmem:[%s5 + $0xc8] sm:$0xff]
      %v1044 = vld [vmem:[%s5 + $0xd0] sm:$0xff]
      %v1045 = vld [vmem:[%s5 + $0xd8] sm:$0xff]
      %v1046 = vld [vmem:[%s5 + $0xe0] sm:$0xff]
      %v1047 = vld [vmem:[%s5 + $0xe8] sm:$0xff]
      %v1048 = vld [vmem:[%s5 + $0xf0] sm:$0xff]
      %v1049 = vld [vmem:[%s5 + $0xf8] sm:$0xff]
      %v1050 = vld [vmem:[%s5 + $0x100] sm:$0xff]
      %v1051 = vld [vmem:[%s5 + $0x108] sm:$0xff]
      %v1052 = vld [vmem:[%s5 + $0x110] sm:$0xff]
      %v1053 = vld [vmem:[%s5 + $0x118] sm:$0xff]
      %v1054 = vld [vmem:[%s5 + $0x120] sm:$0xff]
      %v1055 = vld [vmem:[%s5 + $0x128] sm:$0xff]
      %v1056 = vld [vmem:[%s5 + $0x130] sm:$0xff]
      %v1057 = vld [vmem:[%s5 + $0x138] sm:$0xff]
      %v1058 = vld [vmem:[%s5 + $0x140] sm:$0xff]
      %v1059 = vld [vmem:[%s5 + $0x148] sm:$0xff]
      %v1060 = vld [vmem:[%s5 + $0x150] sm:$0xff]
      %v1061 = vld [vmem:[%s5 + $0x158] sm:$0xff]
      %v1062 = vld [vmem:[%s5 + $0x160] sm:$0xff]
      %v1063 = vld [vmem:[%s5 + $0x168] sm:$0xff]
      %v1064 = vld [vmem:[%s5 + $0x170] sm:$0xff]
      %v1065 = vld [vmem:[%s5 + $0x178] sm:$0xff]
      %v1066 = vld [vmem:[%s5 + $0x180] sm:$0xff]
      %v1067 = vld [vmem:[%s5 + $0x188] sm:$0xff]
      %v1068 = vld [vmem:[%s5 + $0x190] sm:$0xff]
      %v1069 = vld [vmem:[%s5 + $0x198] sm:$0xff]
      %v1070 = vld [vmem:[%s5 + $0x1a0] sm:$0xff]
      %v1071 = vld [vmem:[%s5 + $0x1a8] sm:$0xff]
      %v1072 = vld [vmem:[%s5 + $0x1b0] sm:$0xff]
      %v1073 = vld [vmem:[%s5 + $0x1b8] sm:$0xff]
      %v1074 = vld [vmem:[%s5 + $0x1c0] sm:$0xff]
      %v1075 = vld [vmem:[%s5 + $0x1c8] sm:$0xff]
      %v1076 = vld [vmem:[%s5 + $0x1d0] sm:$0xff]
      %v1077 = vld [vmem:[%s5 + $0x1d8] sm:$0xff]
      %v1078 = vld [vmem:[%s5 + $0x1e0] sm:$0xff]
      %v1079 = vld [vmem:[%s5 + $0x1e8] sm:$0xff]
      %v1080 = vld [vmem:[%s5 + $0x1f0] sm:$0xff]
      %v1081 = vld [vmem:[%s5 + $0x1f8] sm:$0xff]
      %v1082 = vld [vmem:[%s5 + $0x200] sm:$0xff]
      %v1083 = vld [vmem:[%s5 + $0x208] sm:$0xff]
      %v1084 = vld [vmem:[%s5 + $0x210] sm:$0xff]
      %v1085 = vld [vmem:[%s5 + $0x218] sm:$0xff]
      %v1086 = vld [vmem:[%s5 + $0x220] sm:$0xff]
      %v1087 = vld [vmem:[%s5 + $0x228] sm:$0xff]
      %v1088 = vld [vmem:[%s5 + $0x230] sm:$0xff]
      %v1089 = vld [vmem:[%s5 + $0x238] sm:$0xff]
      %v1090 = vld [vmem:[%s5 + $0x240] sm:$0xff]
      %v1091 = vld [vmem:[%s5 + $0x248] sm:$0xff]
      %v1092 = vld [vmem:[%s5 + $0x250] sm:$0xff]
      %v1093 = vld [vmem:[%s5 + $0x258] sm:$0xff]
      %v1094 = vld [vmem:[%s5 + $0x260] sm:$0xff]
      %v1095 = vld [vmem:[%s5 + $0x268] sm:$0xff]
      %v1096 = vld [vmem:[%s5 + $0x270] sm:$0xff]
      %v1097 = vld [vmem:[%s5 + $0x278] sm:$0xff]
      %v1098 = vld [vmem:[%s5 + $0x280] sm:$0xff]
      %v1099 = vld [vmem:[%s5 + $0x288] sm:$0xff]
      %v1100 = vld [vmem:[%s5 + $0x290] sm:$0xff]
      %v1101 = vld [vmem:[%s5 + $0x298] sm:$0xff]
      %v1102 = vld [vmem:[%s5 + $0x2a0] sm:$0xff]
      %v1103 = vld [vmem:[%s5 + $0x2a8] sm:$0xff]
      %v1104 = vld [vmem:[%s5 + $0x2b0] sm:$0xff]
      %v1105 = vld [vmem:[%s5 + $0x2b8] sm:$0xff]
      %v1106 = vld [vmem:[%s5 + $0x2c0] sm:$0xff]
      %v1107 = vld [vmem:[%s5 + $0x2c8] sm:$0xff]
      %v1108 = vld [vmem:[%s5 + $0x2d0] sm:$0xff]
      %v1109 = vld [vmem:[%s5 + $0x2d8] sm:$0xff]
      %v1110 = vld [vmem:[%s5 + $0x2e0] sm:$0xff]
      %v1111 = vld [vmem:[%s5 + $0x2e8] sm:$0xff]
      %v1112 = vld [vmem:[%s5 + $0x2f0] sm:$0xff]
      %v1113 = vld [vmem:[%s5 + $0x2f8] sm:$0xff]
      %v1114 = vld [vmem:[%s5 + $0x300] sm:$0xff]
      %v1115 = vld [vmem:[%s5 + $0x308] sm:$0xff]
      %v1116 = vld [vmem:[%s5 + $0x310] sm:$0xff]
      %v1117 = vld [vmem:[%s5 + $0x318] sm:$0xff]
      %v1118 = vld [vmem:[%s5 + $0x320] sm:$0xff]
      %v1119 = vld [vmem:[%s5 + $0x328] sm:$0xff]
      %v1120 = vld [vmem:[%s5 + $0x330] sm:$0xff]
      %v1121 = vld [vmem:[%s5 + $0x338] sm:$0xff]
      %v1122 = vld [vmem:[%s5 + $0x340] sm:$0xff]
      %v1123 = vld [vmem:[%s5 + $0x348] sm:$0xff]
      %v1124 = vld [vmem:[%s5 + $0x350] sm:$0xff]
      %v1125 = vld [vmem:[%s5 + $0x358] sm:$0xff]
      %v1126 = vld [vmem:[%s5 + $0x360] sm:$0xff]
      %v1127 = vld [vmem:[%s5 + $0x368] sm:$0xff]
      %v1128 = vld [vmem:[%s5 + $0x370] sm:$0xff]
      %v1129 = vld [vmem:[%s5 + $0x378] sm:$0xff]
      %v1130 = vld [vmem:[%s5 + $0x380] sm:$0xff]
      %v1131 = vld [vmem:[%s5 + $0x388] sm:$0xff]
      %v1132 = vld [vmem:[%s5 + $0x390] sm:$0xff]
      %v1133 = vld [vmem:[%s5 + $0x398] sm:$0xff]
      %v1134 = vld [vmem:[%s5 + $0x3a0] sm:$0xff]
      %v1135 = vld [vmem:[%s5 + $0x3a8] sm:$0xff]
      %v1136 = vld [vmem:[%s5 + $0x3b0] sm:$0xff]
      %v1137 = vld [vmem:[%s5 + $0x3b8] sm:$0xff]
      %v1138 = vld [vmem:[%s5 + $0x3c0] sm:$0xff]
      %v1139 = vld [vmem:[%s5 + $0x3c8] sm:$0xff]
      %v1140 = vld [vmem:[%s5 + $0x3d0] sm:$0xff]
      %v1141 = vld [vmem:[%s5 + $0x3d8] sm:$0xff]
      %v1142 = vld [vmem:[%s5 + $0x3e0] sm:$0xff]
      %v1143 = vld [vmem:[%s5 + $0x3e8] sm:$0xff]
      %v1144 = vld [vmem:[%s5 + $0x3f0] sm:$0xff]
      %v1145 = vld [vmem:[%s5 + $0x3f8] sm:$0xff]
      %v1146 = vld [vmem:[%s5 + $0x400] sm:$0xff]
      %v1147 = vld [vmem:[%s5 + $0x408] sm:$0xff]
      %v1148 = vld [vmem:[%s5 + $0x410] sm:$0xff]
      %v1149 = vld [vmem:[%s5 + $0x418] sm:$0xff]
      %v1150 = vld [vmem:[%s5 + $0x420] sm:$0xff]
      %v1151 = vld [vmem:[%s5 + $0x428] sm:$0xff]
      %v1152 = vld [vmem:[%s5 + $0x430] sm:$0xff]
      %v1153 = vld [vmem:[%s5 + $0x438] sm:$0xff]
      %v1154 = vld [vmem:[%s5 + $0x440] sm:$0xff]
      %v1155 = vld [vmem:[%s5 + $0x448] sm:$0xff]
      %v1156 = vld [vmem:[%s5 + $0x450] sm:$0xff]
      %v1157 = vld [vmem:[%s5 + $0x458] sm:$0xff]
      %v1158 = vld [vmem:[%s5 + $0x460] sm:$0xff]
      %v1159 = vld [vmem:[%s5 + $0x468] sm:$0xff]
      %v1160 = vld [vmem:[%s5 + $0x470] sm:$0xff]
      %v1161 = vld [vmem:[%s5 + $0x478] sm:$0xff]
      %v1162 = vld [vmem:[%s5 + $0x480] sm:$0xff]
      %v1163 = vld [vmem:[%s5 + $0x488] sm:$0xff]
      %v1164 = vld [vmem:[%s5 + $0x490] sm:$0xff]
      %v1165 = vld [vmem:[%s5 + $0x498] sm:$0xff]
      %v1166 = vld [vmem:[%s5 + $0x4a0] sm:$0xff]
      %v1167 = vld [vmem:[%s5 + $0x4a8] sm:$0xff]
      %v1168 = vld [vmem:[%s5 + $0x4b0] sm:$0xff]
      %v1169 = vld [vmem:[%s5 + $0x4b8] sm:$0xff]
      %v1170 = vld [vmem:[%s5 + $0x4c0] sm:$0xff]
      %v1171 = vld [vmem:[%s5 + $0x4c8] sm:$0xff]
      %v1172 = vld [vmem:[%s5 + $0x4d0] sm:$0xff]
      %v1173 = vld [vmem:[%s5 + $0x4d8] sm:$0xff]
      %v1174 = vld [vmem:[%s5 + $0x4e0] sm:$0xff]
      %v1175 = vld [vmem:[%s5 + $0x4e8] sm:$0xff]
      %v1176 = vld [vmem:[%s5 + $0x4f0] sm:$0xff]
      %v1177 = vld [vmem:[%s5 + $0x4f8] sm:$0xff]
      %v1178 = vld [vmem:[%s5 + $0x500] sm:$0xff]
      %v1179 = vld [vmem:[%s5 + $0x508] sm:$0xff]
      %v1180 = vld [vmem:[%s5 + $0x510] sm:$0xff]
      %v1181 = vld [vmem:[%s5 + $0x518] sm:$0xff]
      %v1182 = vld [vmem:[%s5 + $0x520] sm:$0xff]
      %v1183 = vld [vmem:[%s5 + $0x528] sm:$0xff]
      %v1184 = vld [vmem:[%s5 + $0x530] sm:$0xff]
      %v1185 = vld [vmem:[%s5 + $0x538] sm:$0xff]
      %v1186 = vld [vmem:[%s5 + $0x540] sm:$0xff]
      %v1187 = vld [vmem:[%s5 + $0x548] sm:$0xff]
      %v1188 = vld [vmem:[%s5 + $0x550] sm:$0xff]
      %v1189 = vld [vmem:[%s5 + $0x558] sm:$0xff]
      %v1190 = vld [vmem:[%s5 + $0x560] sm:$0xff]
      %v1191 = vld [vmem:[%s5 + $0x568] sm:$0xff]
      %v1192 = vld [vmem:[%s5 + $0x570] sm:$0xff]
      %v1193 = vld [vmem:[%s5 + $0x578] sm:$0xff]
      %v1194 = vld [vmem:[%s5 + $0x580] sm:$0xff]
      %v1195 = vld [vmem:[%s5 + $0x588] sm:$0xff]
      %v1196 = vld [vmem:[%s5 + $0x590] sm:$0xff]
      %v1197 = vld [vmem:[%s5 + $0x598] sm:$0xff]
      %v1198 = vld [vmem:[%s5 + $0x5a0] sm:$0xff]
      %v1199 = vld [vmem:[%s5 + $0x5a8] sm:$0xff]
      %v1200 = vld [vmem:[%s5 + $0x5b0] sm:$0xff]
      %v1201 = vld [vmem:[%s5 + $0x5b8] sm:$0xff]
      %v1202 = vld [vmem:[%s5 + $0x5c0] sm:$0xff]
      %v1203 = vld [vmem:[%s5 + $0x5c8] sm:$0xff]
      %v1204 = vld [vmem:[%s5 + $0x5d0] sm:$0xff]
      %v1205 = vld [vmem:[%s5 + $0x5d8] sm:$0xff]
      %v1206 = vld [vmem:[%s5 + $0x5e0] sm:$0xff]
      %v1207 = vld [vmem:[%s5 + $0x5e8] sm:$0xff]
      %v1208 = vld [vmem:[%s5 + $0x5f0] sm:$0xff]
      %v1209 = vld [vmem:[%s5 + $0x5f8] sm:$0xff]
      %v1210 = vld [vmem:[%s5 + $0x600] sm:$0xff]
      %v1211 = vld [vmem:[%s5 + $0x608] sm:$0xff]
      %v1212 = vld [vmem:[%s5 + $0x610] sm:$0xff]
      %v1213 = vld [vmem:[%s5 + $0x618] sm:$0xff]
      %v1214 = vld [vmem:[%s5 + $0x620] sm:$0xff]
      %v1215 = vld [vmem:[%s5 + $0x628] sm:$0xff]
      %v1216 = vld [vmem:[%s5 + $0x630] sm:$0xff]
      %v1217 = vld [vmem:[%s5 + $0x638] sm:$0xff]
      %v1218 = vld [vmem:[%s5 + $0x640] sm:$0xff]
      %v1219 = vld [vmem:[%s5 + $0x648] sm:$0xff]
      %v1220 = vld [vmem:[%s5 + $0x650] sm:$0xff]
      %v1221 = vld [vmem:[%s5 + $0x658] sm:$0xff]
      %v1222 = vld [vmem:[%s5 + $0x660] sm:$0xff]
      %v1223 = vld [vmem:[%s5 + $0x668] sm:$0xff]
      %v1224 = vld [vmem:[%s5 + $0x670] sm:$0xff]
      %v1225 = vld [vmem:[%s5 + $0x678] sm:$0xff]
      %v1226 = vld [vmem:[%s5 + $0x680] sm:$0xff]
      %v1227 = vld [vmem:[%s5 + $0x688] sm:$0xff]
      %v1228 = vld [vmem:[%s5 + $0x690] sm:$0xff]
      %v1229 = vld [vmem:[%s5 + $0x698] sm:$0xff]
      %v1230 = vld [vmem:[%s5 + $0x6a0] sm:$0xff]
      %v1231 = vld [vmem:[%s5 + $0x6a8] sm:$0xff]
      %v1232 = vld [vmem:[%s5 + $0x6b0] sm:$0xff]
      %v1233 = vld [vmem:[%s5 + $0x6b8] sm:$0xff]
      %v1234 = vld [vmem:[%s5 + $0x6c0] sm:$0xff]
      %v1235 = vld [vmem:[%s5 + $0x6c8] sm:$0xff]
      %v1236 = vld [vmem:[%s5 + $0x6d0] sm:$0xff]
      %v1237 = vld [vmem:[%s5 + $0x6d8] sm:$0xff]
      %v1238 = vld [vmem:[%s5 + $0x6e0] sm:$0xff]
      %v1239 = vld [vmem:[%s5 + $0x6e8] sm:$0xff]
      %v1240 = vld [vmem:[%s5 + $0x6f0] sm:$0xff]
      %v1241 = vld [vmem:[%s5 + $0x6f8] sm:$0xff]
      %v1242 = vld [vmem:[%s5 + $0x700] sm:$0xff]
      %v1243 = vld [vmem:[%s5 + $0x708] sm:$0xff]
      %v1244 = vld [vmem:[%s5 + $0x710] sm:$0xff]
      %v1245 = vld [vmem:[%s5 + $0x718] sm:$0xff]
      %v1246 = vld [vmem:[%s5 + $0x720] sm:$0xff]
      %v1247 = vld [vmem:[%s5 + $0x728] sm:$0xff]
      %v1248 = vld [vmem:[%s5 + $0x730] sm:$0xff]
      %v1249 = vld [vmem:[%s5 + $0x738] sm:$0xff]
      %v1250 = vld [vmem:[%s5 + $0x740] sm:$0xff]
      %v1251 = vld [vmem:[%s5 + $0x748] sm:$0xff]
      %v1252 = vld [vmem:[%s5 + $0x750] sm:$0xff]
      %v1253 = vld [vmem:[%s5 + $0x758] sm:$0xff]
      %v1254 = vld [vmem:[%s5 + $0x760] sm:$0xff]
      %v1255 = vld [vmem:[%s5 + $0x768] sm:$0xff]
      %v1256 = vld [vmem:[%s5 + $0x770] sm:$0xff]
      %v1257 = vld [vmem:[%s5 + $0x778] sm:$0xff]
      %v1258 = vld [vmem:[%s5 + $0x780] sm:$0xff]
      %v1259 = vld [vmem:[%s5 + $0x788] sm:$0xff]
      %v1260 = vld [vmem:[%s5 + $0x790] sm:$0xff]
      %v1261 = vld [vmem:[%s5 + $0x798] sm:$0xff]
      %v1262 = vld [vmem:[%s5 + $0x7a0] sm:$0xff]
      %v1263 = vld [vmem:[%s5 + $0x7a8] sm:$0xff]
      %v1264 = vld [vmem:[%s5 + $0x7b0] sm:$0xff]
      %v1265 = vld [vmem:[%s5 + $0x7b8] sm:$0xff]
      %v1266 = vld [vmem:[%s5 + $0x7c0] sm:$0xff]
      %v1267 = vld [vmem:[%s5 + $0x7c8] sm:$0xff]
      %v1268 = vld [vmem:[%s5 + $0x7d0] sm:$0xff]
      %v1269 = vld [vmem:[%s5 + $0x7d8] sm:$0xff]
      %v1270 = vld [vmem:[%s5 + $0x7e0] sm:$0xff]
      %v1271 = vld [vmem:[%s5 + $0x7e8] sm:$0xff]
      %v1272 = vld [vmem:[%s5 + $0x7f0] sm:$0xff]
      %v1273 = vld [vmem:[%s5 + $0x7f8] sm:$0xff]
      %v1286 = vrot.slane %v750, 1
      %v1287 = vrot.slane %v754, 1
      %v1288 = vsel %vm414, %v1286, %v1287
      %v1289 = vrot.slane %v751, 1
      %v1290 = vrot.slane %v755, 1
      %v1291 = vsel %vm414, %v1289, %v1290
      %v1292 = vrot.slane %v752, 1
      %v1293 = vrot.slane %v756, 1
      %v1294 = vsel %vm414, %v1292, %v1293
      %v1295 = vrot.slane %v753, 1
      %v1296 = vrot.slane %v757, 1
      %v1297 = vsel %vm414, %v1295, %v1296
      %v1298 = vrot.slane %v758, 1
      %v1299 = vsel %vm414, %v1287, %v1298
      %v1300 = vrot.slane %v759, 1
      %v1301 = vsel %vm414, %v1290, %v1300
      %v1302 = vrot.slane %v760, 1
      %v1303 = vsel %vm414, %v1293, %v1302
      %v1304 = vrot.slane %v761, 1
      %v1305 = vsel %vm414, %v1296, %v1304
      %1314 = vmatpush.msra.mxu0 %v1078
      %1315 = vmatpush.msra.mxu0 %v1074
      %1316 = vmatpush.msra.mxu0 %v1070
      %1317 = vmatpush.msra.mxu0 %v1066
      %1318 = vmatpush.msra.mxu0 %v1062
      %1319 = vmatpush.msra.mxu0 %v1058
      %1320 = vmatpush.msra.mxu0 %v1054
      %1321 = vmatpush.msra.mxu0 %v1050
      %1322 = vmatpush.msra.mxu0 %v1046
      %1323 = vmatpush.msra.mxu0 %v1042
      %1324 = vmatpush.msra.mxu0 %v1038
      %1325 = vmatpush.msra.mxu0 %v1034
      %1326 = vmatpush.msra.mxu0 %v1030
      %1327 = vmatpush.msra.mxu0 %v1026
      %1328 = vmatpush.msra.mxu0 %v1022
      %1329 = vmatpush.msra.mxu0 %v1018
      %1330 = vmatmul.f32.gmra.mxu0 %v1288
      %v1331 = vpop.f32.mrf.mxu0
      %v1332 = vadd.f32 0.0, %v1331
      %1333 = vmatmul.f32.gmra.mxu0 %v1299
      %v1334 = vpop.f32.mrf.mxu0
      %v1335 = vadd.f32 0.0, %v1334
      %1336 = vdwg.mxu0
      %1337 = vmatpush.msra.mxu0 %v1142
      %1338 = vmatpush.msra.mxu0 %v1138
      %1339 = vmatpush.msra.mxu0 %v1134
      %1340 = vmatpush.msra.mxu0 %v1130
      %1341 = vmatpush.msra.mxu0 %v1126
      %1342 = vmatpush.msra.mxu0 %v1122
      %1343 = vmatpush.msra.mxu0 %v1118
      %1344 = vmatpush.msra.mxu0 %v1114
      %1345 = vmatpush.msra.mxu0 %v1110
      %1346 = vmatpush.msra.mxu0 %v1106
      %1347 = vmatpush.msra.mxu0 %v1102
      %1348 = vmatpush.msra.mxu0 %v1098
      %1349 = vmatpush.msra.mxu0 %v1094
      %1350 = vmatpush.msra.mxu0 %v1090
      %1351 = vmatpush.msra.mxu0 %v1086
      %1352 = vmatpush.msra.mxu0 %v1082
      %1353 = vmatmul.f32.gmra.mxu0 %v1291
      %v1354 = vpop.f32.mrf.mxu0
      %v1355 = vadd.f32 %v1332, %v1354
      %1356 = vmatmul.f32.gmra.mxu0 %v1301
      %v1357 = vpop.f32.mrf.mxu0
      %v1358 = vadd.f32 %v1335, %v1357
      %1359 = vdwg.mxu0
      %1360 = vmatpush.msra.mxu0 %v1206
      %1361 = vmatpush.msra.mxu0 %v1202
      %1362 = vmatpush.msra.mxu0 %v1198
      %1363 = vmatpush.msra.mxu0 %v1194
      %1364 = vmatpush.msra.mxu0 %v1190
      %1365 = vmatpush.msra.mxu0 %v1186
      %1366 = vmatpush.msra.mxu0 %v1182
      %1367 = vmatpush.msra.mxu0 %v1178
      %1368 = vmatpush.msra.mxu0 %v1174
      %1369 = vmatpush.msra.mxu0 %v1170
      %1370 = vmatpush.msra.mxu0 %v1166
      %1371 = vmatpush.msra.mxu0 %v1162
      %1372 = vmatpush.msra.mxu0 %v1158
      %1373 = vmatpush.msra.mxu0 %v1154
      %1374 = vmatpush.msra.mxu0 %v1150
      %1375 = vmatpush.msra.mxu0 %v1146
      %1376 = vmatmul.f32.gmra.mxu0 %v1294
      %v1377 = vpop.f32.mrf.mxu0
      %v1378 = vadd.f32 %v1355, %v1377
      %1379 = vmatmul.f32.gmra.mxu0 %v1303
      %v1380 = vpop.f32.mrf.mxu0
      %v1381 = vadd.f32 %v1358, %v1380
      %1382 = vdwg.mxu0
      %1383 = vmatpush.msra.mxu0 %v1270
      %1384 = vmatpush.msra.mxu0 %v1266
      %1385 = vmatpush.msra.mxu0 %v1262
      %1386 = vmatpush.msra.mxu0 %v1258
      %1387 = vmatpush.msra.mxu0 %v1254
      %1388 = vmatpush.msra.mxu0 %v1250
      %1389 = vmatpush.msra.mxu0 %v1246
      %1390 = vmatpush.msra.mxu0 %v1242
      %1391 = vmatpush.msra.mxu0 %v1238
      %1392 = vmatpush.msra.mxu0 %v1234
      %1393 = vmatpush.msra.mxu0 %v1230
      %1394 = vmatpush.msra.mxu0 %v1226
      %1395 = vmatpush.msra.mxu0 %v1222
      %1396 = vmatpush.msra.mxu0 %v1218
      %1397 = vmatpush.msra.mxu0 %v1214
      %1398 = vmatpush.msra.mxu0 %v1210
      %1399 = vmatmul.f32.gmra.mxu0 %v1297
      %v1400 = vpop.f32.mrf.mxu0
      %v1401 = vadd.f32 %v1378, %v1400
      %1402 = vmatmul.f32.gmra.mxu0 %v1305
      %v1403 = vpop.f32.mrf.mxu0
      %v1404 = vadd.f32 %v1381, %v1403
      %1405 = vdwg.mxu0
      %1406 = vmatpush.msra.mxu0 %v1079
      %1407 = vmatpush.msra.mxu0 %v1075
      %1408 = vmatpush.msra.mxu0 %v1071
      %1409 = vmatpush.msra.mxu0 %v1067
      %1410 = vmatpush.msra.mxu0 %v1063
      %1411 = vmatpush.msra.mxu0 %v1059
      %1412 = vmatpush.msra.mxu0 %v1055
      %1413 = vmatpush.msra.mxu0 %v1051
      %1414 = vmatpush.msra.mxu0 %v1047
      %1415 = vmatpush.msra.mxu0 %v1043
      %1416 = vmatpush.msra.mxu0 %v1039
      %1417 = vmatpush.msra.mxu0 %v1035
      %1418 = vmatpush.msra.mxu0 %v1031
      %1419 = vmatpush.msra.mxu0 %v1027
      %1420 = vmatpush.msra.mxu0 %v1023
      %1421 = vmatpush.msra.mxu0 %v1019
      %1422 = vmatmul.f32.gmra.mxu0 %v1288
      %v1423 = vpop.f32.mrf.mxu0
      %v1424 = vadd.f32 0.0, %v1423
      %1425 = vmatmul.f32.gmra.mxu0 %v1299
      %v1426 = vpop.f32.mrf.mxu0
      %v1427 = vadd.f32 0.0, %v1426
      %1428 = vdwg.mxu0
      %1429 = vmatpush.msra.mxu0 %v1143
      %1430 = vmatpush.msra.mxu0 %v1139
      %1431 = vmatpush.msra.mxu0 %v1135
      %1432 = vmatpush.msra.mxu0 %v1131
      %1433 = vmatpush.msra.mxu0 %v1127
      %1434 = vmatpush.msra.mxu0 %v1123
      %1435 = vmatpush.msra.mxu0 %v1119
      %1436 = vmatpush.msra.mxu0 %v1115
      %1437 = vmatpush.msra.mxu0 %v1111
      %1438 = vmatpush.msra.mxu0 %v1107
      %1439 = vmatpush.msra.mxu0 %v1103
      %1440 = vmatpush.msra.mxu0 %v1099
      %1441 = vmatpush.msra.mxu0 %v1095
      %1442 = vmatpush.msra.mxu0 %v1091
      %1443 = vmatpush.msra.mxu0 %v1087
      %1444 = vmatpush.msra.mxu0 %v1083
      %1445 = vmatmul.f32.gmra.mxu0 %v1291
      %v1446 = vpop.f32.mrf.mxu0
      %v1447 = vadd.f32 %v1424, %v1446
      %1448 = vmatmul.f32.gmra.mxu0 %v1301
      %v1449 = vpop.f32.mrf.mxu0
      %v1450 = vadd.f32 %v1427, %v1449
      %1451 = vdwg.mxu0
      %1452 = vmatpush.msra.mxu0 %v1207
      %1453 = vmatpush.msra.mxu0 %v1203
      %1454 = vmatpush.msra.mxu0 %v1199
      %1455 = vmatpush.msra.mxu0 %v1195
      %1456 = vmatpush.msra.mxu0 %v1191
      %1457 = vmatpush.msra.mxu0 %v1187
      %1458 = vmatpush.msra.mxu0 %v1183
      %1459 = vmatpush.msra.mxu0 %v1179
      %1460 = vmatpush.msra.mxu0 %v1175
      %1461 = vmatpush.msra.mxu0 %v1171
      %1462 = vmatpush.msra.mxu0 %v1167
      %1463 = vmatpush.msra.mxu0 %v1163
      %1464 = vmatpush.msra.mxu0 %v1159
      %1465 = vmatpush.msra.mxu0 %v1155
      %1466 = vmatpush.msra.mxu0 %v1151
      %1467 = vmatpush.msra.mxu0 %v1147
      %1468 = vmatmul.f32.gmra.mxu0 %v1294
      %v1469 = vpop.f32.mrf.mxu0
      %v1470 = vadd.f32 %v1447, %v1469
      %1471 = vmatmul.f32.gmra.mxu0 %v1303
      %v1472 = vpop.f32.mrf.mxu0
      %v1473 = vadd.f32 %v1450, %v1472
      %1474 = vdwg.mxu0
      %1475 = vmatpush.msra.mxu0 %v1271
      %1476 = vmatpush.msra.mxu0 %v1267
      %1477 = vmatpush.msra.mxu0 %v1263
      %1478 = vmatpush.msra.mxu0 %v1259
      %1479 = vmatpush.msra.mxu0 %v1255
      %1480 = vmatpush.msra.mxu0 %v1251
      %1481 = vmatpush.msra.mxu0 %v1247
      %1482 = vmatpush.msra.mxu0 %v1243
      %1483 = vmatpush.msra.mxu0 %v1239
      %1484 = vmatpush.msra.mxu0 %v1235
      %1485 = vmatpush.msra.mxu0 %v1231
      %1486 = vmatpush.msra.mxu0 %v1227
      %1487 = vmatpush.msra.mxu0 %v1223
      %1488 = vmatpush.msra.mxu0 %v1219
      %1489 = vmatpush.msra.mxu0 %v1215
      %1490 = vmatpush.msra.mxu0 %v1211
      %1491 = vmatmul.f32.gmra.mxu0 %v1297
      %v1492 = vpop.f32.mrf.mxu0
      %v1493 = vadd.f32 %v1470, %v1492
      %1494 = vmatmul.f32.gmra.mxu0 %v1305
      %v1495 = vpop.f32.mrf.mxu0
      %v1496 = vadd.f32 %v1473, %v1495
      %1497 = vdwg.mxu0
      %1498 = vmatpush.msra.mxu0 %v1080
      %1499 = vmatpush.msra.mxu0 %v1076
      %1500 = vmatpush.msra.mxu0 %v1072
      %1501 = vmatpush.msra.mxu0 %v1068
      %1502 = vmatpush.msra.mxu0 %v1064
      %1503 = vmatpush.msra.mxu0 %v1060
      %1504 = vmatpush.msra.mxu0 %v1056
      %1505 = vmatpush.msra.mxu0 %v1052
      %1506 = vmatpush.msra.mxu0 %v1048
      %1507 = vmatpush.msra.mxu0 %v1044
      %1508 = vmatpush.msra.mxu0 %v1040
      %1509 = vmatpush.msra.mxu0 %v1036
      %1510 = vmatpush.msra.mxu0 %v1032
      %1511 = vmatpush.msra.mxu0 %v1028
      %1512 = vmatpush.msra.mxu0 %v1024
      %1513 = vmatpush.msra.mxu0 %v1020
      %1514 = vmatmul.f32.gmra.mxu0 %v1288
      %v1515 = vpop.f32.mrf.mxu0
      %v1516 = vadd.f32 0.0, %v1515
      %1517 = vmatmul.f32.gmra.mxu0 %v1299
      %v1518 = vpop.f32.mrf.mxu0
      %v1519 = vadd.f32 0.0, %v1518
      %1520 = vdwg.mxu0
      %1521 = vmatpush.msra.mxu0 %v1144
      %1522 = vmatpush.msra.mxu0 %v1140
      %1523 = vmatpush.msra.mxu0 %v1136
      %1524 = vmatpush.msra.mxu0 %v1132
      %1525 = vmatpush.msra.mxu0 %v1128
      %1526 = vmatpush.msra.mxu0 %v1124
      %1527 = vmatpush.msra.mxu0 %v1120
      %1528 = vmatpush.msra.mxu0 %v1116
      %1529 = vmatpush.msra.mxu0 %v1112
      %1530 = vmatpush.msra.mxu0 %v1108
      %1531 = vmatpush.msra.mxu0 %v1104
      %1532 = vmatpush.msra.mxu0 %v1100
      %1533 = vmatpush.msra.mxu0 %v1096
      %1534 = vmatpush.msra.mxu0 %v1092
      %1535 = vmatpush.msra.mxu0 %v1088
      %1536 = vmatpush.msra.mxu0 %v1084
      %1537 = vmatmul.f32.gmra.mxu0 %v1291
      %v1538 = vpop.f32.mrf.mxu0
      %v1539 = vadd.f32 %v1516, %v1538
      %1540 = vmatmul.f32.gmra.mxu0 %v1301
      %v1541 = vpop.f32.mrf.mxu0
      %v1542 = vadd.f32 %v1519, %v1541
      %1543 = vdwg.mxu0
      %1544 = vmatpush.msra.mxu0 %v1208
      %1545 = vmatpush.msra.mxu0 %v1204
      %1546 = vmatpush.msra.mxu0 %v1200
      %1547 = vmatpush.msra.mxu0 %v1196
      %1548 = vmatpush.msra.mxu0 %v1192
      %1549 = vmatpush.msra.mxu0 %v1188
      %1550 = vmatpush.msra.mxu0 %v1184
      %1551 = vmatpush.msra.mxu0 %v1180
      %1552 = vmatpush.msra.mxu0 %v1176
      %1553 = vmatpush.msra.mxu0 %v1172
      %1554 = vmatpush.msra.mxu0 %v1168
      %1555 = vmatpush.msra.mxu0 %v1164
      %1556 = vmatpush.msra.mxu0 %v1160
      %1557 = vmatpush.msra.mxu0 %v1156
      %1558 = vmatpush.msra.mxu0 %v1152
      %1559 = vmatpush.msra.mxu0 %v1148
      %1560 = vmatmul.f32.gmra.mxu0 %v1294
      %v1561 = vpop.f32.mrf.mxu0
      %v1562 = vadd.f32 %v1539, %v1561
      %1563 = vmatmul.f32.gmra.mxu0 %v1303
      %v1564 = vpop.f32.mrf.mxu0
      %v1565 = vadd.f32 %v1542, %v1564
      %1566 = vdwg.mxu0
      %1567 = vmatpush.msra.mxu0 %v1272
      %1568 = vmatpush.msra.mxu0 %v1268
      %1569 = vmatpush.msra.mxu0 %v1264
      %1570 = vmatpush.msra.mxu0 %v1260
      %1571 = vmatpush.msra.mxu0 %v1256
      %1572 = vmatpush.msra.mxu0 %v1252
      %1573 = vmatpush.msra.mxu0 %v1248
      %1574 = vmatpush.msra.mxu0 %v1244
      %1575 = vmatpush.msra.mxu0 %v1240
      %1576 = vmatpush.msra.mxu0 %v1236
      %1577 = vmatpush.msra.mxu0 %v1232
      %1578 = vmatpush.msra.mxu0 %v1228
      %1579 = vmatpush.msra.mxu0 %v1224
      %1580 = vmatpush.msra.mxu0 %v1220
      %1581 = vmatpush.msra.mxu0 %v1216
      %1582 = vmatpush.msra.mxu0 %v1212
      %1583 = vmatmul.f32.gmra.mxu0 %v1297
      %v1584 = vpop.f32.mrf.mxu0
      %v1585 = vadd.f32 %v1562, %v1584
      %1586 = vmatmul.f32.gmra.mxu0 %v1305
      %v1587 = vpop.f32.mrf.mxu0
      %v1588 = vadd.f32 %v1565, %v1587
      %1589 = vdwg.mxu0
      %1590 = vmatpush.msra.mxu0 %v1081
      %1591 = vmatpush.msra.mxu0 %v1077
      %1592 = vmatpush.msra.mxu0 %v1073
      %1593 = vmatpush.msra.mxu0 %v1069
      %1594 = vmatpush.msra.mxu0 %v1065
      %1595 = vmatpush.msra.mxu0 %v1061
      %1596 = vmatpush.msra.mxu0 %v1057
      %1597 = vmatpush.msra.mxu0 %v1053
      %1598 = vmatpush.msra.mxu0 %v1049
      %1599 = vmatpush.msra.mxu0 %v1045
      %1600 = vmatpush.msra.mxu0 %v1041
      %1601 = vmatpush.msra.mxu0 %v1037
      %1602 = vmatpush.msra.mxu0 %v1033
      %1603 = vmatpush.msra.mxu0 %v1029
      %1604 = vmatpush.msra.mxu0 %v1025
      %1605 = vmatpush.msra.mxu0 %v1021
      %1606 = vmatmul.f32.gmra.mxu0 %v1288
      %v1607 = vpop.f32.mrf.mxu0
      %v1608 = vadd.f32 0.0, %v1607
      %1609 = vmatmul.f32.gmra.mxu0 %v1299
      %v1610 = vpop.f32.mrf.mxu0
      %v1611 = vadd.f32 0.0, %v1610
      %1612 = vdwg.mxu0
      %1613 = vmatpush.msra.mxu0 %v1145
      %1614 = vmatpush.msra.mxu0 %v1141
      %1615 = vmatpush.msra.mxu0 %v1137
      %1616 = vmatpush.msra.mxu0 %v1133
      %1617 = vmatpush.msra.mxu0 %v1129
      %1618 = vmatpush.msra.mxu0 %v1125
      %1619 = vmatpush.msra.mxu0 %v1121
      %1620 = vmatpush.msra.mxu0 %v1117
      %1621 = vmatpush.msra.mxu0 %v1113
      %1622 = vmatpush.msra.mxu0 %v1109
      %1623 = vmatpush.msra.mxu0 %v1105
      %1624 = vmatpush.msra.mxu0 %v1101
      %1625 = vmatpush.msra.mxu0 %v1097
      %1626 = vmatpush.msra.mxu0 %v1093
      %1627 = vmatpush.msra.mxu0 %v1089
      %1628 = vmatpush.msra.mxu0 %v1085
      %1629 = vmatmul.f32.gmra.mxu0 %v1291
      %v1630 = vpop.f32.mrf.mxu0
      %v1631 = vadd.f32 %v1608, %v1630
      %1632 = vmatmul.f32.gmra.mxu0 %v1301
      %v1633 = vpop.f32.mrf.mxu0
      %v1634 = vadd.f32 %v1611, %v1633
      %1635 = vdwg.mxu0
      %1636 = vmatpush.msra.mxu0 %v1209
      %1637 = vmatpush.msra.mxu0 %v1205
      %1638 = vmatpush.msra.mxu0 %v1201
      %1639 = vmatpush.msra.mxu0 %v1197
      %1640 = vmatpush.msra.mxu0 %v1193
      %1641 = vmatpush.msra.mxu0 %v1189
      %1642 = vmatpush.msra.mxu0 %v1185
      %1643 = vmatpush.msra.mxu0 %v1181
      %1644 = vmatpush.msra.mxu0 %v1177
      %1645 = vmatpush.msra.mxu0 %v1173
      %1646 = vmatpush.msra.mxu0 %v1169
      %1647 = vmatpush.msra.mxu0 %v1165
      %1648 = vmatpush.msra.mxu0 %v1161
      %1649 = vmatpush.msra.mxu0 %v1157
      %1650 = vmatpush.msra.mxu0 %v1153
      %1651 = vmatpush.msra.mxu0 %v1149
      %1652 = vmatmul.f32.gmra.mxu0 %v1294
      %v1653 = vpop.f32.mrf.mxu0
      %v1654 = vadd.f32 %v1631, %v1653
      %1655 = vmatmul.f32.gmra.mxu0 %v1303
      %v1656 = vpop.f32.mrf.mxu0
      %v1657 = vadd.f32 %v1634, %v1656
      %1658 = vdwg.mxu0
      %1659 = vmatpush.msra.mxu0 %v1273
      %1660 = vmatpush.msra.mxu0 %v1269
      %1661 = vmatpush.msra.mxu0 %v1265
      %1662 = vmatpush.msra.mxu0 %v1261
      %1663 = vmatpush.msra.mxu0 %v1257
      %1664 = vmatpush.msra.mxu0 %v1253
      %1665 = vmatpush.msra.mxu0 %v1249
      %1666 = vmatpush.msra.mxu0 %v1245
      %1667 = vmatpush.msra.mxu0 %v1241
      %1668 = vmatpush.msra.mxu0 %v1237
      %1669 = vmatpush.msra.mxu0 %v1233
      %1670 = vmatpush.msra.mxu0 %v1229
      %1671 = vmatpush.msra.mxu0 %v1225
      %1672 = vmatpush.msra.mxu0 %v1221
      %1673 = vmatpush.msra.mxu0 %v1217
      %1674 = vmatpush.msra.mxu0 %v1213
      %1675 = vmatmul.f32.gmra.mxu0 %v1297
      %v1676 = vpop.f32.mrf.mxu0
      %v1677 = vadd.f32 %v1654, %v1676
      %1678 = vmatmul.f32.gmra.mxu0 %v1305
      %v1679 = vpop.f32.mrf.mxu0
      %v1680 = vadd.f32 %v1657, %v1679
      %1681 = vdwg.mxu0
      %1682 = vmatpush.msra.mxu0 %v822
      %1683 = vmatpush.msra.mxu0 %v818
      %1684 = vmatpush.msra.mxu0 %v814
      %1685 = vmatpush.msra.mxu0 %v810
      %1686 = vmatpush.msra.mxu0 %v806
      %1687 = vmatpush.msra.mxu0 %v802
      %1688 = vmatpush.msra.mxu0 %v798
      %1689 = vmatpush.msra.mxu0 %v794
      %1690 = vmatpush.msra.mxu0 %v790
      %1691 = vmatpush.msra.mxu0 %v786
      %1692 = vmatpush.msra.mxu0 %v782
      %1693 = vmatpush.msra.mxu0 %v778
      %1694 = vmatpush.msra.mxu0 %v774
      %1695 = vmatpush.msra.mxu0 %v770
      %1696 = vmatpush.msra.mxu0 %v766
      %1697 = vmatpush.msra.mxu0 %v762
      %1698 = vmatmul.f32.gmra.mxu0 %v750
      %v1699 = vpop.f32.mrf.mxu0
      %v1700 = vadd.f32 %v1401, %v1699
      %1701 = vmatmul.f32.gmra.mxu0 %v754
      %v1702 = vpop.f32.mrf.mxu0
      %v1703 = vadd.f32 %v1404, %v1702
      %1704 = vdwg.mxu0
      %1705 = vmatpush.msra.mxu0 %v886
      %1706 = vmatpush.msra.mxu0 %v882
      %1707 = vmatpush.msra.mxu0 %v878
      %1708 = vmatpush.msra.mxu0 %v874
      %1709 = vmatpush.msra.mxu0 %v870
      %1710 = vmatpush.msra.mxu0 %v866
      %1711 = vmatpush.msra.mxu0 %v862
      %1712 = vmatpush.msra.mxu0 %v858
      %1713 = vmatpush.msra.mxu0 %v854
      %1714 = vmatpush.msra.mxu0 %v850
      %1715 = vmatpush.msra.mxu0 %v846
      %1716 = vmatpush.msra.mxu0 %v842
      %1717 = vmatpush.msra.mxu0 %v838
      %1718 = vmatpush.msra.mxu0 %v834
      %1719 = vmatpush.msra.mxu0 %v830
      %1720 = vmatpush.msra.mxu0 %v826
      %1721 = vmatmul.f32.gmra.mxu0 %v751
      %v1722 = vpop.f32.mrf.mxu0
      %v1723 = vadd.f32 %v1700, %v1722
      %1724 = vmatmul.f32.gmra.mxu0 %v755
      %v1725 = vpop.f32.mrf.mxu0
      %v1726 = vadd.f32 %v1703, %v1725
      %1727 = vdwg.mxu0
      %1728 = vmatpush.msra.mxu0 %v950
      %1729 = vmatpush.msra.mxu0 %v946
      %1730 = vmatpush.msra.mxu0 %v942
      %1731 = vmatpush.msra.mxu0 %v938
      %1732 = vmatpush.msra.mxu0 %v934
      %1733 = vmatpush.msra.mxu0 %v930
      %1734 = vmatpush.msra.mxu0 %v926
      %1735 = vmatpush.msra.mxu0 %v922
      %1736 = vmatpush.msra.mxu0 %v918
      %1737 = vmatpush.msra.mxu0 %v914
      %1738 = vmatpush.msra.mxu0 %v910
      %1739 = vmatpush.msra.mxu0 %v906
      %1740 = vmatpush.msra.mxu0 %v902
      %1741 = vmatpush.msra.mxu0 %v898
      %1742 = vmatpush.msra.mxu0 %v894
      %1743 = vmatpush.msra.mxu0 %v890
      %1744 = vmatmul.f32.gmra.mxu0 %v752
      %v1745 = vpop.f32.mrf.mxu0
      %v1746 = vadd.f32 %v1723, %v1745
      %1747 = vmatmul.f32.gmra.mxu0 %v756
      %v1748 = vpop.f32.mrf.mxu0
      %v1749 = vadd.f32 %v1726, %v1748
      %1750 = vdwg.mxu0
      %1751 = vmatpush.msra.mxu0 %v1014
      %1752 = vmatpush.msra.mxu0 %v1010
      %1753 = vmatpush.msra.mxu0 %v1006
      %1754 = vmatpush.msra.mxu0 %v1002
      %1755 = vmatpush.msra.mxu0 %v998
      %1756 = vmatpush.msra.mxu0 %v994
      %1757 = vmatpush.msra.mxu0 %v990
      %1758 = vmatpush.msra.mxu0 %v986
      %1759 = vmatpush.msra.mxu0 %v982
      %1760 = vmatpush.msra.mxu0 %v978
      %1761 = vmatpush.msra.mxu0 %v974
      %1762 = vmatpush.msra.mxu0 %v970
      %1763 = vmatpush.msra.mxu0 %v966
      %1764 = vmatpush.msra.mxu0 %v962
      %1765 = vmatpush.msra.mxu0 %v958
      %1766 = vmatpush.msra.mxu0 %v954
      %1767 = vmatmul.f32.gmra.mxu0 %v753
      %v1768 = vpop.f32.mrf.mxu0
      %v1769 = vadd.f32 %v1746, %v1768
      %1770 = vmatmul.f32.gmra.mxu0 %v757
      %v1771 = vpop.f32.mrf.mxu0
      %v1772 = vadd.f32 %v1749, %v1771
      %1773 = vdwg.mxu0
      %1774 = vmatpush.msra.mxu0 %v823
      %1775 = vmatpush.msra.mxu0 %v819
      %1776 = vmatpush.msra.mxu0 %v815
      %1777 = vmatpush.msra.mxu0 %v811
      %1778 = vmatpush.msra.mxu0 %v807
      %1779 = vmatpush.msra.mxu0 %v803
      %1780 = vmatpush.msra.mxu0 %v799
      %1781 = vmatpush.msra.mxu0 %v795
      %1782 = vmatpush.msra.mxu0 %v791
      %1783 = vmatpush.msra.mxu0 %v787
      %1784 = vmatpush.msra.mxu0 %v783
      %1785 = vmatpush.msra.mxu0 %v779
      %1786 = vmatpush.msra.mxu0 %v775
      %1787 = vmatpush.msra.mxu0 %v771
      %1788 = vmatpush.msra.mxu0 %v767
      %1789 = vmatpush.msra.mxu0 %v763
      %1790 = vmatmul.f32.gmra.mxu0 %v750
      %v1791 = vpop.f32.mrf.mxu0
      %v1792 = vadd.f32 %v1493, %v1791
      %1793 = vmatmul.f32.gmra.mxu0 %v754
      %v1794 = vpop.f32.mrf.mxu0
      %v1795 = vadd.f32 %v1496, %v1794
      %1796 = vdwg.mxu0
      %1797 = vmatpush.msra.mxu0 %v887
      %1798 = vmatpush.msra.mxu0 %v883
      %1799 = vmatpush.msra.mxu0 %v879
      %1800 = vmatpush.msra.mxu0 %v875
      %1801 = vmatpush.msra.mxu0 %v871
      %1802 = vmatpush.msra.mxu0 %v867
      %1803 = vmatpush.msra.mxu0 %v863
      %1804 = vmatpush.msra.mxu0 %v859
      %1805 = vmatpush.msra.mxu0 %v855
      %1806 = vmatpush.msra.mxu0 %v851
      %1807 = vmatpush.msra.mxu0 %v847
      %1808 = vmatpush.msra.mxu0 %v843
      %1809 = vmatpush.msra.mxu0 %v839
      %1810 = vmatpush.msra.mxu0 %v835
      %1811 = vmatpush.msra.mxu0 %v831
      %1812 = vmatpush.msra.mxu0 %v827
      %1813 = vmatmul.f32.gmra.mxu0 %v751
      %v1814 = vpop.f32.mrf.mxu0
      %v1815 = vadd.f32 %v1792, %v1814
      %1816 = vmatmul.f32.gmra.mxu0 %v755
      %v1817 = vpop.f32.mrf.mxu0
      %v1818 = vadd.f32 %v1795, %v1817
      %1819 = vdwg.mxu0
      %1820 = vmatpush.msra.mxu0 %v951
      %1821 = vmatpush.msra.mxu0 %v947
      %1822 = vmatpush.msra.mxu0 %v943
      %1823 = vmatpush.msra.mxu0 %v939
      %1824 = vmatpush.msra.mxu0 %v935
      %1825 = vmatpush.msra.mxu0 %v931
      %1826 = vmatpush.msra.mxu0 %v927
      %1827 = vmatpush.msra.mxu0 %v923
      %1828 = vmatpush.msra.mxu0 %v919
      %1829 = vmatpush.msra.mxu0 %v915
      %1830 = vmatpush.msra.mxu0 %v911
      %1831 = vmatpush.msra.mxu0 %v907
      %1832 = vmatpush.msra.mxu0 %v903
      %1833 = vmatpush.msra.mxu0 %v899
      %1834 = vmatpush.msra.mxu0 %v895
      %1835 = vmatpush.msra.mxu0 %v891
      %1836 = vmatmul.f32.gmra.mxu0 %v752
      %v1837 = vpop.f32.mrf.mxu0
      %v1838 = vadd.f32 %v1815, %v1837
      %1839 = vmatmul.f32.gmra.mxu0 %v756
      %v1840 = vpop.f32.mrf.mxu0
      %v1841 = vadd.f32 %v1818, %v1840
      %1842 = vdwg.mxu0
      %1843 = vmatpush.msra.mxu0 %v1015
      %1844 = vmatpush.msra.mxu0 %v1011
      %1845 = vmatpush.msra.mxu0 %v1007
      %1846 = vmatpush.msra.mxu0 %v1003
      %1847 = vmatpush.msra.mxu0 %v999
      %1848 = vmatpush.msra.mxu0 %v995
      %1849 = vmatpush.msra.mxu0 %v991
      %1850 = vmatpush.msra.mxu0 %v987
      %1851 = vmatpush.msra.mxu0 %v983
      %1852 = vmatpush.msra.mxu0 %v979
      %1853 = vmatpush.msra.mxu0 %v975
      %1854 = vmatpush.msra.mxu0 %v971
      %1855 = vmatpush.msra.mxu0 %v967
      %1856 = vmatpush.msra.mxu0 %v963
      %1857 = vmatpush.msra.mxu0 %v959
      %1858 = vmatpush.msra.mxu0 %v955
      %1859 = vmatmul.f32.gmra.mxu0 %v753
      %v1860 = vpop.f32.mrf.mxu0
      %v1861 = vadd.f32 %v1838, %v1860
      %1862 = vmatmul.f32.gmra.mxu0 %v757
      %v1863 = vpop.f32.mrf.mxu0
      %v1864 = vadd.f32 %v1841, %v1863
      %1865 = vdwg.mxu0
      %1866 = vmatpush.msra.mxu0 %v824
      %1867 = vmatpush.msra.mxu0 %v820
      %1868 = vmatpush.msra.mxu0 %v816
      %1869 = vmatpush.msra.mxu0 %v812
      %1870 = vmatpush.msra.mxu0 %v808
      %1871 = vmatpush.msra.mxu0 %v804
      %1872 = vmatpush.msra.mxu0 %v800
      %1873 = vmatpush.msra.mxu0 %v796
      %1874 = vmatpush.msra.mxu0 %v792
      %1875 = vmatpush.msra.mxu0 %v788
      %1876 = vmatpush.msra.mxu0 %v784
      %1877 = vmatpush.msra.mxu0 %v780
      %1878 = vmatpush.msra.mxu0 %v776
      %1879 = vmatpush.msra.mxu0 %v772
      %1880 = vmatpush.msra.mxu0 %v768
      %1881 = vmatpush.msra.mxu0 %v764
      %1882 = vmatmul.f32.gmra.mxu0 %v750
      %v1883 = vpop.f32.mrf.mxu0
      %v1884 = vadd.f32 %v1585, %v1883
      %1885 = vmatmul.f32.gmra.mxu0 %v754
      %v1886 = vpop.f32.mrf.mxu0
      %v1887 = vadd.f32 %v1588, %v1886
      %1888 = vdwg.mxu0
      %1889 = vmatpush.msra.mxu0 %v888
      %1890 = vmatpush.msra.mxu0 %v884
      %1891 = vmatpush.msra.mxu0 %v880
      %1892 = vmatpush.msra.mxu0 %v876
      %1893 = vmatpush.msra.mxu0 %v872
      %1894 = vmatpush.msra.mxu0 %v868
      %1895 = vmatpush.msra.mxu0 %v864
      %1896 = vmatpush.msra.mxu0 %v860
      %1897 = vmatpush.msra.mxu0 %v856
      %1898 = vmatpush.msra.mxu0 %v852
      %1899 = vmatpush.msra.mxu0 %v848
      %1900 = vmatpush.msra.mxu0 %v844
      %1901 = vmatpush.msra.mxu0 %v840
      %1902 = vmatpush.msra.mxu0 %v836
      %1903 = vmatpush.msra.mxu0 %v832
      %1904 = vmatpush.msra.mxu0 %v828
      %1905 = vmatmul.f32.gmra.mxu0 %v751
      %v1906 = vpop.f32.mrf.mxu0
      %v1907 = vadd.f32 %v1884, %v1906
      %1908 = vmatmul.f32.gmra.mxu0 %v755
      %v1909 = vpop.f32.mrf.mxu0
      %v1910 = vadd.f32 %v1887, %v1909
      %1911 = vdwg.mxu0
      %1912 = vmatpush.msra.mxu0 %v952
      %1913 = vmatpush.msra.mxu0 %v948
      %1914 = vmatpush.msra.mxu0 %v944
      %1915 = vmatpush.msra.mxu0 %v940
      %1916 = vmatpush.msra.mxu0 %v936
      %1917 = vmatpush.msra.mxu0 %v932
      %1918 = vmatpush.msra.mxu0 %v928
      %1919 = vmatpush.msra.mxu0 %v924
      %1920 = vmatpush.msra.mxu0 %v920
      %1921 = vmatpush.msra.mxu0 %v916
      %1922 = vmatpush.msra.mxu0 %v912
      %1923 = vmatpush.msra.mxu0 %v908
      %1924 = vmatpush.msra.mxu0 %v904
      %1925 = vmatpush.msra.mxu0 %v900
      %1926 = vmatpush.msra.mxu0 %v896
      %1927 = vmatpush.msra.mxu0 %v892
      %1928 = vmatmul.f32.gmra.mxu0 %v752
      %v1929 = vpop.f32.mrf.mxu0
      %v1930 = vadd.f32 %v1907, %v1929
      %1931 = vmatmul.f32.gmra.mxu0 %v756
      %v1932 = vpop.f32.mrf.mxu0
      %v1933 = vadd.f32 %v1910, %v1932
      %1934 = vdwg.mxu0
      %1935 = vmatpush.msra.mxu0 %v1016
      %1936 = vmatpush.msra.mxu0 %v1012
      %1937 = vmatpush.msra.mxu0 %v1008
      %1938 = vmatpush.msra.mxu0 %v1004
      %1939 = vmatpush.msra.mxu0 %v1000
      %1940 = vmatpush.msra.mxu0 %v996
      %1941 = vmatpush.msra.mxu0 %v992
      %1942 = vmatpush.msra.mxu0 %v988
      %1943 = vmatpush.msra.mxu0 %v984
      %1944 = vmatpush.msra.mxu0 %v980
      %1945 = vmatpush.msra.mxu0 %v976
      %1946 = vmatpush.msra.mxu0 %v972
      %1947 = vmatpush.msra.mxu0 %v968
      %1948 = vmatpush.msra.mxu0 %v964
      %1949 = vmatpush.msra.mxu0 %v960
      %1950 = vmatpush.msra.mxu0 %v956
      %1951 = vmatmul.f32.gmra.mxu0 %v753
      %v1952 = vpop.f32.mrf.mxu0
      %v1953 = vadd.f32 %v1930, %v1952
      %1954 = vmatmul.f32.gmra.mxu0 %v757
      %v1955 = vpop.f32.mrf.mxu0
      %v1956 = vadd.f32 %v1933, %v1955
      %1957 = vdwg.mxu0
      %1958 = vmatpush.msra.mxu0 %v825
      %1959 = vmatpush.msra.mxu0 %v821
      %1960 = vmatpush.msra.mxu0 %v817
      %1961 = vmatpush.msra.mxu0 %v813
      %1962 = vmatpush.msra.mxu0 %v809
      %1963 = vmatpush.msra.mxu0 %v805
      %1964 = vmatpush.msra.mxu0 %v801
      %1965 = vmatpush.msra.mxu0 %v797
      %1966 = vmatpush.msra.mxu0 %v793
      %1967 = vmatpush.msra.mxu0 %v789
      %1968 = vmatpush.msra.mxu0 %v785
      %1969 = vmatpush.msra.mxu0 %v781
      %1970 = vmatpush.msra.mxu0 %v777
      %1971 = vmatpush.msra.mxu0 %v773
      %1972 = vmatpush.msra.mxu0 %v769
      %1973 = vmatpush.msra.mxu0 %v765
      %1974 = vmatmul.f32.gmra.mxu0 %v750
      %v1975 = vpop.f32.mrf.mxu0
      %v1976 = vadd.f32 %v1677, %v1975
      %1977 = vmatmul.f32.gmra.mxu0 %v754
      %v1978 = vpop.f32.mrf.mxu0
      %v1979 = vadd.f32 %v1680, %v1978
      %1980 = vdwg.mxu0
      %1981 = vmatpush.msra.mxu0 %v889
      %1982 = vmatpush.msra.mxu0 %v885
      %1983 = vmatpush.msra.mxu0 %v881
      %1984 = vmatpush.msra.mxu0 %v877
      %1985 = vmatpush.msra.mxu0 %v873
      %1986 = vmatpush.msra.mxu0 %v869
      %1987 = vmatpush.msra.mxu0 %v865
      %1988 = vmatpush.msra.mxu0 %v861
      %1989 = vmatpush.msra.mxu0 %v857
      %1990 = vmatpush.msra.mxu0 %v853
      %1991 = vmatpush.msra.mxu0 %v849
      %1992 = vmatpush.msra.mxu0 %v845
      %1993 = vmatpush.msra.mxu0 %v841
      %1994 = vmatpush.msra.mxu0 %v837
      %1995 = vmatpush.msra.mxu0 %v833
      %1996 = vmatpush.msra.mxu0 %v829
      %1997 = vmatmul.f32.gmra.mxu0 %v751
      %v1998 = vpop.f32.mrf.mxu0
      %v1999 = vadd.f32 %v1976, %v1998
      %2000 = vmatmul.f32.gmra.mxu0 %v755
      %v2001 = vpop.f32.mrf.mxu0
      %v2002 = vadd.f32 %v1979, %v2001
      %2003 = vdwg.mxu0
      %2004 = vmatpush.msra.mxu0 %v953
      %2005 = vmatpush.msra.mxu0 %v949
      %2006 = vmatpush.msra.mxu0 %v945
      %2007 = vmatpush.msra.mxu0 %v941
      %2008 = vmatpush.msra.mxu0 %v937
      %2009 = vmatpush.msra.mxu0 %v933
      %2010 = vmatpush.msra.mxu0 %v929
      %2011 = vmatpush.msra.mxu0 %v925
      %2012 = vmatpush.msra.mxu0 %v921
      %2013 = vmatpush.msra.mxu0 %v917
      %2014 = vmatpush.msra.mxu0 %v913
      %2015 = vmatpush.msra.mxu0 %v909
      %2016 = vmatpush.msra.mxu0 %v905
      %2017 = vmatpush.msra.mxu0 %v901
      %2018 = vmatpush.msra.mxu0 %v897
      %2019 = vmatpush.msra.mxu0 %v893
      %2020 = vmatmul.f32.gmra.mxu0 %v752
      %v2021 = vpop.f32.mrf.mxu0
      %v2022 = vadd.f32 %v1999, %v2021
      %2023 = vmatmul.f32.gmra.mxu0 %v756
      %v2024 = vpop.f32.mrf.mxu0
      %v2025 = vadd.f32 %v2002, %v2024
      %2026 = vdwg.mxu0
      %2027 = vmatpush.msra.mxu0 %v1017
      %2028 = vmatpush.msra.mxu0 %v1013
      %2029 = vmatpush.msra.mxu0 %v1009
      %2030 = vmatpush.msra.mxu0 %v1005
      %2031 = vmatpush.msra.mxu0 %v1001
      %2032 = vmatpush.msra.mxu0 %v997
      %2033 = vmatpush.msra.mxu0 %v993
      %2034 = vmatpush.msra.mxu0 %v989
      %2035 = vmatpush.msra.mxu0 %v985
      %2036 = vmatpush.msra.mxu0 %v981
      %2037 = vmatpush.msra.mxu0 %v977
      %2038 = vmatpush.msra.mxu0 %v973
      %2039 = vmatpush.msra.mxu0 %v969
      %2040 = vmatpush.msra.mxu0 %v965
      %2041 = vmatpush.msra.mxu0 %v961
      %2042 = vmatpush.msra.mxu0 %v957
      %2043 = vmatmul.f32.gmra.mxu0 %v753
      %v2044 = vpop.f32.mrf.mxu0
      %v2045 = vadd.f32 %v2022, %v2044
      %2046 = vmatmul.f32.gmra.mxu0 %v757
      %v2047 = vpop.f32.mrf.mxu0
      %v2048 = vadd.f32 %v2025, %v2047
      %2049 = vdwg.mxu0
      %v2050 = vld [vmem:[%s7] sm:$0xf]
      %v2052 = vperm.slane %v2050, 0
      %v2053 = vperm.slane %v2050, 1
      %v2054 = vperm.slane %v2050, 2
      %v2055 = vperm.slane %v2050, 3
      %v2060 = vadd.f32 %v1769, %v2052
      %v2061 = vadd.f32 %v1861, %v2053
      %v2062 = vadd.f32 %v1953, %v2054
      %v2063 = vadd.f32 %v2045, %v2055
      %v2064 = vadd.f32 %v1772, %v2052
      %v2065 = vadd.f32 %v1864, %v2053
      %v2066 = vadd.f32 %v1956, %v2054
      %v2067 = vadd.f32 %v2048, %v2055
      %v2068 = vmax.f32 %v2060, 0.0
      %v2069 = vmax.f32 %v2061, 0.0
      %v2070 = vmax.f32 %v2062, 0.0
      %v2071 = vmax.f32 %v2063, 0.0
      %v2072 = vmax.f32 %v2064, 0.0
      %v2073 = vmax.f32 %v2065, 0.0
      %v2074 = vmax.f32 %v2066, 0.0
      %v2075 = vmax.f32 %v2067, 0.0
      %2076 = vst [vmem:[%s388] sm:$0xff] %v2068
      %2077 = vst [vmem:[%s388 + $0x8] sm:$0xff] %v2069
      %2078 = vst [vmem:[%s388 + $0x10] sm:$0xff] %v2070
      %2079 = vst [vmem:[%s388 + $0x18] sm:$0xff] %v2071
      %2080 = vst [vmem:[%s388 + $0x20] sm:$0xff] %v2072
      %2081 = vst [vmem:[%s388 + $0x28] sm:$0xff] %v2073
      %2082 = vst [vmem:[%s388 + $0x30] sm:$0xff] %v2074
      %2083 = vst [vmem:[%s388 + $0x38] sm:$0xff] %v2075
      %s2084 = smul.u32 2, %s24
      %p2085 = scmp.lt.s32.totalorder %s23, 1
      %s2086 = scalar_select %p2085, %s23, 1
      %p2087 = scmp.lt.s32.totalorder %s2084, 1
      %s2088 = scalar_select %p2087, %s2084, 1
      %s2089 = smul.addr %s2088, 4
      %s2090 = smul.addr %s2086, 8
      %s2091 = sadd.s32 %s2089, %s2090
      %s2092 = smul.addr %s2091, 8
      %s2093 = scalar_lea.vmem %s8, %s2092
      // Predicated region
      $region53: #{encoder_forward.2} parent=51 // pred_check
        %p2094 = pneg %p235
      $region54: #{encoder_forward.2} parent=51 // pred_check_branch
        %2096 = sbr.rel (%p2094) target = $region56
      $region55: #{encoder_forward.2} parent=51 // pred_region
        %s2097 = smul.u32 2, %s24
      $region56: #{encoder_forward.2} parent=51 // pred_fallthru
        _
    $region52: #{encoder_forward.2} parent=5 // pred_fallthru
      _
    %p2098 = scmp.le.s32.totalorder 2, %s14
    // Predicated region
    $region57: #{encoder_forward.2} parent=5 // pred_check
      %p2099 = pneg %p2098
    $region58: #{encoder_forward.2} parent=5 // pred_check_branch
      %2101 = sbr.rel (%p2099) target = $region60
    $region59: #{encoder_forward.2} parent=5 // pred_region
      %s2102 = ssub.s32 %s14, 2
      // Predicated region
      $region61: #{encoder_forward.2} parent=59 // pred_check
        %p2103 = pneg %p241
      $region62: #{encoder_forward.2} parent=59 // pred_check_branch
        %2105 = sbr.rel (%p2103) target = $region64
      $region63: #{encoder_forward.2} parent=59 // pred_region
        %s2106 = smul.u32 2, %s26
        %p2107 = scmp.lt.s32.totalorder %s25, 1
        %s2108 = scalar_select %p2107, %s25, 1
        %p2109 = scmp.lt.s32.totalorder %s2106, 1
        %s2110 = scalar_select %p2109, %s2106, 1
        %s2111 = smul.addr %s2110, 4
        %s2112 = smul.addr %s2108, 8
        %s2113 = sadd.s32 %s2111, %s2112
        %s2114 = smul.addr %s2113, 8
        %s2115 = scalar_lea.vmem %s8, %s2114
      $region64: #{encoder_forward.2} parent=59 // pred_fallthru
        _
    $region60: #{encoder_forward.2} parent=5 // pred_fallthru
      _
  $region6: #{encoder_forward.2} parent=0 // loop_footer
    %s18 = sadd.s32 1, %s14
  $region7: #{encoder_forward.2} parent=0 // loop_footer_branch
    %13 = sbr.rel target = $region3
  $region8: #{encoder_forward.2} parent=0 // loop_exit
    _

// kernel: encoder_forward.3
$region0: #{encoder_forward.3}
  #allocation0 [shape = 'u32[]', space=smem, size = 0x4, offset = 0x4, fixed_abs, tag = 'smem constant byte address 0x4 - core index']
  #allocation1 [shape = 'u32[72,128]{1,0:T(1,128)}', space=vmem, size = 0x9000, scoped, tag = 'internal scratch']
  %s0 = inlined_call_operand.vmem [shape: f32[2,16,1536], index: 0, kind: input, shape index: {}, may-alias: {0,1}]
  %s1 = inlined_call_operand.vmem [shape: f32[2,16,1536], index: 1, kind: input, shape index: {}, may-alias: {0,1}]
  %s2 = inlined_call_operand.vmem [shape: f32[1536,128], index: 2, kind: input, shape index: {}]
  %s3 = inlined_call_operand.vmem [shape: f32[512,128], index: 3, kind: input, shape index: {}]
  %s4 = inlined_call_operand.vmem [shape: f32[1,128], index: 4, kind: input, shape index: {}]
  %s5 = inlined_call_operand.vmem [shape: f32[2,8,128], index: 5, kind: output, shape index: {}]
  %s6 = sld [smem:[#allocation0]]
  $region53: #{encoder_forward.3} parent=0
    _
  %s8 = ssub.s32 1, %s6
  %s9 = scalar_select 0, %s8, %s6
  loop: start=0, step=1, limit=4
  $region2: #{encoder_forward.3} parent=0 // loop_pre_header
    _
  $region3: #{encoder_forward.3} parent=0 // loop_header
    %s11 = sphi 0, %s15
    %p12 = scmp.ge.s32.totalorder %s11, 4
    %s18 = sphi 0, %s30
    %s19 = sphi 0, %s26
    %s20 = sphi 0, %s18
    %s21 = sphi 0, %s19
    %s22 = sphi 0, %s20
    %s23 = sphi 0, %s21
    %s35 = sphi 0, %s37
    %s38 = sphi 0, %s35
    %s39 = sphi 0, %s38
    %s55 = sphi 0, %s39
    %s65 = sphi 0, %s67
    %s68 = sphi 0, %s65
    %s69 = sphi 0, %s68
    %s85 = sphi 0, %s69
    %s89 = sphi 0, %s89
    %s91 = sphi 0, %s89
    %s92 = sphi 0, %s91
    %s106 = sphi 0, %s92
    %s110 = sphi 0, %s110
    %s112 = sphi 0, %s110
    %s113 = sphi 0, %s112
    %s127 = sphi 0, %s113
    %s131 = sphi 0, %s131
    %s133 = sphi 0, %s131
    %s134 = sphi 0, %s133
    %s148 = sphi 0, %s134
    %s156 = sphi 0, %s158
    %s159 = sphi 0, %s156
    %s160 = sphi 0, %s159
    %s176 = sphi 0, %s160
  $region4: #{encoder_forward.3} parent=0 // loop_header_branch
    %14 = sbr.rel (%p12) target = $region8
  $region5: #{encoder_forward.3} parent=0 // loop_body
    %s16 = ssub.s32 %s11, 1
    %s17 = ssub.s32 %s11, 2
    %s24 = sadd.s32 1, %s19
    %p25 = scmp.ge.s32.totalorder %s24, 1
    %s26 = scalar_select %p25, 0, %s24
    %s27 = sadd.s32 1, %s18
    %s28 = scalar_select %p25, %s27, %s18
    %p29 = scmp.ge.s32.totalorder %s28, 2
    %s30 = scalar_select %p29, 0, %s28
    %s31 = ssub.s32 %s18, %s30
    %s32 = ssub.s32 %s19, %s26
    %s33 = sor.u32 %s31, %s32
    %p34 = scmp.eq.s32.totalorder %s33, 0
    %s36 = sadd.s32 %s35, 1
    %s37 = scalar_select %p34, %s35, %s36
    %p40 = pneg %p34
    %p41 = scmp.eq.s32.totalorder %s11, 1
    %p42 = por %p40, %p41
    %p43 = scmp.ne.s32.totalorder %s35, %s38
    %p44 = scmp.eq.s32.totalorder %s11, 0
    %p45 = por %p43, %p44
    %p46 = scmp.ne.s32.totalorder %s35, %s38
    %p47 = scmp.eq.s32.totalorder %s16, 1
    %p48 = por %p46, %p47
    %p49 = scmp.ne.s32.totalorder %s38, %s39
    %p50 = scmp.eq.s32.totalorder %s16, 0
    %p51 = por %p49, %p50
    %p52 = scmp.ne.s32.totalorder %s38, %s39
    %p53 = scmp.eq.s32.totalorder %s17, 1
    %p54 = por %p52, %p53
    %p56 = scmp.ne.s32.totalorder %s39, %s55
    %p57 = scmp.eq.s32.totalorder %s17, 0
    %p58 = por %p56, %p57
    %s59 = sadd.s32 %s19, 1
    %s60 = sadd.s32 %s26, 1
    %s61 = ssub.s32 %s18, %s30
    %s62 = ssub.s32 %s59, %s60
    %s63 = sor.u32 %s61, %s62
    %p64 = scmp.eq.s32.totalorder %s63, 0
    %s66 = sadd.s32 %s65, 1
    %s67 = scalar_select %p64, %s65, %s66
    %p70 = pneg %p64
    %p71 = scmp.eq.s32.totalorder %s11, 1
    %p72 = por %p70, %p71
    %p73 = scmp.ne.s32.totalorder %s65, %s68
    %p74 = scmp.eq.s32.totalorder %s11, 0
    %p75 = por %p73, %p74
    %p76 = scmp.ne.s32.totalorder %s65, %s68
    %p77 = scmp.eq.s32.totalorder %s16, 1
    %p78 = por %p76, %p77
    %p79 = scmp.ne.s32.totalorder %s68, %s69
    %p80 = scmp.eq.s32.totalorder %s16, 0
    %p81 = por %p79, %p80
    %p82 = scmp.ne.s32.totalorder %s68, %s69
    %p83 = scmp.eq.s32.totalorder %s17, 1
    %p84 = por %p82, %p83
    %p86 = scmp.ne.s32.totalorder %s69, %s85
    %p87 = scmp.eq.s32.totalorder %s17, 0
    %p88 = por %p86, %p87
    %s90 = sadd.s32 %s89, 1
    %p93 = scmp.eq.s32.totalorder %s11, 1
    %p94 = scmp.ne.s32.totalorder %s89, %s91
    %p95 = scmp.eq.s32.totalorder %s11, 0
    %p96 = por %p94, %p95
    %p97 = scmp.ne.s32.totalorder %s89, %s91
    %p98 = scmp.eq.s32.totalorder %s16, 1
    %p99 = por %p97, %p98
    %p100 = scmp.ne.s32.totalorder %s91, %s92
    %p101 = scmp.eq.s32.totalorder %s16, 0
    %p102 = por %p100, %p101
    %p103 = scmp.ne.s32.totalorder %s91, %s92
    %p104 = scmp.eq.s32.totalorder %s17, 1
    %p105 = por %p103, %p104
    %p107 = scmp.ne.s32.totalorder %s92, %s106
    %p108 = scmp.eq.s32.totalorder %s17, 0
    %p109 = por %p107, %p108
    %s111 = sadd.s32 %s110, 1
    %p114 = scmp.eq.s32.totalorder %s11, 1
    %p115 = scmp.ne.s32.totalorder %s110, %s112
    %p116 = scmp.eq.s32.totalorder %s11, 0
    %p117 = por %p115, %p116
    %p118 = scmp.ne.s32.totalorder %s110, %s112
    %p119 = scmp.eq.s32.totalorder %s16, 1
    %p120 = por %p118, %p119
    %p121 = scmp.ne.s32.totalorder %s112, %s113
    %p122 = scmp.eq.s32.totalorder %s16, 0
    %p123 = por %p121, %p122
    %p124 = scmp.ne.s32.totalorder %s112, %s113
    %p125 = scmp.eq.s32.totalorder %s17, 1
    %p126 = por %p124, %p125
    %p128 = scmp.ne.s32.totalorder %s113, %s127
    %p129 = scmp.eq.s32.totalorder %s17, 0
    %p130 = por %p128, %p129
    %s132 = sadd.s32 %s131, 1
    %p135 = scmp.eq.s32.totalorder %s11, 1
    %p136 = scmp.ne.s32.totalorder %s131, %s133
    %p137 = scmp.eq.s32.totalorder %s11, 0
    %p138 = por %p136, %p137
    %p139 = scmp.ne.s32.totalorder %s131, %s133
    %p140 = scmp.eq.s32.totalorder %s16, 1
    %p141 = por %p139, %p140
    %p142 = scmp.ne.s32.totalorder %s133, %s134
    %p143 = scmp.eq.s32.totalorder %s16, 0
    %p144 = por %p142, %p143
    %p145 = scmp.ne.s32.totalorder %s133, %s134
    %p146 = scmp.eq.s32.totalorder %s17, 1
    %p147 = por %p145, %p146
    %p149 = scmp.ne.s32.totalorder %s134, %s148
    %p150 = scmp.eq.s32.totalorder %s17, 0
    %p151 = por %p149, %p150
    %s152 = ssub.s32 %s18, %s30
    %s153 = ssub.s32 %s19, %s26
    %s154 = sor.u32 %s152, %s153
    %p155 = scmp.eq.s32.totalorder %s154, 0
    %s157 = sadd.s32 %s156, 1
    %s158 = scalar_select %p155, %s156, %s157
    %p161 = pneg %p155
    %p162 = scmp.eq.s32.totalorder %s11, 1
    %p163 = por %p161, %p162
    %p164 = scmp.ne.s32.totalorder %s156, %s159
    %p165 = scmp.eq.s32.totalorder %s11, 0
    %p166 = por %p164, %p165
    %p167 = scmp.ne.s32.totalorder %s156, %s159
    %p168 = scmp.eq.s32.totalorder %s16, 1
    %p169 = por %p167, %p168
    %p170 = scmp.ne.s32.totalorder %s159, %s160
    %p171 = scmp.eq.s32.totalorder %s16, 0
    %p172 = por %p170, %p171
    %p173 = scmp.ne.s32.totalorder %s159, %s160
    %p174 = scmp.eq.s32.totalorder %s17, 1
    %p175 = por %p173, %p174
    %p177 = scmp.ne.s32.totalorder %s160, %s176
    %p178 = scmp.eq.s32.totalorder %s17, 0
    %p179 = por %p177, %p178
    %p180 = scmp.le.s32.totalorder 1, %s11
    %p181 = scmp.lt.s32.totalorder %s11, 3
    %p182 = pnand %p180, %p181
    %p183 = pneg %p182
    // Predicated region
    $region9: #{encoder_forward.3} parent=5 // pred_check
      _
    $region10: #{encoder_forward.3} parent=5 // pred_check_branch
      %185 = sbr.rel (%p182) target = $region12
    $region11: #{encoder_forward.3} parent=5 // pred_region
      %s186 = ssub.s32 %s11, 1
      // Predicated region
      $region13: #{encoder_forward.3} parent=11 // pred_check
        %p187 = pneg %p102
      $region14: #{encoder_forward.3} parent=11 // pred_check_branch
        %189 = sbr.rel (%p187) target = $region16
      $region15: #{encoder_forward.3} parent=11 // pred_region
        _
      $region16: #{encoder_forward.3} parent=11 // pred_fallthru
        _
      // Predicated region
      $region17: #{encoder_forward.3} parent=11 // pred_check
        %p190 = pneg %p123
      $region18: #{encoder_forward.3} parent=11 // pred_check_branch
        %192 = sbr.rel (%p190) target = $region20
      $region19: #{encoder_forward.3} parent=11 // pred_region
        _
      $region20: #{encoder_forward.3} parent=11 // pred_fallthru
        _
      // Predicated region
      $region21: #{encoder_forward.3} parent=11 // pred_check
        %p193 = pneg %p144
      $region22: #{encoder_forward.3} parent=11 // pred_check_branch
        %195 = sbr.rel (%p193) target = $region24
      $region23: #{encoder_forward.3} parent=11 // pred_region
        _
      $region24: #{encoder_forward.3} parent=11 // pred_fallthru
        _
    $region12: #{encoder_forward.3} parent=5 // pred_fallthru
      _
    %p196 = scmp.lt.s32.totalorder %s11, 2
    // Predicated region
    $region25: #{encoder_forward.3} parent=5 // pred_check
      %p197 = pneg %p196
    $region26: #{encoder_forward.3} parent=5 // pred_check_branch
      %199 = sbr.rel (%p197) target = $region28
    $region27: #{encoder_forward.3} parent=5 // pred_region
      // Predicated region
      $region29: #{encoder_forward.3} parent=27 // pred_check
        %p200 = pneg %p45
      $region30: #{encoder_forward.3} parent=27 // pred_check_branch
        %202 = sbr.rel (%p200) target = $region32
      $region31: #{encoder_forward.3} parent=27 // pred_region
        %p203 = scmp.lt.s32.totalorder %s18, 1
        %s204 = scalar_select %p203, %s18, 1
        %p205 = scmp.lt.s32.totalorder %s19, 1
        %s206 = scalar_select %p205, %s19, 1
        %s207 = smul.addr %s206, 12
        %s208 = smul.addr %s204, 24
        %s209 = sadd.s32 %s207, %s208
        %s210 = smul.addr %s209, 8
        %s211 = scalar_lea.vmem %s0, %s210
      $region32: #{encoder_forward.3} parent=27 // pred_fallthru
        _
      // Predicated region
      $region33: #{encoder_forward.3} parent=27 // pred_check
        %p212 = pneg %p75
      $region34: #{encoder_forward.3} parent=27 // pred_check_branch
        %214 = sbr.rel (%p212) target = $region36
      $region35: #{encoder_forward.3} parent=27 // pred_region
        %s215 = sadd.s32 %s19, 1
        %p216 = scmp.lt.s32.totalorder %s18, 1
        %s217 = scalar_select %p216, %s18, 1
        %p218 = scmp.lt.s32.totalorder %s215, 1
        %s219 = scalar_select %p218, %s215, 1
        %s220 = smul.addr %s219, 12
        %s221 = smul.addr %s217, 24
        %s222 = sadd.s32 %s220, %s221
        %s223 = smul.addr %s222, 8
        %s224 = scalar_lea.vmem %s1, %s223
        %s225 = sadd.s32 %s19, 1
      $region36: #{encoder_forward.3} parent=27 // pred_fallthru
        _
    $region28: #{encoder_forward.3} parent=5 // pred_fallthru
      _
    %p226 = scmp.le.s32.totalorder 1, %s11
    %p227 = scmp.lt.s32.totalorder %s11, 3
    %p228 = pnand %p226, %p227
    %p229 = pneg %p228
    // Predicated region
    $region37: #{encoder_forward.3} parent=5 // pred_check
      _
    $region38: #{encoder_forward.3} parent=5 // pred_check_branch
      %231 = sbr.rel (%p228) target = $region40
    $region39: #{encoder_forward.3} parent=5 // pred_region
      %s232 = ssub.s32 %s11, 1
      %p233 = scmp.lt.s32.totalorder %s20, 1
      %s234 = scalar_select %p233, %s20, 1
      %p235 = scmp.lt.s32.totalorder %s21, 1
      %s236 = scalar_select %p235, %s21, 1
      %s237 = smul.addr %s236, 12
      %s238 = smul.addr %s234, 24
      %s239 = sadd.s32 %s237, %s238
      %s240 = smul.addr %s239, 8
      %s241 = scalar_lea.vmem %s0, %s240
      %p242 = pneg %p51
      %p243 = pneg %p48
      %s244 = sadd.s32 %s21, 1
      %p245 = scmp.lt.s32.totalorder %s20, 1
      %s246 = scalar_select %p245, %s20, 1
      %p247 = scmp.lt.s32.totalorder %s244, 1
      %s248 = scalar_select %p247, %s244, 1
      %s249 = smul.addr %s248, 12
      %s250 = smul.addr %s246, 24
      %s251 = sadd.s32 %s249, %s250
      %s252 = smul.addr %s251, 8
      %s253 = scalar_lea.vmem %s1, %s252
      %p254 = pneg %p81
      %p255 = pneg %p78
      %p256 = pneg %p102
      %p257 = pneg %p99
      %p258 = pneg %p123
      %p259 = pneg %p120
      %p260 = pneg %p144
      %p261 = pneg %p141
      %p262 = pneg %p172
      %p263 = pneg %p169
      %p264 = scmp.lt.s32.totalorder %s20, 1
      %s265 = scalar_select %p264, %s20, 1
      %p266 = scmp.lt.s32.totalorder %s21, 0
      %s267 = scalar_select %p266, %s21, 0
      %s268 = sadd.s32 %s267, %s265
      %s269 = smul.addr %s268, 8
      %s270 = scalar_lea.vmem %s5, %s269
      %p271 = scmp.lt.s32.totalorder %s20, 1
      %s272 = scalar_select %p271, %s20, 1
      %p273 = scmp.lt.s32.totalorder %s21, 1
      %s274 = scalar_select %p273, %s21, 1
      %s275 = smul.addr %s274, 12
      %s276 = smul.addr %s272, 24
      %s277 = sadd.s32 %s275, %s276
      %s278 = smul.addr %s277, 8
      %s279 = scalar_lea.vmem %s0, %s278
      %s280 = sadd.s32 %s21, 1
      %p281 = scmp.lt.s32.totalorder %s20, 1
      %s282 = scalar_select %p281, %s20, 1
      %p283 = scmp.lt.s32.totalorder %s280, 1
      %s284 = scalar_select %p283, %s280, 1
      %s285 = smul.addr %s284, 12
      %s286 = smul.addr %s282, 24
      %s287 = sadd.s32 %s285, %s286
      %s288 = smul.addr %s287, 8
      %s289 = scalar_lea.vmem %s1, %s288
      %s290 = sadd.s32 %s21, 1
      %p291 = scmp.lt.s32.totalorder %s20, 1
      %s292 = scalar_select %p291, %s20, 1
      %p293 = scmp.lt.s32.totalorder %s21, 0
      %s294 = scalar_select %p293, %s21, 0
      %s295 = sadd.s32 %s294, %s292
      %s296 = smul.addr %s295, 8
      %s297 = scalar_lea.vmem %s5, %s296
      %v298 = vld [vmem:[%s279] sm:$0xff]
      %v299 = vld [vmem:[%s279 + $0x8] sm:$0xff]
      %v300 = vld [vmem:[%s279 + $0x10] sm:$0xff]
      %v301 = vld [vmem:[%s279 + $0x18] sm:$0xff]
      %v302 = vld [vmem:[%s279 + $0x20] sm:$0xff]
      %v303 = vld [vmem:[%s279 + $0x28] sm:$0xff]
      %v304 = vld [vmem:[%s279 + $0x30] sm:$0xff]
      %v305 = vld [vmem:[%s279 + $0x38] sm:$0xff]
      %v306 = vld [vmem:[%s279 + $0x40] sm:$0xff]
      %v307 = vld [vmem:[%s279 + $0x48] sm:$0xff]
      %v308 = vld [vmem:[%s279 + $0x50] sm:$0xff]
      %v309 = vld [vmem:[%s279 + $0x58] sm:$0xff]
      %v310 = vld [vmem:[%s289] sm:$0xff]
      %v311 = vld [vmem:[%s289 + $0x8] sm:$0xff]
      %v312 = vld [vmem:[%s289 + $0x10] sm:$0xff]
      %v313 = vld [vmem:[%s289 + $0x18] sm:$0xff]
      %v314 = vld [vmem:[%s2] sm:$0xff]
      %v315 = vld [vmem:[%s2 + $0x8] sm:$0xff]
      %v316 = vld [vmem:[%s2 + $0x10] sm:$0xff]
      %v317 = vld [vmem:[%s2 + $0x18] sm:$0xff]
      %v318 = vld [vmem:[%s2 + $0x20] sm:$0xff]
      %v319 = vld [vmem:[%s2 + $0x28] sm:$0xff]
      %v320 = vld [vmem:[%s2 + $0x30] sm:$0xff]
      %v321 = vld [vmem:[%s2 + $0x38] sm:$0xff]
      %v322 = vld [vmem:[%s2 + $0x40] sm:$0xff]
      %v323 = vld [vmem:[%s2 + $0x48] sm:$0xff]
      %v324 = vld [vmem:[%s2 + $0x50] sm:$0xff]
      %v325 = vld [vmem:[%s2 + $0x58] sm:$0xff]
      %v326 = vld [vmem:[%s2 + $0x60] sm:$0xff]
      %v327 = vld [vmem:[%s2 + $0x68] sm:$0xff]
      %v328 = vld [vmem:[%s2 + $0x70] sm:$0xff]
      %v329 = vld [vmem:[%s2 + $0x78] sm:$0xff]
      %v330 = vld [vmem:[%s2 + $0x80] sm:$0xff]
      %v331 = vld [vmem:[%s2 + $0x88] sm:$0xff]
      %v332 = vld [vmem:[%s2 + $0x90] sm:$0xff]
      %v333 = vld [vmem:[%s2 + $0x98] sm:$0xff]
      %v334 = vld [vmem:[%s2 + $0xa0] sm:$0xff]
      %v335 = vld [vmem:[%s2 + $0xa8] sm:$0xff]
      %v336 = vld [vmem:[%s2 + $0xb0] sm:$0xff]
      %v337 = vld [vmem:[%s2 + $0xb8] sm:$0xff]
      %v338 = vld [vmem:[%s2 + $0xc0] sm:$0xff]
      %v339 = vld [vmem:[%s2 + $0xc8] sm:$0xff]
      %v340 = vld [vmem:[%s2 + $0xd0] sm:$0xff]
      %v341 = vld [vmem:[%s2 + $0xd8] sm:$0xff]
      %v342 = vld [vmem:[%s2 + $0xe0] sm:$0xff]
      %v343 = vld [vmem:[%s2 + $0xe8] sm:$0xff]
      %v344 = vld [vmem:[%s2 + $0xf0] sm:$0xff]
      %v345 = vld [vmem:[%s2 + $0xf8] sm:$0xff]
      %v346 = vld [vmem:[%s2 + $0x100] sm:$0xff]
      %v347 = vld [vmem:[%s2 + $0x108] sm:$0xff]
      %v348 = vld [vmem:[%s2 + $0x110] sm:$0xff]
      %v349 = vld [vmem:[%s2 + $0x118] sm:$0xff]
      %v350 = vld [vmem:[%s2 + $0x120] sm:$0xff]
      %v351 = vld [vmem:[%s2 + $0x128] sm:$0xff]
      %v352 = vld [vmem:[%s2 + $0x130] sm:$0xff]
      %v353 = vld [vmem:[%s2 + $0x138] sm:$0xff]
      %v354 = vld [vmem:[%s2 + $0x140] sm:$0xff]
      %v355 = vld [vmem:[%s2 + $0x148] sm:$0xff]
      %v356 = vld [vmem:[%s2 + $0x150] sm:$0xff]
      %v357 = vld [vmem:[%s2 + $0x158] sm:$0xff]
      %v358 = vld [vmem:[%s2 + $0x160] sm:$0xff]
      %v359 = vld [vmem:[%s2 + $0x168] sm:$0xff]
      %v360 = vld [vmem:[%s2 + $0x170] sm:$0xff]
      %v361 = vld [vmem:[%s2 + $0x178] sm:$0xff]
      %v362 = vld [vmem:[%s2 + $0x180] sm:$0xff]
      %v363 = vld [vmem:[%s2 + $0x188] sm:$0xff]
      %v364 = vld [vmem:[%s2 + $0x190] sm:$0xff]
      %v365 = vld [vmem:[%s2 + $0x198] sm:$0xff]
      %v366 = vld [vmem:[%s2 + $0x1a0] sm:$0xff]
      %v367 = vld [vmem:[%s2 + $0x1a8] sm:$0xff]
      %v368 = vld [vmem:[%s2 + $0x1b0] sm:$0xff]
      %v369 = vld [vmem:[%s2 + $0x1b8] sm:$0xff]
      %v370 = vld [vmem:[%s2 + $0x1c0] sm:$0xff]
      %v371 = vld [vmem:[%s2 + $0x1c8] sm:$0xff]
      %v372 = vld [vmem:[%s2 + $0x1d0] sm:$0xff]
      %v373 = vld [vmem:[%s2 + $0x1d8] sm:$0xff]
      %v374 = vld [vmem:[%s2 + $0x1e0] sm:$0xff]
      %v375 = vld [vmem:[%s2 + $0x1e8] sm:$0xff]
      %v376 = vld [vmem:[%s2 + $0x1f0] sm:$0xff]
      %v377 = vld [vmem:[%s2 + $0x1f8] sm:$0xff]
      %v378 = vld [vmem:[%s2 + $0x200] sm:$0xff]
      %v379 = vld [vmem:[%s2 + $0x208] sm:$0xff]
      %v380 = vld [vmem:[%s2 + $0x210] sm:$0xff]
      %v381 = vld [vmem:[%s2 + $0x218] sm:$0xff]
      %v382 = vld [vmem:[%s2 + $0x220] sm:$0xff]
      %v383 = vld [vmem:[%s2 + $0x228] sm:$0xff]
      %v384 = vld [vmem:[%s2 + $0x230] sm:$0xff]
      %v385 = vld [vmem:[%s2 + $0x238] sm:$0xff]
      %v386 = vld [vmem:[%s2 + $0x240] sm:$0xff]
      %v387 = vld [vmem:[%s2 + $0x248] sm:$0xff]
      %v388 = vld [vmem:[%s2 + $0x250] sm:$0xff]
      %v389 = vld [vmem:[%s2 + $0x258] sm:$0xff]
      %v390 = vld [vmem:[%s2 + $0x260] sm:$0xff]
      %v391 = vld [vmem:[%s2 + $0x268] sm:$0xff]
      %v392 = vld [vmem:[%s2 + $0x270] sm:$0xff]
      %v393 = vld [vmem:[%s2 + $0x278] sm:$0xff]
      %v394 = vld [vmem:[%s2 + $0x280] sm:$0xff]
      %v395 = vld [vmem:[%s2 + $0x288] sm:$0xff]
      %v396 = vld [vmem:[%s2 + $0x290] sm:$0xff]
      %v397 = vld [vmem:[%s2 + $0x298] sm:$0xff]
      %v398 = vld [vmem:[%s2 + $0x2a0] sm:$0xff]
      %v399 = vld [vmem:[%s2 + $0x2a8] sm:$0xff]
      %v400 = vld [vmem:[%s2 + $0x2b0] sm:$0xff]
      %v401 = vld [vmem:[%s2 + $0x2b8] sm:$0xff]
      %v402 = vld [vmem:[%s2 + $0x2c0] sm:$0xff]
      %v403 = vld [vmem:[%s2 + $0x2c8] sm:$0xff]
      %v404 = vld [vmem:[%s2 + $0x2d0] sm:$0xff]
      %v405 = vld [vmem:[%s2 + $0x2d8] sm:$0xff]
      %v406 = vld [vmem:[%s2 + $0x2e0] sm:$0xff]
      %v407 = vld [vmem:[%s2 + $0x2e8] sm:$0xff]
      %v408 = vld [vmem:[%s2 + $0x2f0] sm:$0xff]
      %v409 = vld [vmem:[%s2 + $0x2f8] sm:$0xff]
      %v410 = vld [vmem:[%s2 + $0x300] sm:$0xff]
      %v411 = vld [vmem:[%s2 + $0x308] sm:$0xff]
      %v412 = vld [vmem:[%s2 + $0x310] sm:$0xff]
      %v413 = vld [vmem:[%s2 + $0x318] sm:$0xff]
      %v414 = vld [vmem:[%s2 + $0x320] sm:$0xff]
      %v415 = vld [vmem:[%s2 + $0x328] sm:$0xff]
      %v416 = vld [vmem:[%s2 + $0x330] sm:$0xff]
      %v417 = vld [vmem:[%s2 + $0x338] sm:$0xff]
      %v418 = vld [vmem:[%s2 + $0x340] sm:$0xff]
      %v419 = vld [vmem:[%s2 + $0x348] sm:$0xff]
      %v420 = vld [vmem:[%s2 + $0x350] sm:$0xff]
      %v421 = vld [vmem:[%s2 + $0x358] sm:$0xff]
      %v422 = vld [vmem:[%s2 + $0x360] sm:$0xff]
      %v423 = vld [vmem:[%s2 + $0x368] sm:$0xff]
      %v424 = vld [vmem:[%s2 + $0x370] sm:$0xff]
      %v425 = vld [vmem:[%s2 + $0x378] sm:$0xff]
      %v426 = vld [vmem:[%s2 + $0x380] sm:$0xff]
      %v427 = vld [vmem:[%s2 + $0x388] sm:$0xff]
      %v428 = vld [vmem:[%s2 + $0x390] sm:$0xff]
      %v429 = vld [vmem:[%s2 + $0x398] sm:$0xff]
      %v430 = vld [vmem:[%s2 + $0x3a0] sm:$0xff]
      %v431 = vld [vmem:[%s2 + $0x3a8] sm:$0xff]
      %v432 = vld [vmem:[%s2 + $0x3b0] sm:$0xff]
      %v433 = vld [vmem:[%s2 + $0x3b8] sm:$0xff]
      %v434 = vld [vmem:[%s2 + $0x3c0] sm:$0xff]
      %v435 = vld [vmem:[%s2 + $0x3c8] sm:$0xff]
      %v436 = vld [vmem:[%s2 + $0x3d0] sm:$0xff]
      %v437 = vld [vmem:[%s2 + $0x3d8] sm:$0xff]
      %v438 = vld [vmem:[%s2 + $0x3e0] sm:$0xff]
      %v439 = vld [vmem:[%s2 + $0x3e8] sm:$0xff]
      %v440 = vld [vmem:[%s2 + $0x3f0] sm:$0xff]
      %v441 = vld [vmem:[%s2 + $0x3f8] sm:$0xff]
      %v442 = vld [vmem:[%s2 + $0x400] sm:$0xff]
      %v443 = vld [vmem:[%s2 + $0x408] sm:$0xff]
      %v444 = vld [vmem:[%s2 + $0x410] sm:$0xff]
      %v445 = vld [vmem:[%s2 + $0x418] sm:$0xff]
      %v446 = vld [vmem:[%s2 + $0x420] sm:$0xff]
      %v447 = vld [vmem:[%s2 + $0x428] sm:$0xff]
      %v448 = vld [vmem:[%s2 + $0x430] sm:$0xff]
      %v449 = vld [vmem:[%s2 + $0x438] sm:$0xff]
      %v450 = vld [vmem:[%s2 + $0x440] sm:$0xff]
      %v451 = vld [vmem:[%s2 + $0x448] sm:$0xff]
      %v452 = vld [vmem:[%s2 + $0x450] sm:$0xff]
      %v453 = vld [vmem:[%s2 + $0x458] sm:$0xff]
      %v454 = vld [vmem:[%s2 + $0x460] sm:$0xff]
      %v455 = vld [vmem:[%s2 + $0x468] sm:$0xff]
      %v456 = vld [vmem:[%s2 + $0x470] sm:$0xff]
      %v457 = vld [vmem:[%s2 + $0x478] sm:$0xff]
      %v458 = vld [vmem:[%s2 + $0x480] sm:$0xff]
      %v459 = vld [vmem:[%s2 + $0x488] sm:$0xff]
      %v460 = vld [vmem:[%s2 + $0x490] sm:$0xff]
      %v461 = vld [vmem:[%s2 + $0x498] sm:$0xff]
      %v462 = vld [vmem:[%s2 + $0x4a0] sm:$0xff]
      %v463 = vld [vmem:[%s2 + $0x4a8] sm:$0xff]
      %v464 = vld [vmem:[%s2 + $0x4b0] sm:$0xff]
      %v465 = vld [vmem:[%s2 + $0x4b8] sm:$0xff]
      %v466 = vld [vmem:[%s2 + $0x4c0] sm:$0xff]
      %v467 = vld [vmem:[%s2 + $0x4c8] sm:$0xff]
      %v468 = vld [vmem:[%s2 + $0x4d0] sm:$0xff]
      %v469 = vld [vmem:[%s2 + $0x4d8] sm:$0xff]
      %v470 = vld [vmem:[%s2 + $0x4e0] sm:$0xff]
      %v471 = vld [vmem:[%s2 + $0x4e8] sm:$0xff]
      %v472 = vld [vmem:[%s2 + $0x4f0] sm:$0xff]
      %v473 = vld [vmem:[%s2 + $0x4f8] sm:$0xff]
      %v474 = vld [vmem:[%s2 + $0x500] sm:$0xff]
      %v475 = vld [vmem:[%s2 + $0x508] sm:$0xff]
      %v476 = vld [vmem:[%s2 + $0x510] sm:$0xff]
      %v477 = vld [vmem:[%s2 + $0x518] sm:$0xff]
      %v478 = vld [vmem:[%s2 + $0x520] sm:$0xff]
      %v479 = vld [vmem:[%s2 + $0x528] sm:$0xff]
      %v480 = vld [vmem:[%s2 + $0x530] sm:$0xff]
      %v481 = vld [vmem:[%s2 + $0x538] sm:$0xff]
      %v482 = vld [vmem:[%s2 + $0x540] sm:$0xff]
      %v483 = vld [vmem:[%s2 + $0x548] sm:$0xff]
      %v484 = vld [vmem:[%s2 + $0x550] sm:$0xff]
      %v485 = vld [vmem:[%s2 + $0x558] sm:$0xff]
      %v486 = vld [vmem:[%s2 + $0x560] sm:$0xff]
      %v487 = vld [vmem:[%s2 + $0x568] sm:$0xff]
      %v488 = vld [vmem:[%s2 + $0x570] sm:$0xff]
      %v489 = vld [vmem:[%s2 + $0x578] sm:$0xff]
      %v490 = vld [vmem:[%s2 + $0x580] sm:$0xff]
      %v491 = vld [vmem:[%s2 + $0x588] sm:$0xff]
      %v492 = vld [vmem:[%s2 + $0x590] sm:$0xff]
      %v493 = vld [vmem:[%s2 + $0x598] sm:$0xff]
      %v494 = vld [vmem:[%s2 + $0x5a0] sm:$0xff]
      %v495 = vld [vmem:[%s2 + $0x5a8] sm:$0xff]
      %v496 = vld [vmem:[%s2 + $0x5b0] sm:$0xff]
      %v497 = vld [vmem:[%s2 + $0x5b8] sm:$0xff]
      %v498 = vld [vmem:[%s2 + $0x5c0] sm:$0xff]
      %v499 = vld [vmem:[%s2 + $0x5c8] sm:$0xff]
      %v500 = vld [vmem:[%s2 + $0x5d0] sm:$0xff]
      %v501 = vld [vmem:[%s2 + $0x5d8] sm:$0xff]
      %v502 = vld [vmem:[%s2 + $0x5e0] sm:$0xff]
      %v503 = vld [vmem:[%s2 + $0x5e8] sm:$0xff]
      %v504 = vld [vmem:[%s2 + $0x5f0] sm:$0xff]
      %v505 = vld [vmem:[%s2 + $0x5f8] sm:$0xff]
      %v506 = vld [vmem:[%s3] sm:$0xff]
      %v507 = vld [vmem:[%s3 + $0x8] sm:$0xff]
      %v508 = vld [vmem:[%s3 + $0x10] sm:$0xff]
      %v509 = vld [vmem:[%s3 + $0x18] sm:$0xff]
      %v510 = vld [vmem:[%s3 + $0x20] sm:$0xff]
      %v511 = vld [vmem:[%s3 + $0x28] sm:$0xff]
      %v512 = vld [vmem:[%s3 + $0x30] sm:$0xff]
      %v513 = vld [vmem:[%s3 + $0x38] sm:$0xff]
      %v514 = vld [vmem:[%s3 + $0x40] sm:$0xff]
      %v515 = vld [vmem:[%s3 + $0x48] sm:$0xff]
      %v516 = vld [vmem:[%s3 + $0x50] sm:$0xff]
      %v517 = vld [vmem:[%s3 + $0x58] sm:$0xff]
      %v518 = vld [vmem:[%s3 + $0x60] sm:$0xff]
      %v519 = vld [vmem:[%s3 + $0x68] sm:$0xff]
      %v520 = vld [vmem:[%s3 + $0x70] sm:$0xff]
      %v521 = vld [vmem:[%s3 + $0x78] sm:$0xff]
      %v522 = vld [vmem:[%s3 + $0x80] sm:$0xff]
      %v523 = vld [vmem:[%s3 + $0x88] sm:$0xff]
      %v524 = vld [vmem:[%s3 + $0x90] sm:$0xff]
      %v525 = vld [vmem:[%s3 + $0x98] sm:$0xff]
      %v526 = vld [vmem:[%s3 + $0xa0] sm:$0xff]
      %v527 = vld [vmem:[%s3 + $0xa8] sm:$0xff]
      %v528 = vld [vmem:[%s3 + $0xb0] sm:$0xff]
      %v529 = vld [vmem:[%s3 + $0xb8] sm:$0xff]
      %v530 = vld [vmem:[%s3 + $0xc0] sm:$0xff]
      %v531 = vld [vmem:[%s3 + $0xc8] sm:$0xff]
      %v532 = vld [vmem:[%s3 + $0xd0] sm:$0xff]
      %v533 = vld [vmem:[%s3 + $0xd8] sm:$0xff]
      %v534 = vld [vmem:[%s3 + $0xe0] sm:$0xff]
      %v535 = vld [vmem:[%s3 + $0xe8] sm:$0xff]
      %v536 = vld [vmem:[%s3 + $0xf0] sm:$0xff]
      %v537 = vld [vmem:[%s3 + $0xf8] sm:$0xff]
      %v538 = vld [vmem:[%s3 + $0x100] sm:$0xff]
      %v539 = vld [vmem:[%s3 + $0x108] sm:$0xff]
      %v540 = vld [vmem:[%s3 + $0x110] sm:$0xff]
      %v541 = vld [vmem:[%s3 + $0x118] sm:$0xff]
      %v542 = vld [vmem:[%s3 + $0x120] sm:$0xff]
      %v543 = vld [vmem:[%s3 + $0x128] sm:$0xff]
      %v544 = vld [vmem:[%s3 + $0x130] sm:$0xff]
      %v545 = vld [vmem:[%s3 + $0x138] sm:$0xff]
      %v546 = vld [vmem:[%s3 + $0x140] sm:$0xff]
      %v547 = vld [vmem:[%s3 + $0x148] sm:$0xff]
      %v548 = vld [vmem:[%s3 + $0x150] sm:$0xff]
      %v549 = vld [vmem:[%s3 + $0x158] sm:$0xff]
      %v550 = vld [vmem:[%s3 + $0x160] sm:$0xff]
      %v551 = vld [vmem:[%s3 + $0x168] sm:$0xff]
      %v552 = vld [vmem:[%s3 + $0x170] sm:$0xff]
      %v553 = vld [vmem:[%s3 + $0x178] sm:$0xff]
      %v554 = vld [vmem:[%s3 + $0x180] sm:$0xff]
      %v555 = vld [vmem:[%s3 + $0x188] sm:$0xff]
      %v556 = vld [vmem:[%s3 + $0x190] sm:$0xff]
      %v557 = vld [vmem:[%s3 + $0x198] sm:$0xff]
      %v558 = vld [vmem:[%s3 + $0x1a0] sm:$0xff]
      %v559 = vld [vmem:[%s3 + $0x1a8] sm:$0xff]
      %v560 = vld [vmem:[%s3 + $0x1b0] sm:$0xff]
      %v561 = vld [vmem:[%s3 + $0x1b8] sm:$0xff]
      %v562 = vld [vmem:[%s3 + $0x1c0] sm:$0xff]
      %v563 = vld [vmem:[%s3 + $0x1c8] sm:$0xff]
      %v564 = vld [vmem:[%s3 + $0x1d0] sm:$0xff]
      %v565 = vld [vmem:[%s3 + $0x1d8] sm:$0xff]
      %v566 = vld [vmem:[%s3 + $0x1e0] sm:$0xff]
      %v567 = vld [vmem:[%s3 + $0x1e8] sm:$0xff]
      %v568 = vld [vmem:[%s3 + $0x1f0] sm:$0xff]
      %v569 = vld [vmem:[%s3 + $0x1f8] sm:$0xff]
      %vm578 = vcmask 1046528
      %v579 = vrot.slane %v298, 1
      %v580 = vrot.slane %v310, 1
      %v581 = vsel %vm578, %v579, %v580
      %v582 = vrot.slane %v299, 1
      %v583 = vrot.slane %v311, 1
      %v584 = vsel %vm578, %v582, %v583
      %v585 = vrot.slane %v300, 1
      %v586 = vrot.slane %v312, 1
      %v587 = vsel %vm578, %v585, %v586
      %v588 = vrot.slane %v301, 1
      %v589 = vrot.slane %v313, 1
      %v590 = vsel %vm578, %v588, %v589
      %595 = vmatpush.msra.mxu0 %v521
      %596 = vmatpush.msra.mxu0 %v520
      %597 = vmatpush.msra.mxu0 %v519
      %598 = vmatpush.msra.mxu0 %v518
      %599 = vmatpush.msra.mxu0 %v517
      %600 = vmatpush.msra.mxu0 %v516
      %601 = vmatpush.msra.mxu0 %v515
      %602 = vmatpush.msra.mxu0 %v514
      %603 = vmatpush.msra.mxu0 %v513
      %604 = vmatpush.msra.mxu0 %v512
      %605 = vmatpush.msra.mxu0 %v511
      %606 = vmatpush.msra.mxu0 %v510
      %607 = vmatpush.msra.mxu0 %v509
      %608 = vmatpush.msra.mxu0 %v508
      %609 = vmatpush.msra.mxu0 %v507
      %610 = vmatpush.msra.mxu0 %v506
      %611 = vmatmul.f32.gmra.mxu0 %v581
      %v612 = vpop.f32.mrf.mxu0
      %v613 = vadd.f32 0.0, %v612
      %614 = vdwg.mxu0
      %615 = vmatpush.msra.mxu0 %v537
      %616 = vmatpush.msra.mxu0 %v536
      %617 = vmatpush.msra.mxu0 %v535
      %618 = vmatpush.msra.mxu0 %v534
      %619 = vmatpush.msra.mxu0 %v533
      %620 = vmatpush.msra.mxu0 %v532
      %621 = vmatpush.msra.mxu0 %v531
      %622 = vmatpush.msra.mxu0 %v530
      %623 = vmatpush.msra.mxu0 %v529
      %624 = vmatpush.msra.mxu0 %v528
      %625 = vmatpush.msra.mxu0 %v527
      %626 = vmatpush.msra.mxu0 %v526
      %627 = vmatpush.msra.mxu0 %v525
      %628 = vmatpush.msra.mxu0 %v524
      %629 = vmatpush.msra.mxu0 %v523
      %630 = vmatpush.msra.mxu0 %v522
      %631 = vmatmul.f32.gmra.mxu0 %v584
      %v632 = vpop.f32.mrf.mxu0
      %v633 = vadd.f32 %v613, %v632
      %634 = vdwg.mxu0
      %635 = vmatpush.msra.mxu0 %v553
      %636 = vmatpush.msra.mxu0 %v552
      %637 = vmatpush.msra.mxu0 %v551
      %638 = vmatpush.msra.mxu0 %v550
      %639 = vmatpush.msra.mxu0 %v549
      %640 = vmatpush.msra.mxu0 %v548
      %641 = vmatpush.msra.mxu0 %v547
      %642 = vmatpush.msra.mxu0 %v546
      %643 = vmatpush.msra.mxu0 %v545
      %644 = vmatpush.msra.mxu0 %v544
      %645 = vmatpush.msra.mxu0 %v543
      %646 = vmatpush.msra.mxu0 %v542
      %647 = vmatpush.msra.mxu0 %v541
      %648 = vmatpush.msra.mxu0 %v540
      %649 = vmatpush.msra.mxu0 %v539
      %650 = vmatpush.msra.mxu0 %v538
      %651 = vmatmul.f32.gmra.mxu0 %v587
      %v652 = vpop.f32.mrf.mxu0
      %v653 = vadd.f32 %v633, %v652
      %654 = vdwg.mxu0
      %655 = vmatpush.msra.mxu0 %v569
      %656 = vmatpush.msra.mxu0 %v568
      %657 = vmatpush.msra.mxu0 %v567
      %658 = vmatpush.msra.mxu0 %v566
      %659 = vmatpush.msra.mxu0 %v565
      %660 = vmatpush.msra.mxu0 %v564
      %661 = vmatpush.msra.mxu0 %v563
      %662 = vmatpush.msra.mxu0 %v562
      %663 = vmatpush.msra.mxu0 %v561
      %664 = vmatpush.msra.mxu0 %v560
      %665 = vmatpush.msra.mxu0 %v559
      %666 = vmatpush.msra.mxu0 %v558
      %667 = vmatpush.msra.mxu0 %v557
      %668 = vmatpush.msra.mxu0 %v556
      %669 = vmatpush.msra.mxu0 %v555
      %670 = vmatpush.msra.mxu0 %v554
      %671 = vmatmul.f32.gmra.mxu0 %v590
      %v672 = vpop.f32.mrf.mxu0
      %v673 = vadd.f32 %v653, %v672
      %674 = vdwg.mxu0
      %675 = vmatpush.msra.mxu0 %v329
      %676 = vmatpush.msra.mxu0 %v328
      %677 = vmatpush.msra.mxu0 %v327
      %678 = vmatpush.msra.mxu0 %v326
      %679 = vmatpush.msra.mxu0 %v325
      %680 = vmatpush.msra.mxu0 %v324
      %681 = vmatpush.msra.mxu0 %v323
      %682 = vmatpush.msra.mxu0 %v322
      %683 = vmatpush.msra.mxu0 %v321
      %684 = vmatpush.msra.mxu0 %v320
      %685 = vmatpush.msra.mxu0 %v319
      %686 = vmatpush.msra.mxu0 %v318
      %687 = vmatpush.msra.mxu0 %v317
      %688 = vmatpush.msra.mxu0 %v316
      %689 = vmatpush.msra.mxu0 %v315
      %690 = vmatpush.msra.mxu0 %v314
      %691 = vmatmul.f32.gmra.mxu0 %v298
      %v692 = vpop.f32.mrf.mxu0
      %v693 = vadd.f32 %v673, %v692
      %694 = vdwg.mxu0
      %695 = vmatpush.msra.mxu0 %v345
      %696 = vmatpush.msra.mxu0 %v344
      %697 = vmatpush.msra.mxu0 %v343
      %698 = vmatpush.msra.mxu0 %v342
      %699 = vmatpush.msra.mxu0 %v341
      %700 = vmatpush.msra.mxu0 %v340
      %701 = vmatpush.msra.mxu0 %v339
      %702 = vmatpush.msra.mxu0 %v338
      %703 = vmatpush.msra.mxu0 %v337
      %704 = vmatpush.msra.mxu0 %v336
      %705 = vmatpush.msra.mxu0 %v335
      %706 = vmatpush.msra.mxu0 %v334
      %707 = vmatpush.msra.mxu0 %v333
      %708 = vmatpush.msra.mxu0 %v332
      %709 = vmatpush.msra.mxu0 %v331
      %710 = vmatpush.msra.mxu0 %v330
      %711 = vmatmul.f32.gmra.mxu0 %v299
      %v712 = vpop.f32.mrf.mxu0
      %v713 = vadd.f32 %v693, %v712
      %714 = vdwg.mxu0
      %715 = vmatpush.msra.mxu0 %v361
      %716 = vmatpush.msra.mxu0 %v360
      %717 = vmatpush.msra.mxu0 %v359
      %718 = vmatpush.msra.mxu0 %v358
      %719 = vmatpush.msra.mxu0 %v357
      %720 = vmatpush.msra.mxu0 %v356
      %721 = vmatpush.msra.mxu0 %v355
      %722 = vmatpush.msra.mxu0 %v354
      %723 = vmatpush.msra.mxu0 %v353
      %724 = vmatpush.msra.mxu0 %v352
      %725 = vmatpush.msra.mxu0 %v351
      %726 = vmatpush.msra.mxu0 %v350
      %727 = vmatpush.msra.mxu0 %v349
      %728 = vmatpush.msra.mxu0 %v348
      %729 = vmatpush.msra.mxu0 %v347
      %730 = vmatpush.msra.mxu0 %v346
      %731 = vmatmul.f32.gmra.mxu0 %v300
      %v732 = vpop.f32.mrf.mxu0
      %v733 = vadd.f32 %v713, %v732
      %734 = vdwg.mxu0
      %735 = vmatpush.msra.mxu0 %v377
      %736 = vmatpush.msra.mxu0 %v376
      %737 = vmatpush.msra.mxu0 %v375
      %738 = vmatpush.msra.mxu0 %v374
      %739 = vmatpush.msra.mxu0 %v373
      %740 = vmatpush.msra.mxu0 %v372
      %741 = vmatpush.msra.mxu0 %v371
      %742 = vmatpush.msra.mxu0 %v370
      %743 = vmatpush.msra.mxu0 %v369
      %744 = vmatpush.msra.mxu0 %v368
      %745 = vmatpush.msra.mxu0 %v367
      %746 = vmatpush.msra.mxu0 %v366
      %747 = vmatpush.msra.mxu0 %v365
      %748 = vmatpush.msra.mxu0 %v364
      %749 = vmatpush.msra.mxu0 %v363
      %750 = vmatpush.msra.mxu0 %v362
      %751 = vmatmul.f32.gmra.mxu0 %v301
      %v752 = vpop.f32.mrf.mxu0
      %v753 = vadd.f32 %v733, %v752
      %754 = vdwg.mxu0
      %755 = vmatpush.msra.mxu0 %v393
      %756 = vmatpush.msra.mxu0 %v392
      %757 = vmatpush.msra.mxu0 %v391
      %758 = vmatpush.msra.mxu0 %v390
      %759 = vmatpush.msra.mxu0 %v389
      %760 = vmatpush.msra.mxu0 %v388
      %761 = vmatpush.msra.mxu0 %v387
      %762 = vmatpush.msra.mxu0 %v386
      %763 = vmatpush.msra.mxu0 %v385
      %764 = vmatpush.msra.mxu0 %v384
      %765 = vmatpush.msra.mxu0 %v383
      %766 = vmatpush.msra.mxu0 %v382
      %767 = vmatpush.msra.mxu0 %v381
      %768 = vmatpush.msra.mxu0 %v380
      %769 = vmatpush.msra.mxu0 %v379
      %770 = vmatpush.msra.mxu0 %v378
      %771 = vmatmul.f32.gmra.mxu0 %v302
      %v772 = vpop.f32.mrf.mxu0
      %v773 = vadd.f32 %v753, %v772
      %774 = vdwg.mxu0
      %775 = vmatpush.msra.mxu0 %v409
      %776 = vmatpush.msra.mxu0 %v408
      %777 = vmatpush.msra.mxu0 %v407
      %778 = vmatpush.msra.mxu0 %v406
      %779 = vmatpush.msra.mxu0 %v405
      %780 = vmatpush.msra.mxu0 %v404
      %781 = vmatpush.msra.mxu0 %v403
      %782 = vmatpush.msra.mxu0 %v402
      %783 = vmatpush.msra.mxu0 %v401
      %784 = vmatpush.msra.mxu0 %v400
      %785 = vmatpush.msra.mxu0 %v399
      %786 = vmatpush.msra.mxu0 %v398
      %787 = vmatpush.msra.mxu0 %v397
      %788 = vmatpush.msra.mxu0 %v396
      %789 = vmatpush.msra.mxu0 %v395
      %790 = vmatpush.msra.mxu0 %v394
      %791 = vmatmul.f32.gmra.mxu0 %v303
      %v792 = vpop.f32.mrf.mxu0
      %v793 = vadd.f32 %v773, %v792
      %794 = vdwg.mxu0
      %795 = vmatpush.msra.mxu0 %v425
      %796 = vmatpush.msra.mxu0 %v424
      %797 = vmatpush.msra.mxu0 %v423
      %798 = vmatpush.msra.mxu0 %v422
      %799 = vmatpush.msra.mxu0 %v421
      %800 = vmatpush.msra.mxu0 %v420
      %801 = vmatpush.msra.mxu0 %v419
      %802 = vmatpush.msra.mxu0 %v418
      %803 = vmatpush.msra.mxu0 %v417
      %804 = vmatpush.msra.mxu0 %v416
      %805 = vmatpush.msra.mxu0 %v415
      %806 = vmatpush.msra.mxu0 %v414
      %807 = vmatpush.msra.mxu0 %v413
      %808 = vmatpush.msra.mxu0 %v412
      %809 = vmatpush.msra.mxu0 %v411
      %810 = vmatpush.msra.mxu0 %v410
      %811 = vmatmul.f32.gmra.mxu0 %v304
      %v812 = vpop.f32.mrf.mxu0
      %v813 = vadd.f32 %v793, %v812
      %814 = vdwg.mxu0
      %815 = vmatpush.msra.mxu0 %v441
      %816 = vmatpush.msra.mxu0 %v440
      %817 = vmatpush.msra.mxu0 %v439
      %818 = vmatpush.msra.mxu0 %v438
      %819 = vmatpush.msra.mxu0 %v437
      %820 = vmatpush.msra.mxu0 %v436
      %821 = vmatpush.msra.mxu0 %v435
      %822 = vmatpush.msra.mxu0 %v434
      %823 = vmatpush.msra.mxu0 %v433
      %824 = vmatpush.msra.mxu0 %v432
      %825 = vmatpush.msra.mxu0 %v431
      %826 = vmatpush.msra.mxu0 %v430
      %827 = vmatpush.msra.mxu0 %v429
      %828 = vmatpush.msra.mxu0 %v428
      %829 = vmatpush.msra.mxu0 %v427
      %830 = vmatpush.msra.mxu0 %v426
      %831 = vmatmul.f32.gmra.mxu0 %v305
      %v832 = vpop.f32.mrf.mxu0
      %v833 = vadd.f32 %v813, %v832
      %834 = vdwg.mxu0
      %835 = vmatpush.msra.mxu0 %v457
      %836 = vmatpush.msra.mxu0 %v456
      %837 = vmatpush.msra.mxu0 %v455
      %838 = vmatpush.msra.mxu0 %v454
      %839 = vmatpush.msra.mxu0 %v453
      %840 = vmatpush.msra.mxu0 %v452
      %841 = vmatpush.msra.mxu0 %v451
      %842 = vmatpush.msra.mxu0 %v450
      %843 = vmatpush.msra.mxu0 %v449
      %844 = vmatpush.msra.mxu0 %v448
      %845 = vmatpush.msra.mxu0 %v447
      %846 = vmatpush.msra.mxu0 %v446
      %847 = vmatpush.msra.mxu0 %v445
      %848 = vmatpush.msra.mxu0 %v444
      %849 = vmatpush.msra.mxu0 %v443
      %850 = vmatpush.msra.mxu0 %v442
      %851 = vmatmul.f32.gmra.mxu0 %v306
      %v852 = vpop.f32.mrf.mxu0
      %v853 = vadd.f32 %v833, %v852
      %854 = vdwg.mxu0
      %855 = vmatpush.msra.mxu0 %v473
      %856 = vmatpush.msra.mxu0 %v472
      %857 = vmatpush.msra.mxu0 %v471
      %858 = vmatpush.msra.mxu0 %v470
      %859 = vmatpush.msra.mxu0 %v469
      %860 = vmatpush.msra.mxu0 %v468
      %861 = vmatpush.msra.mxu0 %v467
      %862 = vmatpush.msra.mxu0 %v466
      %863 = vmatpush.msra.mxu0 %v465
      %864 = vmatpush.msra.mxu0 %v464
      %865 = vmatpush.msra.mxu0 %v463
      %866 = vmatpush.msra.mxu0 %v462
      %867 = vmatpush.msra.mxu0 %v461
      %868 = vmatpush.msra.mxu0 %v460
      %869 = vmatpush.msra.mxu0 %v459
      %870 = vmatpush.msra.mxu0 %v458
      %871 = vmatmul.f32.gmra.mxu0 %v307
      %v872 = vpop.f32.mrf.mxu0
      %v873 = vadd.f32 %v853, %v872
      %874 = vdwg.mxu0
      %875 = vmatpush.msra.mxu0 %v489
      %876 = vmatpush.msra.mxu0 %v488
      %877 = vmatpush.msra.mxu0 %v487
      %878 = vmatpush.msra.mxu0 %v486
      %879 = vmatpush.msra.mxu0 %v485
      %880 = vmatpush.msra.mxu0 %v484
      %881 = vmatpush.msra.mxu0 %v483
      %882 = vmatpush.msra.mxu0 %v482
      %883 = vmatpush.msra.mxu0 %v481
      %884 = vmatpush.msra.mxu0 %v480
      %885 = vmatpush.msra.mxu0 %v479
      %886 = vmatpush.msra.mxu0 %v478
      %887 = vmatpush.msra.mxu0 %v477
      %888 = vmatpush.msra.mxu0 %v476
      %889 = vmatpush.msra.mxu0 %v475
      %890 = vmatpush.msra.mxu0 %v474
      %891 = vmatmul.f32.gmra.mxu0 %v308
      %v892 = vpop.f32.mrf.mxu0
      %v893 = vadd.f32 %v873, %v892
      %894 = vdwg.mxu0
      %895 = vmatpush.msra.mxu0 %v505
      %896 = vmatpush.msra.mxu0 %v504
      %897 = vmatpush.msra.mxu0 %v503
      %898 = vmatpush.msra.mxu0 %v502
      %899 = vmatpush.msra.mxu0 %v501
      %900 = vmatpush.msra.mxu0 %v500
      %901 = vmatpush.msra.mxu0 %v499
      %902 = vmatpush.msra.mxu0 %v498
      %903 = vmatpush.msra.mxu0 %v497
      %904 = vmatpush.msra.mxu0 %v496
      %905 = vmatpush.msra.mxu0 %v495
      %906 = vmatpush.msra.mxu0 %v494
      %907 = vmatpush.msra.mxu0 %v493
      %908 = vmatpush.msra.mxu0 %v492
      %909 = vmatpush.msra.mxu0 %v491
      %910 = vmatpush.msra.mxu0 %v490
      %911 = vmatmul.f32.gmra.mxu0 %v309
      %v912 = vpop.f32.mrf.mxu0
      %v913 = vadd.f32 %v893, %v912
      %914 = vdwg.mxu0
      %v915 = vld [vmem:[%s4] sm:$0x1]
      %v917 = vperm.slane %v915, 0
      %v919 = vadd.f32 %v913, %v917
      %920 = vst [vmem:[%s297] sm:$0xff] %v919
      %p921 = scmp.lt.s32.totalorder %s20, 1
      %s922 = scalar_select %p921, %s20, 1
      %p923 = scmp.lt.s32.totalorder %s21, 0
      %s924 = scalar_select %p923, %s21, 0
      %s925 = sadd.s32 %s924, %s922
      %s926 = smul.addr %s925, 8
      %s927 = scalar_lea.vmem %s5, %s926
      // Predicated region
      $region41: #{encoder_forward.3} parent=39 // pred_check
        %p928 = pneg %p169
      $region42: #{encoder_forward.3} parent=39 // pred_check_branch
        %930 = sbr.rel (%p928) target = $region44
      $region43: #{encoder_forward.3} parent=39 // pred_region
        _
      $region44: #{encoder_forward.3} parent=39 // pred_fallthru
        _
    $region40: #{encoder_forward.3} parent=5 // pred_fallthru
      _
    %p931 = scmp.le.s32.totalorder 2, %s11
    // Predicated region
    $region45: #{encoder_forward.3} parent=5 // pred_check
      %p932 = pneg %p931
    $region46: #{encoder_forward.3} parent=5 // pred_check_branch
      %934 = sbr.rel (%p932) target = $region48
    $region47: #{encoder_forward.3} parent=5 // pred_region
      %s935 = ssub.s32 %s11, 2
      // Predicated region
      $region49: #{encoder_forward.3} parent=47 // pred_check
        %p936 = pneg %p175
      $region50: #{encoder_forward.3} parent=47 // pred_check_branch
        %938 = sbr.rel (%p936) target = $region52
      $region51: #{encoder_forward.3} parent=47 // pred_region
        %p939 = scmp.lt.s32.totalorder %s22, 1
        %s940 = scalar_select %p939, %s22, 1
        %p941 = scmp.lt.s32.totalorder %s23, 0
        %s942 = scalar_select %p941, %s23, 0
        %s943 = sadd.s32 %s942, %s940
        %s944 = smul.addr %s943, 8
        %s945 = scalar_lea.vmem %s5, %s944
      $region52: #{encoder_forward.3} parent=47 // pred_fallthru
        _
    $region48: #{encoder_forward.3} parent=5 // pred_fallthru
      _
  $region6: #{encoder_forward.3} parent=0 // loop_footer
    %s15 = sadd.s32 1, %s11
  $region7: #{encoder_forward.3} parent=0 // loop_footer_branch
    %10 = sbr.rel target = $region3
  $region8: #{encoder_forward.3} parent=0 // loop_exit
    _

</llo_original>
